<compile_context>
chip_gen: v7x
topology: tpu7x:2x2x1
jax: 0.10.0
libtpu: 0.0.40
codegen_flags: <defaults>
</compile_context>

<pallas_src>
import functools

import jax
import jax.numpy as jnp
from jax.experimental import pallas as pl
from jax.experimental.pallas import tpu as pltpu


def _round_up(x, m):
    return (x + m - 1) // m * m


# ----------------------------------------------------------------------------
# Fused kernel: embedding (one-hot matmul) + L stacked LSTM layers.
# Single invocation; everything resident in VMEM.
# ----------------------------------------------------------------------------
def _fused_encoder_kernel(ids_ref, emb_ref, *rest, T, B, B_pad, H, V_pad, L):
    """rest = [w_ih_0, w_hh_0, b_0, ..., w_ih_{L-1}, w_hh_{L-1}, b_{L-1},
               y_ref, hn_ref, cn_ref, gx_sc, y_sc]"""
    w_refs = rest[:3 * L]
    y_ref, hn_ref, cn_ref = rest[3 * L:3 * L + 3]
    gx_sc, y_sc = rest[3 * L + 3:]

    f32 = jnp.float32
    N = T * B_pad

    # ---- embedding: one-hot matmul against the VMEM-resident table (MXU) ----
    ids = ids_ref[...]                                           # (N, 1) int32
    iota = jax.lax.broadcasted_iota(jnp.int32, (N, V_pad), 1)
    onehot = (ids == iota).astype(f32)                           # (N, V_pad)
    layer_in = jnp.dot(onehot, emb_ref[...],
                       preferred_element_type=f32)               # (N, E)
    # nn.Dropout / inter-layer LSTM dropout: identity in eval mode.
    # TODO(synk): training-mode stochastic dropout (pltpu.prng_random_bits).

    for l in range(L):  # static layer loop, activations stay in VMEM
        w_ih = w_refs[3 * l][...]        # (D_l, 4H)
        w_hh = w_refs[3 * l + 1][...]    # (H, 4H)
        b = w_refs[3 * l + 2][...]       # (1, 4H)  (b_ih + b_hh)

        # Input projection hoisted out of the recurrence: one big MXU matmul,
        # bias broadcast folded in once per layer (not once per timestep).
        gx = jnp.dot(layer_in, w_ih, preferred_element_type=f32) + b  # (N, 4H)
        gx_sc[...] = gx.reshape(T, B_pad, 4 * H)

        def step(t, carry):
            h, c = carry
            # Only the recurrent matmul remains on the serial critical path.
            gates = gx_sc[t] + jnp.dot(h, w_hh, preferred_element_type=f32)
            # NOTE: at production H (>=128) these slices are lane-aligned;
            # at H=32 they are sub-vreg slices but tiny.
            i_g = jax.nn.sigmoid(gates[:, 0 * H:1 * H])
            f_g = jax.nn.sigmoid(gates[:, 1 * H:2 * H])
            g_g = jnp.tanh(gates[:, 2 * H:3 * H])
            o_g = jax.nn.sigmoid(gates[:, 3 * H:4 * H])
            c_new = f_g * c + i_g * g_g
            h_new = o_g * jnp.tanh(c_new)
            y_sc[t] = h_new
            return (h_new, c_new)

        zeros = jnp.zeros((B_pad, H), f32)
        h_fin, c_fin = jax.lax.fori_loop(0, T, step, (zeros, zeros),
                                         unroll=True)

        hn_ref[l] = h_fin[:B, :]
        cn_ref[l] = c_fin[:B, :]
        layer_in = y_sc[...].reshape(N, H)   # next layer's input (still VMEM)

    y_ref[...] = y_sc[...][:, :B, :]


# ----------------------------------------------------------------------------
# EncoderLSTM forward (thin wrapper: pad batch / vocab, call fused kernel)
# ----------------------------------------------------------------------------
def encoder_lstm_forward(params, x_tokens, input_lengths=None):
    """x_tokens: (T, B) int32 token ids. input_lengths unused (as in PyTorch)."""
    del input_lengths
    T, B = x_tokens.shape
    emb = params["embedding"]
    V, E = emb.shape
    H = params["lstm"][0][1].shape[0]
    L = len(params["lstm"])

    B_pad = _round_up(B, 8)          # f32 sublane-dense batch
    V_pad = _round_up(V, 8)

    ids = jnp.zeros((T, B_pad), jnp.int32)
    ids = ids.at[:, :B].set(x_tokens.astype(jnp.int32))
    ids = ids.reshape(T * B_pad, 1)

    emb_p = jnp.zeros((V_pad, E), emb.dtype).at[:V].set(emb)

    flat_w = []
    for (w_ih, w_hh, b) in params["lstm"]:
        flat_w += [w_ih, w_hh, b]

    kern = functools.partial(_fused_encoder_kernel, T=T, B=B, B_pad=B_pad,
                             H=H, V_pad=V_pad, L=L)
    out_shapes = (
        jax.ShapeDtypeStruct((T, B, H), jnp.float32),
        jax.ShapeDtypeStruct((L, B, H), jnp.float32),
        jax.ShapeDtypeStruct((L, B, H), jnp.float32),
    )
    return pl.pallas_call(
        kern,
        out_shape=out_shapes,
        scratch_shapes=[
            pltpu.VMEM((T, B_pad, 4 * H), jnp.float32),  # hoisted input gates
            pltpu.VMEM((T, B_pad, H), jnp.float32),      # per-layer output slab
        ],
        compiler_params=pltpu.CompilerParams(
            vmem_limit_bytes=32 * 1024 * 1024),
    )(ids, emb_p, *flat_w)


# ----------------------------------------------------------------------------
# Deterministic parameter init (shapes follow the PyTorch module __init__)
# ----------------------------------------------------------------------------
def init_params(key, input_vocab, emb_dim, hidden_dim, n_layers):
    keys = jax.random.split(key, 1 + 4 * n_layers)
    params = {}
    params["embedding"] = jax.random.normal(
        keys[0], (input_vocab, emb_dim), jnp.float32)  # N(0,1) like nn.Embedding

    k = 1.0 / jnp.sqrt(hidden_dim)
    lstm = []
    for l in range(n_layers):
        d_in = emb_dim if l == 0 else hidden_dim
        kw = keys[1 + 4 * l: 1 + 4 * (l + 1)]
        w_ih = jax.random.uniform(kw[0], (d_in, 4 * hidden_dim),
                                  jnp.float32, -k, k)
        w_hh = jax.random.uniform(kw[1], (hidden_dim, 4 * hidden_dim),
                                  jnp.float32, -k, k)
        b_ih = jax.random.uniform(kw[2], (4 * hidden_dim,), jnp.float32, -k, k)
        b_hh = jax.random.uniform(kw[3], (4 * hidden_dim,), jnp.float32, -k, k)
        b = (b_ih + b_hh).reshape(1, 4 * hidden_dim)
        lstm.append((w_ih, w_hh, b))
    params["lstm"] = lstm
    return params


# ----------------------------------------------------------------------------
# Pure-JAX reference (for correctness check)
# ----------------------------------------------------------------------------
def encoder_lstm_ref(params, x_tokens):
    T, B = x_tokens.shape
    x = jnp.take(params["embedding"], x_tokens.reshape(-1), axis=0)
    x = x.reshape(T, B, -1)
    outs = x
    h_list, c_list = [], []
    for (w_ih, w_hh, b) in params["lstm"]:
        H = w_hh.shape[0]

        def step(carry, xt, w_ih=w_ih, w_hh=w_hh, b=b, H=H):
            h, c = carry
            gates = xt @ w_ih + h @ w_hh + b
            i_g = jax.nn.sigmoid(gates[:, 0:H])
            f_g = jax.nn.sigmoid(gates[:, H:2 * H])
            g_g = jnp.tanh(gates[:, 2 * H:3 * H])
            o_g = jax.nn.sigmoid(gates[:, 3 * H:4 * H])
            c = f_g * c + i_g * g_g
            h = o_g * jnp.tanh(c)
            return (h, c), h

        init = (jnp.zeros((B, H), jnp.float32), jnp.zeros((B, H), jnp.float32))
        (h_n, c_n), ys = jax.lax.scan(step, init, outs)
        outs = ys
        h_list.append(h_n)
        c_list.append(c_n)
    return outs, jnp.stack(h_list), jnp.stack(c_list)


if __name__ == "__main__":
    INPUT_VOCAB = 50
    EMB_DIM = 32
    HIDDEN_DIM = 32
    N_LAYERS = 4
    T, B = 8, 2

    key = jax.random.PRNGKey(0)
    k_tok, k_param = jax.random.split(key)
    x_tokens = jax.random.randint(k_tok, (T, B), 0, INPUT_VOCAB, jnp.int32)
    input_lengths = jnp.full((B,), T, jnp.int32)  # unused, mirrors the module API

    params = init_params(k_param, INPUT_VOCAB, EMB_DIM, HIDDEN_DIM, N_LAYERS)

    fwd = jax.jit(functools.partial(encoder_lstm_forward, params))
    output, h_n, c_n = fwd(x_tokens, input_lengths)
    jax.block_until_ready((output, h_n, c_n))

    # correctness check vs. pure-JAX reference
    ref_out, ref_h, ref_c = encoder_lstm_ref(params, x_tokens)
    assert output.shape == (T, B, HIDDEN_DIM)
    assert h_n.shape == (N_LAYERS, B, HIDDEN_DIM)
    assert c_n.shape == (N_LAYERS, B, HIDDEN_DIM)
    import numpy as np
    np.testing.assert_allclose(np.asarray(output), np.asarray(ref_out),
                               rtol=1e-4, atol=1e-4)
    np.testing.assert_allclose(np.asarray(h_n), np.asarray(ref_h),
                               rtol=1e-4, atol=1e-4)
    np.testing.assert_allclose(np.asarray(c_n), np.asarray(ref_c),
                               rtol=1e-4, atol=1e-4)

    print("KERNEL_OK")
</pallas_src>

<mosaic_0001>
module attributes {stable_mosaic.version = 11 : i64} {
  func.func @_fused_encoder_kernel(%arg0: memref<64x1xi32, #tpu.memory_space<vmem>>, %arg1: memref<56x32xf32, #tpu.memory_space<vmem>>, %arg2: memref<32x128xf32, #tpu.memory_space<vmem>>, %arg3: memref<32x128xf32, #tpu.memory_space<vmem>>, %arg4: memref<1x128xf32, #tpu.memory_space<vmem>>, %arg5: memref<32x128xf32, #tpu.memory_space<vmem>>, %arg6: memref<32x128xf32, #tpu.memory_space<vmem>>, %arg7: memref<1x128xf32, #tpu.memory_space<vmem>>, %arg8: memref<32x128xf32, #tpu.memory_space<vmem>>, %arg9: memref<32x128xf32, #tpu.memory_space<vmem>>, %arg10: memref<1x128xf32, #tpu.memory_space<vmem>>, %arg11: memref<32x128xf32, #tpu.memory_space<vmem>>, %arg12: memref<32x128xf32, #tpu.memory_space<vmem>>, %arg13: memref<1x128xf32, #tpu.memory_space<vmem>>, %arg14: memref<8x2x32xf32, #tpu.memory_space<vmem>>, %arg15: memref<4x2x32xf32, #tpu.memory_space<vmem>>, %arg16: memref<4x2x32xf32, #tpu.memory_space<vmem>>, %arg17: memref<8x8x128xf32, #tpu.memory_space<vmem>>, %arg18: memref<8x8x32xf32, #tpu.memory_space<vmem>>) attributes {dimension_semantics = [], scalar_prefetch = 0 : i64, scratch_operands = 2 : i64, tpu.core_type = #tpu.core_type<tc>} {
    %c0 = arith.constant 0 : index
    %c0_0 = arith.constant 0 : index
    %0 = vector.load %arg0[%c0, %c0_0] : memref<64x1xi32, #tpu.memory_space<vmem>>, vector<64x1xi32>
    %1 = tpu.iota {dimensions = array<i32: 1>} : vector<64x56xi32>
    %2 = vector.broadcast %0 : vector<64x1xi32> to vector<64x56xi32>
    %3 = arith.cmpi eq, %2, %1 : vector<64x56xi32>
    %4 = arith.extui %3 : vector<64x56xi1> to vector<64x56xi32>
    %5 = arith.sitofp %4 : vector<64x56xi32> to vector<64x56xf32>
    %c0_1 = arith.constant 0 : index
    %c0_2 = arith.constant 0 : index
    %6 = vector.load %arg1[%c0_1, %c0_2] : memref<56x32xf32, #tpu.memory_space<vmem>>, vector<56x32xf32>
    %cst = arith.constant dense<0.000000e+00> : vector<64x32xf32>
    %7 = tpu.matmul %5, %6, %cst {dimension_numbers = #tpu.dot_dimension_numbers<[1], [0], [0], [1], [0, 0, 1, 1], [], []>} : vector<64x56xf32>, vector<56x32xf32>, vector<64x32xf32> -> vector<64x32xf32>
    %c0_3 = arith.constant 0 : index
    %c0_4 = arith.constant 0 : index
    %8 = vector.load %arg2[%c0_3, %c0_4] : memref<32x128xf32, #tpu.memory_space<vmem>>, vector<32x128xf32>
    %c0_5 = arith.constant 0 : index
    %c0_6 = arith.constant 0 : index
    %9 = vector.load %arg3[%c0_5, %c0_6] : memref<32x128xf32, #tpu.memory_space<vmem>>, vector<32x128xf32>
    %c0_7 = arith.constant 0 : index
    %c0_8 = arith.constant 0 : index
    %10 = vector.load %arg4[%c0_7, %c0_8] : memref<1x128xf32, #tpu.memory_space<vmem>>, vector<1x128xf32>
    %cst_9 = arith.constant dense<0.000000e+00> : vector<64x128xf32>
    %11 = tpu.matmul %7, %8, %cst_9 {dimension_numbers = #tpu.dot_dimension_numbers<[1], [0], [0], [1], [0, 0, 1, 1], [], []>} : vector<64x32xf32>, vector<32x128xf32>, vector<64x128xf32> -> vector<64x128xf32>
    %12 = vector.broadcast %10 : vector<1x128xf32> to vector<64x128xf32>
    %13 = arith.addf %11, %12 : vector<64x128xf32>
    %14 = vector.shape_cast %13 : vector<64x128xf32> to vector<8x8x128xf32>
    %c0_10 = arith.constant 0 : index
    %c0_11 = arith.constant 0 : index
    %c0_12 = arith.constant 0 : index
    %15 = vector.load %arg17[%c0_10, %c0_11, %c0_12] : memref<8x8x128xf32, #tpu.memory_space<vmem>>, vector<8x8x128xf32>
    tpu.vector_store %arg17[%c0_10, %c0_11, %c0_12], %14 {strides = array<i32>} : memref<8x8x128xf32, #tpu.memory_space<vmem>>, vector<8x8x128xf32>,
    %cst_13 = arith.constant 0.000000e+00 : f32
    %16 = vector.broadcast %cst_13 : f32 to vector<8x32xf32>
    %c0_i32 = arith.constant 0 : i32
    %17 = arith.index_cast %c0_i32 : i32 to index
    %c0_14 = arith.constant 0 : index
    %c0_15 = arith.constant 0 : index
    %18 = vector.load %arg17[%17, %c0_14, %c0_15] : memref<8x8x128xf32, #tpu.memory_space<vmem>>, vector<1x8x128xf32>
    %19 = vector.shape_cast %18 : vector<1x8x128xf32> to vector<8x128xf32>
    %cst_16 = arith.constant dense<0.000000e+00> : vector<8x128xf32>
    %20 = tpu.matmul %16, %9, %cst_16 {dimension_numbers = #tpu.dot_dimension_numbers<[1], [0], [0], [1], [0, 0, 1, 1], [], []>} : vector<8x32xf32>, vector<32x128xf32>, vector<8x128xf32> -> vector<8x128xf32>
    %21 = arith.addf %19, %20 : vector<8x128xf32>
    %22 = vector.extract_strided_slice %21 {offsets = [0, 0], sizes = [8, 32], strides = [1, 1]} : vector<8x128xf32> to vector<8x32xf32>
    %23 = arith.negf %22 : vector<8x32xf32>
    %24 = math.exp %23 : vector<8x32xf32>
    %cst_17 = arith.constant 1.000000e+00 : f32
    %25 = vector.broadcast %cst_17 : f32 to vector<8x32xf32>
    %26 = arith.addf %25, %24 : vector<8x32xf32>
    %27 = arith.divf %25, %26 : vector<8x32xf32>
    %28 = vector.extract_strided_slice %21 {offsets = [0, 32], sizes = [8, 32], strides = [1, 1]} : vector<8x128xf32> to vector<8x32xf32>
    %29 = arith.negf %28 : vector<8x32xf32>
    %30 = math.exp %29 : vector<8x32xf32>
    %cst_18 = arith.constant 1.000000e+00 : f32
    %31 = vector.broadcast %cst_18 : f32 to vector<8x32xf32>
    %32 = arith.addf %31, %30 : vector<8x32xf32>
    %33 = arith.divf %31, %32 : vector<8x32xf32>
    %34 = vector.extract_strided_slice %21 {offsets = [0, 64], sizes = [8, 32], strides = [1, 1]} : vector<8x128xf32> to vector<8x32xf32>
    %35 = math.tanh %34 : vector<8x32xf32>
    %36 = vector.extract_strided_slice %21 {offsets = [0, 96], sizes = [8, 32], strides = [1, 1]} : vector<8x128xf32> to vector<8x32xf32>
    %37 = arith.negf %36 : vector<8x32xf32>
    %38 = math.exp %37 : vector<8x32xf32>
    %cst_19 = arith.constant 1.000000e+00 : f32
    %39 = vector.broadcast %cst_19 : f32 to vector<8x32xf32>
    %40 = arith.addf %39, %38 : vector<8x32xf32>
    %41 = arith.divf %39, %40 : vector<8x32xf32>
    %42 = arith.mulf %33, %16 : vector<8x32xf32>
    %43 = arith.mulf %27, %35 : vector<8x32xf32>
    %44 = arith.addf %42, %43 : vector<8x32xf32>
    %45 = math.tanh %44 : vector<8x32xf32>
    %46 = arith.mulf %41, %45 : vector<8x32xf32>
    %47 = arith.index_cast %c0_i32 : i32 to index
    %c0_20 = arith.constant 0 : index
    %c0_21 = arith.constant 0 : index
    %48 = vector.load %arg18[%47, %c0_20, %c0_21] : memref<8x8x32xf32, #tpu.memory_space<vmem>>, vector<1x8x32xf32>
    %49 = vector.shape_cast %48 : vector<1x8x32xf32> to vector<8x32xf32>
    %50 = vector.shape_cast %46 : vector<8x32xf32> to vector<1x8x32xf32>
    tpu.vector_store %arg18[%47, %c0_20, %c0_21], %50 {strides = array<i32>} : memref<8x8x32xf32, #tpu.memory_space<vmem>>, vector<1x8x32xf32>,
    %c1_i32 = arith.constant 1 : i32
    %51 = arith.index_cast %c1_i32 : i32 to index
    %c0_22 = arith.constant 0 : index
    %c0_23 = arith.constant 0 : index
    %52 = vector.load %arg17[%51, %c0_22, %c0_23] : memref<8x8x128xf32, #tpu.memory_space<vmem>>, vector<1x8x128xf32>
    %53 = vector.shape_cast %52 : vector<1x8x128xf32> to vector<8x128xf32>
    %cst_24 = arith.constant dense<0.000000e+00> : vector<8x128xf32>
    %54 = tpu.matmul %46, %9, %cst_24 {dimension_numbers = #tpu.dot_dimension_numbers<[1], [0], [0], [1], [0, 0, 1, 1], [], []>} : vector<8x32xf32>, vector<32x128xf32>, vector<8x128xf32> -> vector<8x128xf32>
    %55 = arith.addf %53, %54 : vector<8x128xf32>
    %56 = vector.extract_strided_slice %55 {offsets = [0, 0], sizes = [8, 32], strides = [1, 1]} : vector<8x128xf32> to vector<8x32xf32>
    %57 = arith.negf %56 : vector<8x32xf32>
    %58 = math.exp %57 : vector<8x32xf32>
    %cst_25 = arith.constant 1.000000e+00 : f32
    %59 = vector.broadcast %cst_25 : f32 to vector<8x32xf32>
    %60 = arith.addf %59, %58 : vector<8x32xf32>
    %61 = arith.divf %59, %60 : vector<8x32xf32>
    %62 = vector.extract_strided_slice %55 {offsets = [0, 32], sizes = [8, 32], strides = [1, 1]} : vector<8x128xf32> to vector<8x32xf32>
    %63 = arith.negf %62 : vector<8x32xf32>
    %64 = math.exp %63 : vector<8x32xf32>
    %cst_26 = arith.constant 1.000000e+00 : f32
    %65 = vector.broadcast %cst_26 : f32 to vector<8x32xf32>
    %66 = arith.addf %65, %64 : vector<8x32xf32>
    %67 = arith.divf %65, %66 : vector<8x32xf32>
    %68 = vector.extract_strided_slice %55 {offsets = [0, 64], sizes = [8, 32], strides = [1, 1]} : vector<8x128xf32> to vector<8x32xf32>
    %69 = math.tanh %68 : vector<8x32xf32>
    %70 = vector.extract_strided_slice %55 {offsets = [0, 96], sizes = [8, 32], strides = [1, 1]} : vector<8x128xf32> to vector<8x32xf32>
    %71 = arith.negf %70 : vector<8x32xf32>
    %72 = math.exp %71 : vector<8x32xf32>
    %cst_27 = arith.constant 1.000000e+00 : f32
    %73 = vector.broadcast %cst_27 : f32 to vector<8x32xf32>
    %74 = arith.addf %73, %72 : vector<8x32xf32>
    %75 = arith.divf %73, %74 : vector<8x32xf32>
    %76 = arith.mulf %67, %44 : vector<8x32xf32>
    %77 = arith.mulf %61, %69 : vector<8x32xf32>
    %78 = arith.addf %76, %77 : vector<8x32xf32>
    %79 = math.tanh %78 : vector<8x32xf32>
    %80 = arith.mulf %75, %79 : vector<8x32xf32>
    %81 = arith.index_cast %c1_i32 : i32 to index
    %c0_28 = arith.constant 0 : index
    %c0_29 = arith.constant 0 : index
    %82 = vector.load %arg18[%81, %c0_28, %c0_29] : memref<8x8x32xf32, #tpu.memory_space<vmem>>, vector<1x8x32xf32>
    %83 = vector.shape_cast %82 : vector<1x8x32xf32> to vector<8x32xf32>
    %84 = vector.shape_cast %80 : vector<8x32xf32> to vector<1x8x32xf32>
    tpu.vector_store %arg18[%81, %c0_28, %c0_29], %84 {strides = array<i32>} : memref<8x8x32xf32, #tpu.memory_space<vmem>>, vector<1x8x32xf32>,
    %c2_i32 = arith.constant 2 : i32
    %85 = arith.index_cast %c2_i32 : i32 to index
    %c0_30 = arith.constant 0 : index
    %c0_31 = arith.constant 0 : index
    %86 = vector.load %arg17[%85, %c0_30, %c0_31] : memref<8x8x128xf32, #tpu.memory_space<vmem>>, vector<1x8x128xf32>
    %87 = vector.shape_cast %86 : vector<1x8x128xf32> to vector<8x128xf32>
    %cst_32 = arith.constant dense<0.000000e+00> : vector<8x128xf32>
    %88 = tpu.matmul %80, %9, %cst_32 {dimension_numbers = #tpu.dot_dimension_numbers<[1], [0], [0], [1], [0, 0, 1, 1], [], []>} : vector<8x32xf32>, vector<32x128xf32>, vector<8x128xf32> -> vector<8x128xf32>
    %89 = arith.addf %87, %88 : vector<8x128xf32>
    %90 = vector.extract_strided_slice %89 {offsets = [0, 0], sizes = [8, 32], strides = [1, 1]} : vector<8x128xf32> to vector<8x32xf32>
    %91 = arith.negf %90 : vector<8x32xf32>
    %92 = math.exp %91 : vector<8x32xf32>
    %cst_33 = arith.constant 1.000000e+00 : f32
    %93 = vector.broadcast %cst_33 : f32 to vector<8x32xf32>
    %94 = arith.addf %93, %92 : vector<8x32xf32>
    %95 = arith.divf %93, %94 : vector<8x32xf32>
    %96 = vector.extract_strided_slice %89 {offsets = [0, 32], sizes = [8, 32], strides = [1, 1]} : vector<8x128xf32> to vector<8x32xf32>
    %97 = arith.negf %96 : vector<8x32xf32>
    %98 = math.exp %97 : vector<8x32xf32>
    %cst_34 = arith.constant 1.000000e+00 : f32
    %99 = vector.broadcast %cst_34 : f32 to vector<8x32xf32>
    %100 = arith.addf %99, %98 : vector<8x32xf32>
    %101 = arith.divf %99, %100 : vector<8x32xf32>
    %102 = vector.extract_strided_slice %89 {offsets = [0, 64], sizes = [8, 32], strides = [1, 1]} : vector<8x128xf32> to vector<8x32xf32>
    %103 = math.tanh %102 : vector<8x32xf32>
    %104 = vector.extract_strided_slice %89 {offsets = [0, 96], sizes = [8, 32], strides = [1, 1]} : vector<8x128xf32> to vector<8x32xf32>
    %105 = arith.negf %104 : vector<8x32xf32>
    %106 = math.exp %105 : vector<8x32xf32>
    %cst_35 = arith.constant 1.000000e+00 : f32
    %107 = vector.broadcast %cst_35 : f32 to vector<8x32xf32>
    %108 = arith.addf %107, %106 : vector<8x32xf32>
    %109 = arith.divf %107, %108 : vector<8x32xf32>
    %110 = arith.mulf %101, %78 : vector<8x32xf32>
    %111 = arith.mulf %95, %103 : vector<8x32xf32>
    %112 = arith.addf %110, %111 : vector<8x32xf32>
    %113 = math.tanh %112 : vector<8x32xf32>
    %114 = arith.mulf %109, %113 : vector<8x32xf32>
    %115 = arith.index_cast %c2_i32 : i32 to index
    %c0_36 = arith.constant 0 : index
    %c0_37 = arith.constant 0 : index
    %116 = vector.load %arg18[%115, %c0_36, %c0_37] : memref<8x8x32xf32, #tpu.memory_space<vmem>>, vector<1x8x32xf32>
    %117 = vector.shape_cast %116 : vector<1x8x32xf32> to vector<8x32xf32>
    %118 = vector.shape_cast %114 : vector<8x32xf32> to vector<1x8x32xf32>
    tpu.vector_store %arg18[%115, %c0_36, %c0_37], %118 {strides = array<i32>} : memref<8x8x32xf32, #tpu.memory_space<vmem>>, vector<1x8x32xf32>,
    %c3_i32 = arith.constant 3 : i32
    %119 = arith.index_cast %c3_i32 : i32 to index
    %c0_38 = arith.constant 0 : index
    %c0_39 = arith.constant 0 : index
    %120 = vector.load %arg17[%119, %c0_38, %c0_39] : memref<8x8x128xf32, #tpu.memory_space<vmem>>, vector<1x8x128xf32>
    %121 = vector.shape_cast %120 : vector<1x8x128xf32> to vector<8x128xf32>
    %cst_40 = arith.constant dense<0.000000e+00> : vector<8x128xf32>
    %122 = tpu.matmul %114, %9, %cst_40 {dimension_numbers = #tpu.dot_dimension_numbers<[1], [0], [0], [1], [0, 0, 1, 1], [], []>} : vector<8x32xf32>, vector<32x128xf32>, vector<8x128xf32> -> vector<8x128xf32>
    %123 = arith.addf %121, %122 : vector<8x128xf32>
    %124 = vector.extract_strided_slice %123 {offsets = [0, 0], sizes = [8, 32], strides = [1, 1]} : vector<8x128xf32> to vector<8x32xf32>
    %125 = arith.negf %124 : vector<8x32xf32>
    %126 = math.exp %125 : vector<8x32xf32>
    %cst_41 = arith.constant 1.000000e+00 : f32
    %127 = vector.broadcast %cst_41 : f32 to vector<8x32xf32>
    %128 = arith.addf %127, %126 : vector<8x32xf32>
    %129 = arith.divf %127, %128 : vector<8x32xf32>
    %130 = vector.extract_strided_slice %123 {offsets = [0, 32], sizes = [8, 32], strides = [1, 1]} : vector<8x128xf32> to vector<8x32xf32>
    %131 = arith.negf %130 : vector<8x32xf32>
    %132 = math.exp %131 : vector<8x32xf32>
    %cst_42 = arith.constant 1.000000e+00 : f32
    %133 = vector.broadcast %cst_42 : f32 to vector<8x32xf32>
    %134 = arith.addf %133, %132 : vector<8x32xf32>
    %135 = arith.divf %133, %134 : vector<8x32xf32>
    %136 = vector.extract_strided_slice %123 {offsets = [0, 64], sizes = [8, 32], strides = [1, 1]} : vector<8x128xf32> to vector<8x32xf32>
    %137 = math.tanh %136 : vector<8x32xf32>
    %138 = vector.extract_strided_slice %123 {offsets = [0, 96], sizes = [8, 32], strides = [1, 1]} : vector<8x128xf32> to vector<8x32xf32>
    %139 = arith.negf %138 : vector<8x32xf32>
    %140 = math.exp %139 : vector<8x32xf32>
    %cst_43 = arith.constant 1.000000e+00 : f32
    %141 = vector.broadcast %cst_43 : f32 to vector<8x32xf32>
    %142 = arith.addf %141, %140 : vector<8x32xf32>
    %143 = arith.divf %141, %142 : vector<8x32xf32>
    %144 = arith.mulf %135, %112 : vector<8x32xf32>
    %145 = arith.mulf %129, %137 : vector<8x32xf32>
    %146 = arith.addf %144, %145 : vector<8x32xf32>
    %147 = math.tanh %146 : vector<8x32xf32>
    %148 = arith.mulf %143, %147 : vector<8x32xf32>
    %149 = arith.index_cast %c3_i32 : i32 to index
    %c0_44 = arith.constant 0 : index
    %c0_45 = arith.constant 0 : index
    %150 = vector.load %arg18[%149, %c0_44, %c0_45] : memref<8x8x32xf32, #tpu.memory_space<vmem>>, vector<1x8x32xf32>
    %151 = vector.shape_cast %150 : vector<1x8x32xf32> to vector<8x32xf32>
    %152 = vector.shape_cast %148 : vector<8x32xf32> to vector<1x8x32xf32>
    tpu.vector_store %arg18[%149, %c0_44, %c0_45], %152 {strides = array<i32>} : memref<8x8x32xf32, #tpu.memory_space<vmem>>, vector<1x8x32xf32>,
    %c4_i32 = arith.constant 4 : i32
    %153 = arith.index_cast %c4_i32 : i32 to index
    %c0_46 = arith.constant 0 : index
    %c0_47 = arith.constant 0 : index
    %154 = vector.load %arg17[%153, %c0_46, %c0_47] : memref<8x8x128xf32, #tpu.memory_space<vmem>>, vector<1x8x128xf32>
    %155 = vector.shape_cast %154 : vector<1x8x128xf32> to vector<8x128xf32>
    %cst_48 = arith.constant dense<0.000000e+00> : vector<8x128xf32>
    %156 = tpu.matmul %148, %9, %cst_48 {dimension_numbers = #tpu.dot_dimension_numbers<[1], [0], [0], [1], [0, 0, 1, 1], [], []>} : vector<8x32xf32>, vector<32x128xf32>, vector<8x128xf32> -> vector<8x128xf32>
    %157 = arith.addf %155, %156 : vector<8x128xf32>
    %158 = vector.extract_strided_slice %157 {offsets = [0, 0], sizes = [8, 32], strides = [1, 1]} : vector<8x128xf32> to vector<8x32xf32>
    %159 = arith.negf %158 : vector<8x32xf32>
    %160 = math.exp %159 : vector<8x32xf32>
    %cst_49 = arith.constant 1.000000e+00 : f32
    %161 = vector.broadcast %cst_49 : f32 to vector<8x32xf32>
    %162 = arith.addf %161, %160 : vector<8x32xf32>
    %163 = arith.divf %161, %162 : vector<8x32xf32>
    %164 = vector.extract_strided_slice %157 {offsets = [0, 32], sizes = [8, 32], strides = [1, 1]} : vector<8x128xf32> to vector<8x32xf32>
    %165 = arith.negf %164 : vector<8x32xf32>
    %166 = math.exp %165 : vector<8x32xf32>
    %cst_50 = arith.constant 1.000000e+00 : f32
    %167 = vector.broadcast %cst_50 : f32 to vector<8x32xf32>
    %168 = arith.addf %167, %166 : vector<8x32xf32>
    %169 = arith.divf %167, %168 : vector<8x32xf32>
    %170 = vector.extract_strided_slice %157 {offsets = [0, 64], sizes = [8, 32], strides = [1, 1]} : vector<8x128xf32> to vector<8x32xf32>
    %171 = math.tanh %170 : vector<8x32xf32>
    %172 = vector.extract_strided_slice %157 {offsets = [0, 96], sizes = [8, 32], strides = [1, 1]} : vector<8x128xf32> to vector<8x32xf32>
    %173 = arith.negf %172 : vector<8x32xf32>
    %174 = math.exp %173 : vector<8x32xf32>
    %cst_51 = arith.constant 1.000000e+00 : f32
    %175 = vector.broadcast %cst_51 : f32 to vector<8x32xf32>
    %176 = arith.addf %175, %174 : vector<8x32xf32>
    %177 = arith.divf %175, %176 : vector<8x32xf32>
    %178 = arith.mulf %169, %146 : vector<8x32xf32>
    %179 = arith.mulf %163, %171 : vector<8x32xf32>
    %180 = arith.addf %178, %179 : vector<8x32xf32>
    %181 = math.tanh %180 : vector<8x32xf32>
    %182 = arith.mulf %177, %181 : vector<8x32xf32>
    %183 = arith.index_cast %c4_i32 : i32 to index
    %c0_52 = arith.constant 0 : index
    %c0_53 = arith.constant 0 : index
    %184 = vector.load %arg18[%183, %c0_52, %c0_53] : memref<8x8x32xf32, #tpu.memory_space<vmem>>, vector<1x8x32xf32>
    %185 = vector.shape_cast %184 : vector<1x8x32xf32> to vector<8x32xf32>
    %186 = vector.shape_cast %182 : vector<8x32xf32> to vector<1x8x32xf32>
    tpu.vector_store %arg18[%183, %c0_52, %c0_53], %186 {strides = array<i32>} : memref<8x8x32xf32, #tpu.memory_space<vmem>>, vector<1x8x32xf32>,
    %c5_i32 = arith.constant 5 : i32
    %187 = arith.index_cast %c5_i32 : i32 to index
    %c0_54 = arith.constant 0 : index
    %c0_55 = arith.constant 0 : index
    %188 = vector.load %arg17[%187, %c0_54, %c0_55] : memref<8x8x128xf32, #tpu.memory_space<vmem>>, vector<1x8x128xf32>
    %189 = vector.shape_cast %188 : vector<1x8x128xf32> to vector<8x128xf32>
    %cst_56 = arith.constant dense<0.000000e+00> : vector<8x128xf32>
    %190 = tpu.matmul %182, %9, %cst_56 {dimension_numbers = #tpu.dot_dimension_numbers<[1], [0], [0], [1], [0, 0, 1, 1], [], []>} : vector<8x32xf32>, vector<32x128xf32>, vector<8x128xf32> -> vector<8x128xf32>
    %191 = arith.addf %189, %190 : vector<8x128xf32>
    %192 = vector.extract_strided_slice %191 {offsets = [0, 0], sizes = [8, 32], strides = [1, 1]} : vector<8x128xf32> to vector<8x32xf32>
    %193 = arith.negf %192 : vector<8x32xf32>
    %194 = math.exp %193 : vector<8x32xf32>
    %cst_57 = arith.constant 1.000000e+00 : f32
    %195 = vector.broadcast %cst_57 : f32 to vector<8x32xf32>
    %196 = arith.addf %195, %194 : vector<8x32xf32>
    %197 = arith.divf %195, %196 : vector<8x32xf32>
    %198 = vector.extract_strided_slice %191 {offsets = [0, 32], sizes = [8, 32], strides = [1, 1]} : vector<8x128xf32> to vector<8x32xf32>
    %199 = arith.negf %198 : vector<8x32xf32>
    %200 = math.exp %199 : vector<8x32xf32>
    %cst_58 = arith.constant 1.000000e+00 : f32
    %201 = vector.broadcast %cst_58 : f32 to vector<8x32xf32>
    %202 = arith.addf %201, %200 : vector<8x32xf32>
    %203 = arith.divf %201, %202 : vector<8x32xf32>
    %204 = vector.extract_strided_slice %191 {offsets = [0, 64], sizes = [8, 32], strides = [1, 1]} : vector<8x128xf32> to vector<8x32xf32>
    %205 = math.tanh %204 : vector<8x32xf32>
    %206 = vector.extract_strided_slice %191 {offsets = [0, 96], sizes = [8, 32], strides = [1, 1]} : vector<8x128xf32> to vector<8x32xf32>
    %207 = arith.negf %206 : vector<8x32xf32>
    %208 = math.exp %207 : vector<8x32xf32>
    %cst_59 = arith.constant 1.000000e+00 : f32
    %209 = vector.broadcast %cst_59 : f32 to vector<8x32xf32>
    %210 = arith.addf %209, %208 : vector<8x32xf32>
    %211 = arith.divf %209, %210 : vector<8x32xf32>
    %212 = arith.mulf %203, %180 : vector<8x32xf32>
    %213 = arith.mulf %197, %205 : vector<8x32xf32>
    %214 = arith.addf %212, %213 : vector<8x32xf32>
    %215 = math.tanh %214 : vector<8x32xf32>
    %216 = arith.mulf %211, %215 : vector<8x32xf32>
    %217 = arith.index_cast %c5_i32 : i32 to index
    %c0_60 = arith.constant 0 : index
    %c0_61 = arith.constant 0 : index
    %218 = vector.load %arg18[%217, %c0_60, %c0_61] : memref<8x8x32xf32, #tpu.memory_space<vmem>>, vector<1x8x32xf32>
    %219 = vector.shape_cast %218 : vector<1x8x32xf32> to vector<8x32xf32>
    %220 = vector.shape_cast %216 : vector<8x32xf32> to vector<1x8x32xf32>
    tpu.vector_store %arg18[%217, %c0_60, %c0_61], %220 {strides = array<i32>} : memref<8x8x32xf32, #tpu.memory_space<vmem>>, vector<1x8x32xf32>,
    %c6_i32 = arith.constant 6 : i32
    %221 = arith.index_cast %c6_i32 : i32 to index
    %c0_62 = arith.constant 0 : index
    %c0_63 = arith.constant 0 : index
    %222 = vector.load %arg17[%221, %c0_62, %c0_63] : memref<8x8x128xf32, #tpu.memory_space<vmem>>, vector<1x8x128xf32>
    %223 = vector.shape_cast %222 : vector<1x8x128xf32> to vector<8x128xf32>
    %cst_64 = arith.constant dense<0.000000e+00> : vector<8x128xf32>
    %224 = tpu.matmul %216, %9, %cst_64 {dimension_numbers = #tpu.dot_dimension_numbers<[1], [0], [0], [1], [0, 0, 1, 1], [], []>} : vector<8x32xf32>, vector<32x128xf32>, vector<8x128xf32> -> vector<8x128xf32>
    %225 = arith.addf %223, %224 : vector<8x128xf32>
    %226 = vector.extract_strided_slice %225 {offsets = [0, 0], sizes = [8, 32], strides = [1, 1]} : vector<8x128xf32> to vector<8x32xf32>
    %227 = arith.negf %226 : vector<8x32xf32>
    %228 = math.exp %227 : vector<8x32xf32>
    %cst_65 = arith.constant 1.000000e+00 : f32
    %229 = vector.broadcast %cst_65 : f32 to vector<8x32xf32>
    %230 = arith.addf %229, %228 : vector<8x32xf32>
    %231 = arith.divf %229, %230 : vector<8x32xf32>
    %232 = vector.extract_strided_slice %225 {offsets = [0, 32], sizes = [8, 32], strides = [1, 1]} : vector<8x128xf32> to vector<8x32xf32>
    %233 = arith.negf %232 : vector<8x32xf32>
    %234 = math.exp %233 : vector<8x32xf32>
    %cst_66 = arith.constant 1.000000e+00 : f32
    %235 = vector.broadcast %cst_66 : f32 to vector<8x32xf32>
    %236 = arith.addf %235, %234 : vector<8x32xf32>
    %237 = arith.divf %235, %236 : vector<8x32xf32>
    %238 = vector.extract_strided_slice %225 {offsets = [0, 64], sizes = [8, 32], strides = [1, 1]} : vector<8x128xf32> to vector<8x32xf32>
    %239 = math.tanh %238 : vector<8x32xf32>
    %240 = vector.extract_strided_slice %225 {offsets = [0, 96], sizes = [8, 32], strides = [1, 1]} : vector<8x128xf32> to vector<8x32xf32>
    %241 = arith.negf %240 : vector<8x32xf32>
    %242 = math.exp %241 : vector<8x32xf32>
    %cst_67 = arith.constant 1.000000e+00 : f32
    %243 = vector.broadcast %cst_67 : f32 to vector<8x32xf32>
    %244 = arith.addf %243, %242 : vector<8x32xf32>
    %245 = arith.divf %243, %244 : vector<8x32xf32>
    %246 = arith.mulf %237, %214 : vector<8x32xf32>
    %247 = arith.mulf %231, %239 : vector<8x32xf32>
    %248 = arith.addf %246, %247 : vector<8x32xf32>
    %249 = math.tanh %248 : vector<8x32xf32>
    %250 = arith.mulf %245, %249 : vector<8x32xf32>
    %251 = arith.index_cast %c6_i32 : i32 to index
    %c0_68 = arith.constant 0 : index
    %c0_69 = arith.constant 0 : index
    %252 = vector.load %arg18[%251, %c0_68, %c0_69] : memref<8x8x32xf32, #tpu.memory_space<vmem>>, vector<1x8x32xf32>
    %253 = vector.shape_cast %252 : vector<1x8x32xf32> to vector<8x32xf32>
    %254 = vector.shape_cast %250 : vector<8x32xf32> to vector<1x8x32xf32>
    tpu.vector_store %arg18[%251, %c0_68, %c0_69], %254 {strides = array<i32>} : memref<8x8x32xf32, #tpu.memory_space<vmem>>, vector<1x8x32xf32>,
    %c7_i32 = arith.constant 7 : i32
    %255 = arith.index_cast %c7_i32 : i32 to index
    %c0_70 = arith.constant 0 : index
    %c0_71 = arith.constant 0 : index
    %256 = vector.load %arg17[%255, %c0_70, %c0_71] : memref<8x8x128xf32, #tpu.memory_space<vmem>>, vector<1x8x128xf32>
    %257 = vector.shape_cast %256 : vector<1x8x128xf32> to vector<8x128xf32>
    %cst_72 = arith.constant dense<0.000000e+00> : vector<8x128xf32>
    %258 = tpu.matmul %250, %9, %cst_72 {dimension_numbers = #tpu.dot_dimension_numbers<[1], [0], [0], [1], [0, 0, 1, 1], [], []>} : vector<8x32xf32>, vector<32x128xf32>, vector<8x128xf32> -> vector<8x128xf32>
    %259 = arith.addf %257, %258 : vector<8x128xf32>
    %260 = vector.extract_strided_slice %259 {offsets = [0, 0], sizes = [8, 32], strides = [1, 1]} : vector<8x128xf32> to vector<8x32xf32>
    %261 = arith.negf %260 : vector<8x32xf32>
    %262 = math.exp %261 : vector<8x32xf32>
    %cst_73 = arith.constant 1.000000e+00 : f32
    %263 = vector.broadcast %cst_73 : f32 to vector<8x32xf32>
    %264 = arith.addf %263, %262 : vector<8x32xf32>
    %265 = arith.divf %263, %264 : vector<8x32xf32>
    %266 = vector.extract_strided_slice %259 {offsets = [0, 32], sizes = [8, 32], strides = [1, 1]} : vector<8x128xf32> to vector<8x32xf32>
    %267 = arith.negf %266 : vector<8x32xf32>
    %268 = math.exp %267 : vector<8x32xf32>
    %cst_74 = arith.constant 1.000000e+00 : f32
    %269 = vector.broadcast %cst_74 : f32 to vector<8x32xf32>
    %270 = arith.addf %269, %268 : vector<8x32xf32>
    %271 = arith.divf %269, %270 : vector<8x32xf32>
    %272 = vector.extract_strided_slice %259 {offsets = [0, 64], sizes = [8, 32], strides = [1, 1]} : vector<8x128xf32> to vector<8x32xf32>
    %273 = math.tanh %272 : vector<8x32xf32>
    %274 = vector.extract_strided_slice %259 {offsets = [0, 96], sizes = [8, 32], strides = [1, 1]} : vector<8x128xf32> to vector<8x32xf32>
    %275 = arith.negf %274 : vector<8x32xf32>
    %276 = math.exp %275 : vector<8x32xf32>
    %cst_75 = arith.constant 1.000000e+00 : f32
    %277 = vector.broadcast %cst_75 : f32 to vector<8x32xf32>
    %278 = arith.addf %277, %276 : vector<8x32xf32>
    %279 = arith.divf %277, %278 : vector<8x32xf32>
    %280 = arith.mulf %271, %248 : vector<8x32xf32>
    %281 = arith.mulf %265, %273 : vector<8x32xf32>
    %282 = arith.addf %280, %281 : vector<8x32xf32>
    %283 = math.tanh %282 : vector<8x32xf32>
    %284 = arith.mulf %279, %283 : vector<8x32xf32>
    %285 = arith.index_cast %c7_i32 : i32 to index
    %c0_76 = arith.constant 0 : index
    %c0_77 = arith.constant 0 : index
    %286 = vector.load %arg18[%285, %c0_76, %c0_77] : memref<8x8x32xf32, #tpu.memory_space<vmem>>, vector<1x8x32xf32>
    %287 = vector.shape_cast %286 : vector<1x8x32xf32> to vector<8x32xf32>
    %288 = vector.shape_cast %284 : vector<8x32xf32> to vector<1x8x32xf32>
    tpu.vector_store %arg18[%285, %c0_76, %c0_77], %288 {strides = array<i32>} : memref<8x8x32xf32, #tpu.memory_space<vmem>>, vector<1x8x32xf32>,
    %c8_i32 = arith.constant 8 : i32
    %289 = vector.extract_strided_slice %284 {offsets = [0, 0], sizes = [2, 32], strides = [1, 1]} : vector<8x32xf32> to vector<2x32xf32>
    %c0_78 = arith.constant 0 : index
    %c0_79 = arith.constant 0 : index
    %c0_80 = arith.constant 0 : index
    %290 = vector.load %arg15[%c0_78, %c0_79, %c0_80] : memref<4x2x32xf32, #tpu.memory_space<vmem>>, vector<1x2x32xf32>
    %291 = vector.shape_cast %290 : vector<1x2x32xf32> to vector<2x32xf32>
    %292 = vector.shape_cast %289 : vector<2x32xf32> to vector<1x2x32xf32>
    tpu.vector_store %arg15[%c0_78, %c0_79, %c0_80], %292 {strides = array<i32>} : memref<4x2x32xf32, #tpu.memory_space<vmem>>, vector<1x2x32xf32>,
    %293 = vector.extract_strided_slice %282 {offsets = [0, 0], sizes = [2, 32], strides = [1, 1]} : vector<8x32xf32> to vector<2x32xf32>
    %c0_81 = arith.constant 0 : index
    %c0_82 = arith.constant 0 : index
    %c0_83 = arith.constant 0 : index
    %294 = vector.load %arg16[%c0_81, %c0_82, %c0_83] : memref<4x2x32xf32, #tpu.memory_space<vmem>>, vector<1x2x32xf32>
    %295 = vector.shape_cast %294 : vector<1x2x32xf32> to vector<2x32xf32>
    %296 = vector.shape_cast %293 : vector<2x32xf32> to vector<1x2x32xf32>
    tpu.vector_store %arg16[%c0_81, %c0_82, %c0_83], %296 {strides = array<i32>} : memref<4x2x32xf32, #tpu.memory_space<vmem>>, vector<1x2x32xf32>,
    %c0_84 = arith.constant 0 : index
    %c0_85 = arith.constant 0 : index
    %c0_86 = arith.constant 0 : index
    %297 = vector.load %arg18[%c0_84, %c0_85, %c0_86] : memref<8x8x32xf32, #tpu.memory_space<vmem>>, vector<8x8x32xf32>
    %298 = vector.shape_cast %297 : vector<8x8x32xf32> to vector<64x32xf32>
    %c0_87 = arith.constant 0 : index
    %c0_88 = arith.constant 0 : index
    %299 = vector.load %arg5[%c0_87, %c0_88] : memref<32x128xf32, #tpu.memory_space<vmem>>, vector<32x128xf32>
    %c0_89 = arith.constant 0 : index
    %c0_90 = arith.constant 0 : index
    %300 = vector.load %arg6[%c0_89, %c0_90] : memref<32x128xf32, #tpu.memory_space<vmem>>, vector<32x128xf32>
    %c0_91 = arith.constant 0 : index
    %c0_92 = arith.constant 0 : index
    %301 = vector.load %arg7[%c0_91, %c0_92] : memref<1x128xf32, #tpu.memory_space<vmem>>, vector<1x128xf32>
    %cst_93 = arith.constant dense<0.000000e+00> : vector<64x128xf32>
    %302 = tpu.matmul %298, %299, %cst_93 {dimension_numbers = #tpu.dot_dimension_numbers<[1], [0], [0], [1], [0, 0, 1, 1], [], []>} : vector<64x32xf32>, vector<32x128xf32>, vector<64x128xf32> -> vector<64x128xf32>
    %303 = vector.broadcast %301 : vector<1x128xf32> to vector<64x128xf32>
    %304 = arith.addf %302, %303 : vector<64x128xf32>
    %305 = vector.shape_cast %304 : vector<64x128xf32> to vector<8x8x128xf32>
    %c0_94 = arith.constant 0 : index
    %c0_95 = arith.constant 0 : index
    %c0_96 = arith.constant 0 : index
    %306 = vector.load %arg17[%c0_94, %c0_95, %c0_96] : memref<8x8x128xf32, #tpu.memory_space<vmem>>, vector<8x8x128xf32>
    tpu.vector_store %arg17[%c0_94, %c0_95, %c0_96], %305 {strides = array<i32>} : memref<8x8x128xf32, #tpu.memory_space<vmem>>, vector<8x8x128xf32>,
    %cst_97 = arith.constant 0.000000e+00 : f32
    %307 = vector.broadcast %cst_97 : f32 to vector<8x32xf32>
    %c0_i32_98 = arith.constant 0 : i32
    %308 = arith.index_cast %c0_i32_98 : i32 to index
    %c0_99 = arith.constant 0 : index
    %c0_100 = arith.constant 0 : index
    %309 = vector.load %arg17[%308, %c0_99, %c0_100] : memref<8x8x128xf32, #tpu.memory_space<vmem>>, vector<1x8x128xf32>
    %310 = vector.shape_cast %309 : vector<1x8x128xf32> to vector<8x128xf32>
    %cst_101 = arith.constant dense<0.000000e+00> : vector<8x128xf32>
    %311 = tpu.matmul %307, %300, %cst_101 {dimension_numbers = #tpu.dot_dimension_numbers<[1], [0], [0], [1], [0, 0, 1, 1], [], []>} : vector<8x32xf32>, vector<32x128xf32>, vector<8x128xf32> -> vector<8x128xf32>
    %312 = arith.addf %310, %311 : vector<8x128xf32>
    %313 = vector.extract_strided_slice %312 {offsets = [0, 0], sizes = [8, 32], strides = [1, 1]} : vector<8x128xf32> to vector<8x32xf32>
    %314 = arith.negf %313 : vector<8x32xf32>
    %315 = math.exp %314 : vector<8x32xf32>
    %cst_102 = arith.constant 1.000000e+00 : f32
    %316 = vector.broadcast %cst_102 : f32 to vector<8x32xf32>
    %317 = arith.addf %316, %315 : vector<8x32xf32>
    %318 = arith.divf %316, %317 : vector<8x32xf32>
    %319 = vector.extract_strided_slice %312 {offsets = [0, 32], sizes = [8, 32], strides = [1, 1]} : vector<8x128xf32> to vector<8x32xf32>
    %320 = arith.negf %319 : vector<8x32xf32>
    %321 = math.exp %320 : vector<8x32xf32>
    %cst_103 = arith.constant 1.000000e+00 : f32
    %322 = vector.broadcast %cst_103 : f32 to vector<8x32xf32>
    %323 = arith.addf %322, %321 : vector<8x32xf32>
    %324 = arith.divf %322, %323 : vector<8x32xf32>
    %325 = vector.extract_strided_slice %312 {offsets = [0, 64], sizes = [8, 32], strides = [1, 1]} : vector<8x128xf32> to vector<8x32xf32>
    %326 = math.tanh %325 : vector<8x32xf32>
    %327 = vector.extract_strided_slice %312 {offsets = [0, 96], sizes = [8, 32], strides = [1, 1]} : vector<8x128xf32> to vector<8x32xf32>
    %328 = arith.negf %327 : vector<8x32xf32>
    %329 = math.exp %328 : vector<8x32xf32>
    %cst_104 = arith.constant 1.000000e+00 : f32
    %330 = vector.broadcast %cst_104 : f32 to vector<8x32xf32>
    %331 = arith.addf %330, %329 : vector<8x32xf32>
    %332 = arith.divf %330, %331 : vector<8x32xf32>
    %333 = arith.mulf %324, %307 : vector<8x32xf32>
    %334 = arith.mulf %318, %326 : vector<8x32xf32>
    %335 = arith.addf %333, %334 : vector<8x32xf32>
    %336 = math.tanh %335 : vector<8x32xf32>
    %337 = arith.mulf %332, %336 : vector<8x32xf32>
    %338 = arith.index_cast %c0_i32_98 : i32 to index
    %c0_105 = arith.constant 0 : index
    %c0_106 = arith.constant 0 : index
    %339 = vector.load %arg18[%338, %c0_105, %c0_106] : memref<8x8x32xf32, #tpu.memory_space<vmem>>, vector<1x8x32xf32>
    %340 = vector.shape_cast %339 : vector<1x8x32xf32> to vector<8x32xf32>
    %341 = vector.shape_cast %337 : vector<8x32xf32> to vector<1x8x32xf32>
    tpu.vector_store %arg18[%338, %c0_105, %c0_106], %341 {strides = array<i32>} : memref<8x8x32xf32, #tpu.memory_space<vmem>>, vector<1x8x32xf32>,
    %c1_i32_107 = arith.constant 1 : i32
    %342 = arith.index_cast %c1_i32_107 : i32 to index
    %c0_108 = arith.constant 0 : index
    %c0_109 = arith.constant 0 : index
    %343 = vector.load %arg17[%342, %c0_108, %c0_109] : memref<8x8x128xf32, #tpu.memory_space<vmem>>, vector<1x8x128xf32>
    %344 = vector.shape_cast %343 : vector<1x8x128xf32> to vector<8x128xf32>
    %cst_110 = arith.constant dense<0.000000e+00> : vector<8x128xf32>
    %345 = tpu.matmul %337, %300, %cst_110 {dimension_numbers = #tpu.dot_dimension_numbers<[1], [0], [0], [1], [0, 0, 1, 1], [], []>} : vector<8x32xf32>, vector<32x128xf32>, vector<8x128xf32> -> vector<8x128xf32>
    %346 = arith.addf %344, %345 : vector<8x128xf32>
    %347 = vector.extract_strided_slice %346 {offsets = [0, 0], sizes = [8, 32], strides = [1, 1]} : vector<8x128xf32> to vector<8x32xf32>
    %348 = arith.negf %347 : vector<8x32xf32>
    %349 = math.exp %348 : vector<8x32xf32>
    %cst_111 = arith.constant 1.000000e+00 : f32
    %350 = vector.broadcast %cst_111 : f32 to vector<8x32xf32>
    %351 = arith.addf %350, %349 : vector<8x32xf32>
    %352 = arith.divf %350, %351 : vector<8x32xf32>
    %353 = vector.extract_strided_slice %346 {offsets = [0, 32], sizes = [8, 32], strides = [1, 1]} : vector<8x128xf32> to vector<8x32xf32>
    %354 = arith.negf %353 : vector<8x32xf32>
    %355 = math.exp %354 : vector<8x32xf32>
    %cst_112 = arith.constant 1.000000e+00 : f32
    %356 = vector.broadcast %cst_112 : f32 to vector<8x32xf32>
    %357 = arith.addf %356, %355 : vector<8x32xf32>
    %358 = arith.divf %356, %357 : vector<8x32xf32>
    %359 = vector.extract_strided_slice %346 {offsets = [0, 64], sizes = [8, 32], strides = [1, 1]} : vector<8x128xf32> to vector<8x32xf32>
    %360 = math.tanh %359 : vector<8x32xf32>
    %361 = vector.extract_strided_slice %346 {offsets = [0, 96], sizes = [8, 32], strides = [1, 1]} : vector<8x128xf32> to vector<8x32xf32>
    %362 = arith.negf %361 : vector<8x32xf32>
    %363 = math.exp %362 : vector<8x32xf32>
    %cst_113 = arith.constant 1.000000e+00 : f32
    %364 = vector.broadcast %cst_113 : f32 to vector<8x32xf32>
    %365 = arith.addf %364, %363 : vector<8x32xf32>
    %366 = arith.divf %364, %365 : vector<8x32xf32>
    %367 = arith.mulf %358, %335 : vector<8x32xf32>
    %368 = arith.mulf %352, %360 : vector<8x32xf32>
    %369 = arith.addf %367, %368 : vector<8x32xf32>
    %370 = math.tanh %369 : vector<8x32xf32>
    %371 = arith.mulf %366, %370 : vector<8x32xf32>
    %372 = arith.index_cast %c1_i32_107 : i32 to index
    %c0_114 = arith.constant 0 : index
    %c0_115 = arith.constant 0 : index
    %373 = vector.load %arg18[%372, %c0_114, %c0_115] : memref<8x8x32xf32, #tpu.memory_space<vmem>>, vector<1x8x32xf32>
    %374 = vector.shape_cast %373 : vector<1x8x32xf32> to vector<8x32xf32>
    %375 = vector.shape_cast %371 : vector<8x32xf32> to vector<1x8x32xf32>
    tpu.vector_store %arg18[%372, %c0_114, %c0_115], %375 {strides = array<i32>} : memref<8x8x32xf32, #tpu.memory_space<vmem>>, vector<1x8x32xf32>,
    %c2_i32_116 = arith.constant 2 : i32
    %376 = arith.index_cast %c2_i32_116 : i32 to index
    %c0_117 = arith.constant 0 : index
    %c0_118 = arith.constant 0 : index
    %377 = vector.load %arg17[%376, %c0_117, %c0_118] : memref<8x8x128xf32, #tpu.memory_space<vmem>>, vector<1x8x128xf32>
    %378 = vector.shape_cast %377 : vector<1x8x128xf32> to vector<8x128xf32>
    %cst_119 = arith.constant dense<0.000000e+00> : vector<8x128xf32>
    %379 = tpu.matmul %371, %300, %cst_119 {dimension_numbers = #tpu.dot_dimension_numbers<[1], [0], [0], [1], [0, 0, 1, 1], [], []>} : vector<8x32xf32>, vector<32x128xf32>, vector<8x128xf32> -> vector<8x128xf32>
    %380 = arith.addf %378, %379 : vector<8x128xf32>
    %381 = vector.extract_strided_slice %380 {offsets = [0, 0], sizes = [8, 32], strides = [1, 1]} : vector<8x128xf32> to vector<8x32xf32>
    %382 = arith.negf %381 : vector<8x32xf32>
    %383 = math.exp %382 : vector<8x32xf32>
    %cst_120 = arith.constant 1.000000e+00 : f32
    %384 = vector.broadcast %cst_120 : f32 to vector<8x32xf32>
    %385 = arith.addf %384, %383 : vector<8x32xf32>
    %386 = arith.divf %384, %385 : vector<8x32xf32>
    %387 = vector.extract_strided_slice %380 {offsets = [0, 32], sizes = [8, 32], strides = [1, 1]} : vector<8x128xf32> to vector<8x32xf32>
    %388 = arith.negf %387 : vector<8x32xf32>
    %389 = math.exp %388 : vector<8x32xf32>
    %cst_121 = arith.constant 1.000000e+00 : f32
    %390 = vector.broadcast %cst_121 : f32 to vector<8x32xf32>
    %391 = arith.addf %390, %389 : vector<8x32xf32>
    %392 = arith.divf %390, %391 : vector<8x32xf32>
    %393 = vector.extract_strided_slice %380 {offsets = [0, 64], sizes = [8, 32], strides = [1, 1]} : vector<8x128xf32> to vector<8x32xf32>
    %394 = math.tanh %393 : vector<8x32xf32>
    %395 = vector.extract_strided_slice %380 {offsets = [0, 96], sizes = [8, 32], strides = [1, 1]} : vector<8x128xf32> to vector<8x32xf32>
    %396 = arith.negf %395 : vector<8x32xf32>
    %397 = math.exp %396 : vector<8x32xf32>
    %cst_122 = arith.constant 1.000000e+00 : f32
    %398 = vector.broadcast %cst_122 : f32 to vector<8x32xf32>
    %399 = arith.addf %398, %397 : vector<8x32xf32>
    %400 = arith.divf %398, %399 : vector<8x32xf32>
    %401 = arith.mulf %392, %369 : vector<8x32xf32>
    %402 = arith.mulf %386, %394 : vector<8x32xf32>
    %403 = arith.addf %401, %402 : vector<8x32xf32>
    %404 = math.tanh %403 : vector<8x32xf32>
    %405 = arith.mulf %400, %404 : vector<8x32xf32>
    %406 = arith.index_cast %c2_i32_116 : i32 to index
    %c0_123 = arith.constant 0 : index
    %c0_124 = arith.constant 0 : index
    %407 = vector.load %arg18[%406, %c0_123, %c0_124] : memref<8x8x32xf32, #tpu.memory_space<vmem>>, vector<1x8x32xf32>
    %408 = vector.shape_cast %407 : vector<1x8x32xf32> to vector<8x32xf32>
    %409 = vector.shape_cast %405 : vector<8x32xf32> to vector<1x8x32xf32>
    tpu.vector_store %arg18[%406, %c0_123, %c0_124], %409 {strides = array<i32>} : memref<8x8x32xf32, #tpu.memory_space<vmem>>, vector<1x8x32xf32>,
    %c3_i32_125 = arith.constant 3 : i32
    %410 = arith.index_cast %c3_i32_125 : i32 to index
    %c0_126 = arith.constant 0 : index
    %c0_127 = arith.constant 0 : index
    %411 = vector.load %arg17[%410, %c0_126, %c0_127] : memref<8x8x128xf32, #tpu.memory_space<vmem>>, vector<1x8x128xf32>
    %412 = vector.shape_cast %411 : vector<1x8x128xf32> to vector<8x128xf32>
    %cst_128 = arith.constant dense<0.000000e+00> : vector<8x128xf32>
    %413 = tpu.matmul %405, %300, %cst_128 {dimension_numbers = #tpu.dot_dimension_numbers<[1], [0], [0], [1], [0, 0, 1, 1], [], []>} : vector<8x32xf32>, vector<32x128xf32>, vector<8x128xf32> -> vector<8x128xf32>
    %414 = arith.addf %412, %413 : vector<8x128xf32>
    %415 = vector.extract_strided_slice %414 {offsets = [0, 0], sizes = [8, 32], strides = [1, 1]} : vector<8x128xf32> to vector<8x32xf32>
    %416 = arith.negf %415 : vector<8x32xf32>
    %417 = math.exp %416 : vector<8x32xf32>
    %cst_129 = arith.constant 1.000000e+00 : f32
    %418 = vector.broadcast %cst_129 : f32 to vector<8x32xf32>
    %419 = arith.addf %418, %417 : vector<8x32xf32>
    %420 = arith.divf %418, %419 : vector<8x32xf32>
    %421 = vector.extract_strided_slice %414 {offsets = [0, 32], sizes = [8, 32], strides = [1, 1]} : vector<8x128xf32> to vector<8x32xf32>
    %422 = arith.negf %421 : vector<8x32xf32>
    %423 = math.exp %422 : vector<8x32xf32>
    %cst_130 = arith.constant 1.000000e+00 : f32
    %424 = vector.broadcast %cst_130 : f32 to vector<8x32xf32>
    %425 = arith.addf %424, %423 : vector<8x32xf32>
    %426 = arith.divf %424, %425 : vector<8x32xf32>
    %427 = vector.extract_strided_slice %414 {offsets = [0, 64], sizes = [8, 32], strides = [1, 1]} : vector<8x128xf32> to vector<8x32xf32>
    %428 = math.tanh %427 : vector<8x32xf32>
    %429 = vector.extract_strided_slice %414 {offsets = [0, 96], sizes = [8, 32], strides = [1, 1]} : vector<8x128xf32> to vector<8x32xf32>
    %430 = arith.negf %429 : vector<8x32xf32>
    %431 = math.exp %430 : vector<8x32xf32>
    %cst_131 = arith.constant 1.000000e+00 : f32
    %432 = vector.broadcast %cst_131 : f32 to vector<8x32xf32>
    %433 = arith.addf %432, %431 : vector<8x32xf32>
    %434 = arith.divf %432, %433 : vector<8x32xf32>
    %435 = arith.mulf %426, %403 : vector<8x32xf32>
    %436 = arith.mulf %420, %428 : vector<8x32xf32>
    %437 = arith.addf %435, %436 : vector<8x32xf32>
    %438 = math.tanh %437 : vector<8x32xf32>
    %439 = arith.mulf %434, %438 : vector<8x32xf32>
    %440 = arith.index_cast %c3_i32_125 : i32 to index
    %c0_132 = arith.constant 0 : index
    %c0_133 = arith.constant 0 : index
    %441 = vector.load %arg18[%440, %c0_132, %c0_133] : memref<8x8x32xf32, #tpu.memory_space<vmem>>, vector<1x8x32xf32>
    %442 = vector.shape_cast %441 : vector<1x8x32xf32> to vector<8x32xf32>
    %443 = vector.shape_cast %439 : vector<8x32xf32> to vector<1x8x32xf32>
    tpu.vector_store %arg18[%440, %c0_132, %c0_133], %443 {strides = array<i32>} : memref<8x8x32xf32, #tpu.memory_space<vmem>>, vector<1x8x32xf32>,
    %c4_i32_134 = arith.constant 4 : i32
    %444 = arith.index_cast %c4_i32_134 : i32 to index
    %c0_135 = arith.constant 0 : index
    %c0_136 = arith.constant 0 : index
    %445 = vector.load %arg17[%444, %c0_135, %c0_136] : memref<8x8x128xf32, #tpu.memory_space<vmem>>, vector<1x8x128xf32>
    %446 = vector.shape_cast %445 : vector<1x8x128xf32> to vector<8x128xf32>
    %cst_137 = arith.constant dense<0.000000e+00> : vector<8x128xf32>
    %447 = tpu.matmul %439, %300, %cst_137 {dimension_numbers = #tpu.dot_dimension_numbers<[1], [0], [0], [1], [0, 0, 1, 1], [], []>} : vector<8x32xf32>, vector<32x128xf32>, vector<8x128xf32> -> vector<8x128xf32>
    %448 = arith.addf %446, %447 : vector<8x128xf32>
    %449 = vector.extract_strided_slice %448 {offsets = [0, 0], sizes = [8, 32], strides = [1, 1]} : vector<8x128xf32> to vector<8x32xf32>
    %450 = arith.negf %449 : vector<8x32xf32>
    %451 = math.exp %450 : vector<8x32xf32>
    %cst_138 = arith.constant 1.000000e+00 : f32
    %452 = vector.broadcast %cst_138 : f32 to vector<8x32xf32>
    %453 = arith.addf %452, %451 : vector<8x32xf32>
    %454 = arith.divf %452, %453 : vector<8x32xf32>
    %455 = vector.extract_strided_slice %448 {offsets = [0, 32], sizes = [8, 32], strides = [1, 1]} : vector<8x128xf32> to vector<8x32xf32>
    %456 = arith.negf %455 : vector<8x32xf32>
    %457 = math.exp %456 : vector<8x32xf32>
    %cst_139 = arith.constant 1.000000e+00 : f32
    %458 = vector.broadcast %cst_139 : f32 to vector<8x32xf32>
    %459 = arith.addf %458, %457 : vector<8x32xf32>
    %460 = arith.divf %458, %459 : vector<8x32xf32>
    %461 = vector.extract_strided_slice %448 {offsets = [0, 64], sizes = [8, 32], strides = [1, 1]} : vector<8x128xf32> to vector<8x32xf32>
    %462 = math.tanh %461 : vector<8x32xf32>
    %463 = vector.extract_strided_slice %448 {offsets = [0, 96], sizes = [8, 32], strides = [1, 1]} : vector<8x128xf32> to vector<8x32xf32>
    %464 = arith.negf %463 : vector<8x32xf32>
    %465 = math.exp %464 : vector<8x32xf32>
    %cst_140 = arith.constant 1.000000e+00 : f32
    %466 = vector.broadcast %cst_140 : f32 to vector<8x32xf32>
    %467 = arith.addf %466, %465 : vector<8x32xf32>
    %468 = arith.divf %466, %467 : vector<8x32xf32>
    %469 = arith.mulf %460, %437 : vector<8x32xf32>
    %470 = arith.mulf %454, %462 : vector<8x32xf32>
    %471 = arith.addf %469, %470 : vector<8x32xf32>
    %472 = math.tanh %471 : vector<8x32xf32>
    %473 = arith.mulf %468, %472 : vector<8x32xf32>
    %474 = arith.index_cast %c4_i32_134 : i32 to index
    %c0_141 = arith.constant 0 : index
    %c0_142 = arith.constant 0 : index
    %475 = vector.load %arg18[%474, %c0_141, %c0_142] : memref<8x8x32xf32, #tpu.memory_space<vmem>>, vector<1x8x32xf32>
    %476 = vector.shape_cast %475 : vector<1x8x32xf32> to vector<8x32xf32>
    %477 = vector.shape_cast %473 : vector<8x32xf32> to vector<1x8x32xf32>
    tpu.vector_store %arg18[%474, %c0_141, %c0_142], %477 {strides = array<i32>} : memref<8x8x32xf32, #tpu.memory_space<vmem>>, vector<1x8x32xf32>,
    %c5_i32_143 = arith.constant 5 : i32
    %478 = arith.index_cast %c5_i32_143 : i32 to index
    %c0_144 = arith.constant 0 : index
    %c0_145 = arith.constant 0 : index
    %479 = vector.load %arg17[%478, %c0_144, %c0_145] : memref<8x8x128xf32, #tpu.memory_space<vmem>>, vector<1x8x128xf32>
    %480 = vector.shape_cast %479 : vector<1x8x128xf32> to vector<8x128xf32>
    %cst_146 = arith.constant dense<0.000000e+00> : vector<8x128xf32>
    %481 = tpu.matmul %473, %300, %cst_146 {dimension_numbers = #tpu.dot_dimension_numbers<[1], [0], [0], [1], [0, 0, 1, 1], [], []>} : vector<8x32xf32>, vector<32x128xf32>, vector<8x128xf32> -> vector<8x128xf32>
    %482 = arith.addf %480, %481 : vector<8x128xf32>
    %483 = vector.extract_strided_slice %482 {offsets = [0, 0], sizes = [8, 32], strides = [1, 1]} : vector<8x128xf32> to vector<8x32xf32>
    %484 = arith.negf %483 : vector<8x32xf32>
    %485 = math.exp %484 : vector<8x32xf32>
    %cst_147 = arith.constant 1.000000e+00 : f32
    %486 = vector.broadcast %cst_147 : f32 to vector<8x32xf32>
    %487 = arith.addf %486, %485 : vector<8x32xf32>
    %488 = arith.divf %486, %487 : vector<8x32xf32>
    %489 = vector.extract_strided_slice %482 {offsets = [0, 32], sizes = [8, 32], strides = [1, 1]} : vector<8x128xf32> to vector<8x32xf32>
    %490 = arith.negf %489 : vector<8x32xf32>
    %491 = math.exp %490 : vector<8x32xf32>
    %cst_148 = arith.constant 1.000000e+00 : f32
    %492 = vector.broadcast %cst_148 : f32 to vector<8x32xf32>
    %493 = arith.addf %492, %491 : vector<8x32xf32>
    %494 = arith.divf %492, %493 : vector<8x32xf32>
    %495 = vector.extract_strided_slice %482 {offsets = [0, 64], sizes = [8, 32], strides = [1, 1]} : vector<8x128xf32> to vector<8x32xf32>
    %496 = math.tanh %495 : vector<8x32xf32>
    %497 = vector.extract_strided_slice %482 {offsets = [0, 96], sizes = [8, 32], strides = [1, 1]} : vector<8x128xf32> to vector<8x32xf32>
    %498 = arith.negf %497 : vector<8x32xf32>
    %499 = math.exp %498 : vector<8x32xf32>
    %cst_149 = arith.constant 1.000000e+00 : f32
    %500 = vector.broadcast %cst_149 : f32 to vector<8x32xf32>
    %501 = arith.addf %500, %499 : vector<8x32xf32>
    %502 = arith.divf %500, %501 : vector<8x32xf32>
    %503 = arith.mulf %494, %471 : vector<8x32xf32>
    %504 = arith.mulf %488, %496 : vector<8x32xf32>
    %505 = arith.addf %503, %504 : vector<8x32xf32>
    %506 = math.tanh %505 : vector<8x32xf32>
    %507 = arith.mulf %502, %506 : vector<8x32xf32>
    %508 = arith.index_cast %c5_i32_143 : i32 to index
    %c0_150 = arith.constant 0 : index
    %c0_151 = arith.constant 0 : index
    %509 = vector.load %arg18[%508, %c0_150, %c0_151] : memref<8x8x32xf32, #tpu.memory_space<vmem>>, vector<1x8x32xf32>
    %510 = vector.shape_cast %509 : vector<1x8x32xf32> to vector<8x32xf32>
    %511 = vector.shape_cast %507 : vector<8x32xf32> to vector<1x8x32xf32>
    tpu.vector_store %arg18[%508, %c0_150, %c0_151], %511 {strides = array<i32>} : memref<8x8x32xf32, #tpu.memory_space<vmem>>, vector<1x8x32xf32>,
    %c6_i32_152 = arith.constant 6 : i32
    %512 = arith.index_cast %c6_i32_152 : i32 to index
    %c0_153 = arith.constant 0 : index
    %c0_154 = arith.constant 0 : index
    %513 = vector.load %arg17[%512, %c0_153, %c0_154] : memref<8x8x128xf32, #tpu.memory_space<vmem>>, vector<1x8x128xf32>
    %514 = vector.shape_cast %513 : vector<1x8x128xf32> to vector<8x128xf32>
    %cst_155 = arith.constant dense<0.000000e+00> : vector<8x128xf32>
    %515 = tpu.matmul %507, %300, %cst_155 {dimension_numbers = #tpu.dot_dimension_numbers<[1], [0], [0], [1], [0, 0, 1, 1], [], []>} : vector<8x32xf32>, vector<32x128xf32>, vector<8x128xf32> -> vector<8x128xf32>
    %516 = arith.addf %514, %515 : vector<8x128xf32>
    %517 = vector.extract_strided_slice %516 {offsets = [0, 0], sizes = [8, 32], strides = [1, 1]} : vector<8x128xf32> to vector<8x32xf32>
    %518 = arith.negf %517 : vector<8x32xf32>
    %519 = math.exp %518 : vector<8x32xf32>
    %cst_156 = arith.constant 1.000000e+00 : f32
    %520 = vector.broadcast %cst_156 : f32 to vector<8x32xf32>
    %521 = arith.addf %520, %519 : vector<8x32xf32>
    %522 = arith.divf %520, %521 : vector<8x32xf32>
    %523 = vector.extract_strided_slice %516 {offsets = [0, 32], sizes = [8, 32], strides = [1, 1]} : vector<8x128xf32> to vector<8x32xf32>
    %524 = arith.negf %523 : vector<8x32xf32>
    %525 = math.exp %524 : vector<8x32xf32>
    %cst_157 = arith.constant 1.000000e+00 : f32
    %526 = vector.broadcast %cst_157 : f32 to vector<8x32xf32>
    %527 = arith.addf %526, %525 : vector<8x32xf32>
    %528 = arith.divf %526, %527 : vector<8x32xf32>
    %529 = vector.extract_strided_slice %516 {offsets = [0, 64], sizes = [8, 32], strides = [1, 1]} : vector<8x128xf32> to vector<8x32xf32>
    %530 = math.tanh %529 : vector<8x32xf32>
    %531 = vector.extract_strided_slice %516 {offsets = [0, 96], sizes = [8, 32], strides = [1, 1]} : vector<8x128xf32> to vector<8x32xf32>
    %532 = arith.negf %531 : vector<8x32xf32>
    %533 = math.exp %532 : vector<8x32xf32>
    %cst_158 = arith.constant 1.000000e+00 : f32
    %534 = vector.broadcast %cst_158 : f32 to vector<8x32xf32>
    %535 = arith.addf %534, %533 : vector<8x32xf32>
    %536 = arith.divf %534, %535 : vector<8x32xf32>
    %537 = arith.mulf %528, %505 : vector<8x32xf32>
    %538 = arith.mulf %522, %530 : vector<8x32xf32>
    %539 = arith.addf %537, %538 : vector<8x32xf32>
    %540 = math.tanh %539 : vector<8x32xf32>
    %541 = arith.mulf %536, %540 : vector<8x32xf32>
    %542 = arith.index_cast %c6_i32_152 : i32 to index
    %c0_159 = arith.constant 0 : index
    %c0_160 = arith.constant 0 : index
    %543 = vector.load %arg18[%542, %c0_159, %c0_160] : memref<8x8x32xf32, #tpu.memory_space<vmem>>, vector<1x8x32xf32>
    %544 = vector.shape_cast %543 : vector<1x8x32xf32> to vector<8x32xf32>
    %545 = vector.shape_cast %541 : vector<8x32xf32> to vector<1x8x32xf32>
    tpu.vector_store %arg18[%542, %c0_159, %c0_160], %545 {strides = array<i32>} : memref<8x8x32xf32, #tpu.memory_space<vmem>>, vector<1x8x32xf32>,
    %c7_i32_161 = arith.constant 7 : i32
    %546 = arith.index_cast %c7_i32_161 : i32 to index
    %c0_162 = arith.constant 0 : index
    %c0_163 = arith.constant 0 : index
    %547 = vector.load %arg17[%546, %c0_162, %c0_163] : memref<8x8x128xf32, #tpu.memory_space<vmem>>, vector<1x8x128xf32>
    %548 = vector.shape_cast %547 : vector<1x8x128xf32> to vector<8x128xf32>
    %cst_164 = arith.constant dense<0.000000e+00> : vector<8x128xf32>
    %549 = tpu.matmul %541, %300, %cst_164 {dimension_numbers = #tpu.dot_dimension_numbers<[1], [0], [0], [1], [0, 0, 1, 1], [], []>} : vector<8x32xf32>, vector<32x128xf32>, vector<8x128xf32> -> vector<8x128xf32>
    %550 = arith.addf %548, %549 : vector<8x128xf32>
    %551 = vector.extract_strided_slice %550 {offsets = [0, 0], sizes = [8, 32], strides = [1, 1]} : vector<8x128xf32> to vector<8x32xf32>
    %552 = arith.negf %551 : vector<8x32xf32>
    %553 = math.exp %552 : vector<8x32xf32>
    %cst_165 = arith.constant 1.000000e+00 : f32
    %554 = vector.broadcast %cst_165 : f32 to vector<8x32xf32>
    %555 = arith.addf %554, %553 : vector<8x32xf32>
    %556 = arith.divf %554, %555 : vector<8x32xf32>
    %557 = vector.extract_strided_slice %550 {offsets = [0, 32], sizes = [8, 32], strides = [1, 1]} : vector<8x128xf32> to vector<8x32xf32>
    %558 = arith.negf %557 : vector<8x32xf32>
    %559 = math.exp %558 : vector<8x32xf32>
    %cst_166 = arith.constant 1.000000e+00 : f32
    %560 = vector.broadcast %cst_166 : f32 to vector<8x32xf32>
    %561 = arith.addf %560, %559 : vector<8x32xf32>
    %562 = arith.divf %560, %561 : vector<8x32xf32>
    %563 = vector.extract_strided_slice %550 {offsets = [0, 64], sizes = [8, 32], strides = [1, 1]} : vector<8x128xf32> to vector<8x32xf32>
    %564 = math.tanh %563 : vector<8x32xf32>
    %565 = vector.extract_strided_slice %550 {offsets = [0, 96], sizes = [8, 32], strides = [1, 1]} : vector<8x128xf32> to vector<8x32xf32>
    %566 = arith.negf %565 : vector<8x32xf32>
    %567 = math.exp %566 : vector<8x32xf32>
    %cst_167 = arith.constant 1.000000e+00 : f32
    %568 = vector.broadcast %cst_167 : f32 to vector<8x32xf32>
    %569 = arith.addf %568, %567 : vector<8x32xf32>
    %570 = arith.divf %568, %569 : vector<8x32xf32>
    %571 = arith.mulf %562, %539 : vector<8x32xf32>
    %572 = arith.mulf %556, %564 : vector<8x32xf32>
    %573 = arith.addf %571, %572 : vector<8x32xf32>
    %574 = math.tanh %573 : vector<8x32xf32>
    %575 = arith.mulf %570, %574 : vector<8x32xf32>
    %576 = arith.index_cast %c7_i32_161 : i32 to index
    %c0_168 = arith.constant 0 : index
    %c0_169 = arith.constant 0 : index
    %577 = vector.load %arg18[%576, %c0_168, %c0_169] : memref<8x8x32xf32, #tpu.memory_space<vmem>>, vector<1x8x32xf32>
    %578 = vector.shape_cast %577 : vector<1x8x32xf32> to vector<8x32xf32>
    %579 = vector.shape_cast %575 : vector<8x32xf32> to vector<1x8x32xf32>
    tpu.vector_store %arg18[%576, %c0_168, %c0_169], %579 {strides = array<i32>} : memref<8x8x32xf32, #tpu.memory_space<vmem>>, vector<1x8x32xf32>,
    %c8_i32_170 = arith.constant 8 : i32
    %580 = vector.extract_strided_slice %575 {offsets = [0, 0], sizes = [2, 32], strides = [1, 1]} : vector<8x32xf32> to vector<2x32xf32>
    %c1 = arith.constant 1 : index
    %c0_171 = arith.constant 0 : index
    %c0_172 = arith.constant 0 : index
    %581 = vector.load %arg15[%c1, %c0_171, %c0_172] : memref<4x2x32xf32, #tpu.memory_space<vmem>>, vector<1x2x32xf32>
    %582 = vector.shape_cast %581 : vector<1x2x32xf32> to vector<2x32xf32>
    %583 = vector.shape_cast %580 : vector<2x32xf32> to vector<1x2x32xf32>
    tpu.vector_store %arg15[%c1, %c0_171, %c0_172], %583 {strides = array<i32>} : memref<4x2x32xf32, #tpu.memory_space<vmem>>, vector<1x2x32xf32>,
    %584 = vector.extract_strided_slice %573 {offsets = [0, 0], sizes = [2, 32], strides = [1, 1]} : vector<8x32xf32> to vector<2x32xf32>
    %c1_173 = arith.constant 1 : index
    %c0_174 = arith.constant 0 : index
    %c0_175 = arith.constant 0 : index
    %585 = vector.load %arg16[%c1_173, %c0_174, %c0_175] : memref<4x2x32xf32, #tpu.memory_space<vmem>>, vector<1x2x32xf32>
    %586 = vector.shape_cast %585 : vector<1x2x32xf32> to vector<2x32xf32>
    %587 = vector.shape_cast %584 : vector<2x32xf32> to vector<1x2x32xf32>
    tpu.vector_store %arg16[%c1_173, %c0_174, %c0_175], %587 {strides = array<i32>} : memref<4x2x32xf32, #tpu.memory_space<vmem>>, vector<1x2x32xf32>,
    %c0_176 = arith.constant 0 : index
    %c0_177 = arith.constant 0 : index
    %c0_178 = arith.constant 0 : index
    %588 = vector.load %arg18[%c0_176, %c0_177, %c0_178] : memref<8x8x32xf32, #tpu.memory_space<vmem>>, vector<8x8x32xf32>
    %589 = vector.shape_cast %588 : vector<8x8x32xf32> to vector<64x32xf32>
    %c0_179 = arith.constant 0 : index
    %c0_180 = arith.constant 0 : index
    %590 = vector.load %arg8[%c0_179, %c0_180] : memref<32x128xf32, #tpu.memory_space<vmem>>, vector<32x128xf32>
    %c0_181 = arith.constant 0 : index
    %c0_182 = arith.constant 0 : index
    %591 = vector.load %arg9[%c0_181, %c0_182] : memref<32x128xf32, #tpu.memory_space<vmem>>, vector<32x128xf32>
    %c0_183 = arith.constant 0 : index
    %c0_184 = arith.constant 0 : index
    %592 = vector.load %arg10[%c0_183, %c0_184] : memref<1x128xf32, #tpu.memory_space<vmem>>, vector<1x128xf32>
    %cst_185 = arith.constant dense<0.000000e+00> : vector<64x128xf32>
    %593 = tpu.matmul %589, %590, %cst_185 {dimension_numbers = #tpu.dot_dimension_numbers<[1], [0], [0], [1], [0, 0, 1, 1], [], []>} : vector<64x32xf32>, vector<32x128xf32>, vector<64x128xf32> -> vector<64x128xf32>
    %594 = vector.broadcast %592 : vector<1x128xf32> to vector<64x128xf32>
    %595 = arith.addf %593, %594 : vector<64x128xf32>
    %596 = vector.shape_cast %595 : vector<64x128xf32> to vector<8x8x128xf32>
    %c0_186 = arith.constant 0 : index
    %c0_187 = arith.constant 0 : index
    %c0_188 = arith.constant 0 : index
    %597 = vector.load %arg17[%c0_186, %c0_187, %c0_188] : memref<8x8x128xf32, #tpu.memory_space<vmem>>, vector<8x8x128xf32>
    tpu.vector_store %arg17[%c0_186, %c0_187, %c0_188], %596 {strides = array<i32>} : memref<8x8x128xf32, #tpu.memory_space<vmem>>, vector<8x8x128xf32>,
    %cst_189 = arith.constant 0.000000e+00 : f32
    %598 = vector.broadcast %cst_189 : f32 to vector<8x32xf32>
    %c0_i32_190 = arith.constant 0 : i32
    %599 = arith.index_cast %c0_i32_190 : i32 to index
    %c0_191 = arith.constant 0 : index
    %c0_192 = arith.constant 0 : index
    %600 = vector.load %arg17[%599, %c0_191, %c0_192] : memref<8x8x128xf32, #tpu.memory_space<vmem>>, vector<1x8x128xf32>
    %601 = vector.shape_cast %600 : vector<1x8x128xf32> to vector<8x128xf32>
    %cst_193 = arith.constant dense<0.000000e+00> : vector<8x128xf32>
    %602 = tpu.matmul %598, %591, %cst_193 {dimension_numbers = #tpu.dot_dimension_numbers<[1], [0], [0], [1], [0, 0, 1, 1], [], []>} : vector<8x32xf32>, vector<32x128xf32>, vector<8x128xf32> -> vector<8x128xf32>
    %603 = arith.addf %601, %602 : vector<8x128xf32>
    %604 = vector.extract_strided_slice %603 {offsets = [0, 0], sizes = [8, 32], strides = [1, 1]} : vector<8x128xf32> to vector<8x32xf32>
    %605 = arith.negf %604 : vector<8x32xf32>
    %606 = math.exp %605 : vector<8x32xf32>
    %cst_194 = arith.constant 1.000000e+00 : f32
    %607 = vector.broadcast %cst_194 : f32 to vector<8x32xf32>
    %608 = arith.addf %607, %606 : vector<8x32xf32>
    %609 = arith.divf %607, %608 : vector<8x32xf32>
    %610 = vector.extract_strided_slice %603 {offsets = [0, 32], sizes = [8, 32], strides = [1, 1]} : vector<8x128xf32> to vector<8x32xf32>
    %611 = arith.negf %610 : vector<8x32xf32>
    %612 = math.exp %611 : vector<8x32xf32>
    %cst_195 = arith.constant 1.000000e+00 : f32
    %613 = vector.broadcast %cst_195 : f32 to vector<8x32xf32>
    %614 = arith.addf %613, %612 : vector<8x32xf32>
    %615 = arith.divf %613, %614 : vector<8x32xf32>
    %616 = vector.extract_strided_slice %603 {offsets = [0, 64], sizes = [8, 32], strides = [1, 1]} : vector<8x128xf32> to vector<8x32xf32>
    %617 = math.tanh %616 : vector<8x32xf32>
    %618 = vector.extract_strided_slice %603 {offsets = [0, 96], sizes = [8, 32], strides = [1, 1]} : vector<8x128xf32> to vector<8x32xf32>
    %619 = arith.negf %618 : vector<8x32xf32>
    %620 = math.exp %619 : vector<8x32xf32>
    %cst_196 = arith.constant 1.000000e+00 : f32
    %621 = vector.broadcast %cst_196 : f32 to vector<8x32xf32>
    %622 = arith.addf %621, %620 : vector<8x32xf32>
    %623 = arith.divf %621, %622 : vector<8x32xf32>
    %624 = arith.mulf %615, %598 : vector<8x32xf32>
    %625 = arith.mulf %609, %617 : vector<8x32xf32>
    %626 = arith.addf %624, %625 : vector<8x32xf32>
    %627 = math.tanh %626 : vector<8x32xf32>
    %628 = arith.mulf %623, %627 : vector<8x32xf32>
    %629 = arith.index_cast %c0_i32_190 : i32 to index
    %c0_197 = arith.constant 0 : index
    %c0_198 = arith.constant 0 : index
    %630 = vector.load %arg18[%629, %c0_197, %c0_198] : memref<8x8x32xf32, #tpu.memory_space<vmem>>, vector<1x8x32xf32>
    %631 = vector.shape_cast %630 : vector<1x8x32xf32> to vector<8x32xf32>
    %632 = vector.shape_cast %628 : vector<8x32xf32> to vector<1x8x32xf32>
    tpu.vector_store %arg18[%629, %c0_197, %c0_198], %632 {strides = array<i32>} : memref<8x8x32xf32, #tpu.memory_space<vmem>>, vector<1x8x32xf32>,
    %c1_i32_199 = arith.constant 1 : i32
    %633 = arith.index_cast %c1_i32_199 : i32 to index
    %c0_200 = arith.constant 0 : index
    %c0_201 = arith.constant 0 : index
    %634 = vector.load %arg17[%633, %c0_200, %c0_201] : memref<8x8x128xf32, #tpu.memory_space<vmem>>, vector<1x8x128xf32>
    %635 = vector.shape_cast %634 : vector<1x8x128xf32> to vector<8x128xf32>
    %cst_202 = arith.constant dense<0.000000e+00> : vector<8x128xf32>
    %636 = tpu.matmul %628, %591, %cst_202 {dimension_numbers = #tpu.dot_dimension_numbers<[1], [0], [0], [1], [0, 0, 1, 1], [], []>} : vector<8x32xf32>, vector<32x128xf32>, vector<8x128xf32> -> vector<8x128xf32>
    %637 = arith.addf %635, %636 : vector<8x128xf32>
    %638 = vector.extract_strided_slice %637 {offsets = [0, 0], sizes = [8, 32], strides = [1, 1]} : vector<8x128xf32> to vector<8x32xf32>
    %639 = arith.negf %638 : vector<8x32xf32>
    %640 = math.exp %639 : vector<8x32xf32>
    %cst_203 = arith.constant 1.000000e+00 : f32
    %641 = vector.broadcast %cst_203 : f32 to vector<8x32xf32>
    %642 = arith.addf %641, %640 : vector<8x32xf32>
    %643 = arith.divf %641, %642 : vector<8x32xf32>
    %644 = vector.extract_strided_slice %637 {offsets = [0, 32], sizes = [8, 32], strides = [1, 1]} : vector<8x128xf32> to vector<8x32xf32>
    %645 = arith.negf %644 : vector<8x32xf32>
    %646 = math.exp %645 : vector<8x32xf32>
    %cst_204 = arith.constant 1.000000e+00 : f32
    %647 = vector.broadcast %cst_204 : f32 to vector<8x32xf32>
    %648 = arith.addf %647, %646 : vector<8x32xf32>
    %649 = arith.divf %647, %648 : vector<8x32xf32>
    %650 = vector.extract_strided_slice %637 {offsets = [0, 64], sizes = [8, 32], strides = [1, 1]} : vector<8x128xf32> to vector<8x32xf32>
    %651 = math.tanh %650 : vector<8x32xf32>
    %652 = vector.extract_strided_slice %637 {offsets = [0, 96], sizes = [8, 32], strides = [1, 1]} : vector<8x128xf32> to vector<8x32xf32>
    %653 = arith.negf %652 : vector<8x32xf32>
    %654 = math.exp %653 : vector<8x32xf32>
    %cst_205 = arith.constant 1.000000e+00 : f32
    %655 = vector.broadcast %cst_205 : f32 to vector<8x32xf32>
    %656 = arith.addf %655, %654 : vector<8x32xf32>
    %657 = arith.divf %655, %656 : vector<8x32xf32>
    %658 = arith.mulf %649, %626 : vector<8x32xf32>
    %659 = arith.mulf %643, %651 : vector<8x32xf32>
    %660 = arith.addf %658, %659 : vector<8x32xf32>
    %661 = math.tanh %660 : vector<8x32xf32>
    %662 = arith.mulf %657, %661 : vector<8x32xf32>
    %663 = arith.index_cast %c1_i32_199 : i32 to index
    %c0_206 = arith.constant 0 : index
    %c0_207 = arith.constant 0 : index
    %664 = vector.load %arg18[%663, %c0_206, %c0_207] : memref<8x8x32xf32, #tpu.memory_space<vmem>>, vector<1x8x32xf32>
    %665 = vector.shape_cast %664 : vector<1x8x32xf32> to vector<8x32xf32>
    %666 = vector.shape_cast %662 : vector<8x32xf32> to vector<1x8x32xf32>
    tpu.vector_store %arg18[%663, %c0_206, %c0_207], %666 {strides = array<i32>} : memref<8x8x32xf32, #tpu.memory_space<vmem>>, vector<1x8x32xf32>,
    %c2_i32_208 = arith.constant 2 : i32
    %667 = arith.index_cast %c2_i32_208 : i32 to index
    %c0_209 = arith.constant 0 : index
    %c0_210 = arith.constant 0 : index
    %668 = vector.load %arg17[%667, %c0_209, %c0_210] : memref<8x8x128xf32, #tpu.memory_space<vmem>>, vector<1x8x128xf32>
    %669 = vector.shape_cast %668 : vector<1x8x128xf32> to vector<8x128xf32>
    %cst_211 = arith.constant dense<0.000000e+00> : vector<8x128xf32>
    %670 = tpu.matmul %662, %591, %cst_211 {dimension_numbers = #tpu.dot_dimension_numbers<[1], [0], [0], [1], [0, 0, 1, 1], [], []>} : vector<8x32xf32>, vector<32x128xf32>, vector<8x128xf32> -> vector<8x128xf32>
    %671 = arith.addf %669, %670 : vector<8x128xf32>
    %672 = vector.extract_strided_slice %671 {offsets = [0, 0], sizes = [8, 32], strides = [1, 1]} : vector<8x128xf32> to vector<8x32xf32>
    %673 = arith.negf %672 : vector<8x32xf32>
    %674 = math.exp %673 : vector<8x32xf32>
    %cst_212 = arith.constant 1.000000e+00 : f32
    %675 = vector.broadcast %cst_212 : f32 to vector<8x32xf32>
    %676 = arith.addf %675, %674 : vector<8x32xf32>
    %677 = arith.divf %675, %676 : vector<8x32xf32>
    %678 = vector.extract_strided_slice %671 {offsets = [0, 32], sizes = [8, 32], strides = [1, 1]} : vector<8x128xf32> to vector<8x32xf32>
    %679 = arith.negf %678 : vector<8x32xf32>
    %680 = math.exp %679 : vector<8x32xf32>
    %cst_213 = arith.constant 1.000000e+00 : f32
    %681 = vector.broadcast %cst_213 : f32 to vector<8x32xf32>
    %682 = arith.addf %681, %680 : vector<8x32xf32>
    %683 = arith.divf %681, %682 : vector<8x32xf32>
    %684 = vector.extract_strided_slice %671 {offsets = [0, 64], sizes = [8, 32], strides = [1, 1]} : vector<8x128xf32> to vector<8x32xf32>
    %685 = math.tanh %684 : vector<8x32xf32>
    %686 = vector.extract_strided_slice %671 {offsets = [0, 96], sizes = [8, 32], strides = [1, 1]} : vector<8x128xf32> to vector<8x32xf32>
    %687 = arith.negf %686 : vector<8x32xf32>
    %688 = math.exp %687 : vector<8x32xf32>
    %cst_214 = arith.constant 1.000000e+00 : f32
    %689 = vector.broadcast %cst_214 : f32 to vector<8x32xf32>
    %690 = arith.addf %689, %688 : vector<8x32xf32>
    %691 = arith.divf %689, %690 : vector<8x32xf32>
    %692 = arith.mulf %683, %660 : vector<8x32xf32>
    %693 = arith.mulf %677, %685 : vector<8x32xf32>
    %694 = arith.addf %692, %693 : vector<8x32xf32>
    %695 = math.tanh %694 : vector<8x32xf32>
    %696 = arith.mulf %691, %695 : vector<8x32xf32>
    %697 = arith.index_cast %c2_i32_208 : i32 to index
    %c0_215 = arith.constant 0 : index
    %c0_216 = arith.constant 0 : index
    %698 = vector.load %arg18[%697, %c0_215, %c0_216] : memref<8x8x32xf32, #tpu.memory_space<vmem>>, vector<1x8x32xf32>
    %699 = vector.shape_cast %698 : vector<1x8x32xf32> to vector<8x32xf32>
    %700 = vector.shape_cast %696 : vector<8x32xf32> to vector<1x8x32xf32>
    tpu.vector_store %arg18[%697, %c0_215, %c0_216], %700 {strides = array<i32>} : memref<8x8x32xf32, #tpu.memory_space<vmem>>, vector<1x8x32xf32>,
    %c3_i32_217 = arith.constant 3 : i32
    %701 = arith.index_cast %c3_i32_217 : i32 to index
    %c0_218 = arith.constant 0 : index
    %c0_219 = arith.constant 0 : index
    %702 = vector.load %arg17[%701, %c0_218, %c0_219] : memref<8x8x128xf32, #tpu.memory_space<vmem>>, vector<1x8x128xf32>
    %703 = vector.shape_cast %702 : vector<1x8x128xf32> to vector<8x128xf32>
    %cst_220 = arith.constant dense<0.000000e+00> : vector<8x128xf32>
    %704 = tpu.matmul %696, %591, %cst_220 {dimension_numbers = #tpu.dot_dimension_numbers<[1], [0], [0], [1], [0, 0, 1, 1], [], []>} : vector<8x32xf32>, vector<32x128xf32>, vector<8x128xf32> -> vector<8x128xf32>
    %705 = arith.addf %703, %704 : vector<8x128xf32>
    %706 = vector.extract_strided_slice %705 {offsets = [0, 0], sizes = [8, 32], strides = [1, 1]} : vector<8x128xf32> to vector<8x32xf32>
    %707 = arith.negf %706 : vector<8x32xf32>
    %708 = math.exp %707 : vector<8x32xf32>
    %cst_221 = arith.constant 1.000000e+00 : f32
    %709 = vector.broadcast %cst_221 : f32 to vector<8x32xf32>
    %710 = arith.addf %709, %708 : vector<8x32xf32>
    %711 = arith.divf %709, %710 : vector<8x32xf32>
    %712 = vector.extract_strided_slice %705 {offsets = [0, 32], sizes = [8, 32], strides = [1, 1]} : vector<8x128xf32> to vector<8x32xf32>
    %713 = arith.negf %712 : vector<8x32xf32>
    %714 = math.exp %713 : vector<8x32xf32>
    %cst_222 = arith.constant 1.000000e+00 : f32
    %715 = vector.broadcast %cst_222 : f32 to vector<8x32xf32>
    %716 = arith.addf %715, %714 : vector<8x32xf32>
    %717 = arith.divf %715, %716 : vector<8x32xf32>
    %718 = vector.extract_strided_slice %705 {offsets = [0, 64], sizes = [8, 32], strides = [1, 1]} : vector<8x128xf32> to vector<8x32xf32>
    %719 = math.tanh %718 : vector<8x32xf32>
    %720 = vector.extract_strided_slice %705 {offsets = [0, 96], sizes = [8, 32], strides = [1, 1]} : vector<8x128xf32> to vector<8x32xf32>
    %721 = arith.negf %720 : vector<8x32xf32>
    %722 = math.exp %721 : vector<8x32xf32>
    %cst_223 = arith.constant 1.000000e+00 : f32
    %723 = vector.broadcast %cst_223 : f32 to vector<8x32xf32>
    %724 = arith.addf %723, %722 : vector<8x32xf32>
    %725 = arith.divf %723, %724 : vector<8x32xf32>
    %726 = arith.mulf %717, %694 : vector<8x32xf32>
    %727 = arith.mulf %711, %719 : vector<8x32xf32>
    %728 = arith.addf %726, %727 : vector<8x32xf32>
    %729 = math.tanh %728 : vector<8x32xf32>
    %730 = arith.mulf %725, %729 : vector<8x32xf32>
    %731 = arith.index_cast %c3_i32_217 : i32 to index
    %c0_224 = arith.constant 0 : index
    %c0_225 = arith.constant 0 : index
    %732 = vector.load %arg18[%731, %c0_224, %c0_225] : memref<8x8x32xf32, #tpu.memory_space<vmem>>, vector<1x8x32xf32>
    %733 = vector.shape_cast %732 : vector<1x8x32xf32> to vector<8x32xf32>
    %734 = vector.shape_cast %730 : vector<8x32xf32> to vector<1x8x32xf32>
    tpu.vector_store %arg18[%731, %c0_224, %c0_225], %734 {strides = array<i32>} : memref<8x8x32xf32, #tpu.memory_space<vmem>>, vector<1x8x32xf32>,
    %c4_i32_226 = arith.constant 4 : i32
    %735 = arith.index_cast %c4_i32_226 : i32 to index
    %c0_227 = arith.constant 0 : index
    %c0_228 = arith.constant 0 : index
    %736 = vector.load %arg17[%735, %c0_227, %c0_228] : memref<8x8x128xf32, #tpu.memory_space<vmem>>, vector<1x8x128xf32>
    %737 = vector.shape_cast %736 : vector<1x8x128xf32> to vector<8x128xf32>
    %cst_229 = arith.constant dense<0.000000e+00> : vector<8x128xf32>
    %738 = tpu.matmul %730, %591, %cst_229 {dimension_numbers = #tpu.dot_dimension_numbers<[1], [0], [0], [1], [0, 0, 1, 1], [], []>} : vector<8x32xf32>, vector<32x128xf32>, vector<8x128xf32> -> vector<8x128xf32>
    %739 = arith.addf %737, %738 : vector<8x128xf32>
    %740 = vector.extract_strided_slice %739 {offsets = [0, 0], sizes = [8, 32], strides = [1, 1]} : vector<8x128xf32> to vector<8x32xf32>
    %741 = arith.negf %740 : vector<8x32xf32>
    %742 = math.exp %741 : vector<8x32xf32>
    %cst_230 = arith.constant 1.000000e+00 : f32
    %743 = vector.broadcast %cst_230 : f32 to vector<8x32xf32>
    %744 = arith.addf %743, %742 : vector<8x32xf32>
    %745 = arith.divf %743, %744 : vector<8x32xf32>
    %746 = vector.extract_strided_slice %739 {offsets = [0, 32], sizes = [8, 32], strides = [1, 1]} : vector<8x128xf32> to vector<8x32xf32>
    %747 = arith.negf %746 : vector<8x32xf32>
    %748 = math.exp %747 : vector<8x32xf32>
    %cst_231 = arith.constant 1.000000e+00 : f32
    %749 = vector.broadcast %cst_231 : f32 to vector<8x32xf32>
    %750 = arith.addf %749, %748 : vector<8x32xf32>
    %751 = arith.divf %749, %750 : vector<8x32xf32>
    %752 = vector.extract_strided_slice %739 {offsets = [0, 64], sizes = [8, 32], strides = [1, 1]} : vector<8x128xf32> to vector<8x32xf32>
    %753 = math.tanh %752 : vector<8x32xf32>
    %754 = vector.extract_strided_slice %739 {offsets = [0, 96], sizes = [8, 32], strides = [1, 1]} : vector<8x128xf32> to vector<8x32xf32>
    %755 = arith.negf %754 : vector<8x32xf32>
    %756 = math.exp %755 : vector<8x32xf32>
    %cst_232 = arith.constant 1.000000e+00 : f32
    %757 = vector.broadcast %cst_232 : f32 to vector<8x32xf32>
    %758 = arith.addf %757, %756 : vector<8x32xf32>
    %759 = arith.divf %757, %758 : vector<8x32xf32>
    %760 = arith.mulf %751, %728 : vector<8x32xf32>
    %761 = arith.mulf %745, %753 : vector<8x32xf32>
    %762 = arith.addf %760, %761 : vector<8x32xf32>
    %763 = math.tanh %762 : vector<8x32xf32>
    %764 = arith.mulf %759, %763 : vector<8x32xf32>
    %765 = arith.index_cast %c4_i32_226 : i32 to index
    %c0_233 = arith.constant 0 : index
    %c0_234 = arith.constant 0 : index
    %766 = vector.load %arg18[%765, %c0_233, %c0_234] : memref<8x8x32xf32, #tpu.memory_space<vmem>>, vector<1x8x32xf32>
    %767 = vector.shape_cast %766 : vector<1x8x32xf32> to vector<8x32xf32>
    %768 = vector.shape_cast %764 : vector<8x32xf32> to vector<1x8x32xf32>
    tpu.vector_store %arg18[%765, %c0_233, %c0_234], %768 {strides = array<i32>} : memref<8x8x32xf32, #tpu.memory_space<vmem>>, vector<1x8x32xf32>,
    %c5_i32_235 = arith.constant 5 : i32
    %769 = arith.index_cast %c5_i32_235 : i32 to index
    %c0_236 = arith.constant 0 : index
    %c0_237 = arith.constant 0 : index
    %770 = vector.load %arg17[%769, %c0_236, %c0_237] : memref<8x8x128xf32, #tpu.memory_space<vmem>>, vector<1x8x128xf32>
    %771 = vector.shape_cast %770 : vector<1x8x128xf32> to vector<8x128xf32>
    %cst_238 = arith.constant dense<0.000000e+00> : vector<8x128xf32>
    %772 = tpu.matmul %764, %591, %cst_238 {dimension_numbers = #tpu.dot_dimension_numbers<[1], [0], [0], [1], [0, 0, 1, 1], [], []>} : vector<8x32xf32>, vector<32x128xf32>, vector<8x128xf32> -> vector<8x128xf32>
    %773 = arith.addf %771, %772 : vector<8x128xf32>
    %774 = vector.extract_strided_slice %773 {offsets = [0, 0], sizes = [8, 32], strides = [1, 1]} : vector<8x128xf32> to vector<8x32xf32>
    %775 = arith.negf %774 : vector<8x32xf32>
    %776 = math.exp %775 : vector<8x32xf32>
    %cst_239 = arith.constant 1.000000e+00 : f32
    %777 = vector.broadcast %cst_239 : f32 to vector<8x32xf32>
    %778 = arith.addf %777, %776 : vector<8x32xf32>
    %779 = arith.divf %777, %778 : vector<8x32xf32>
    %780 = vector.extract_strided_slice %773 {offsets = [0, 32], sizes = [8, 32], strides = [1, 1]} : vector<8x128xf32> to vector<8x32xf32>
    %781 = arith.negf %780 : vector<8x32xf32>
    %782 = math.exp %781 : vector<8x32xf32>
    %cst_240 = arith.constant 1.000000e+00 : f32
    %783 = vector.broadcast %cst_240 : f32 to vector<8x32xf32>
    %784 = arith.addf %783, %782 : vector<8x32xf32>
    %785 = arith.divf %783, %784 : vector<8x32xf32>
    %786 = vector.extract_strided_slice %773 {offsets = [0, 64], sizes = [8, 32], strides = [1, 1]} : vector<8x128xf32> to vector<8x32xf32>
    %787 = math.tanh %786 : vector<8x32xf32>
    %788 = vector.extract_strided_slice %773 {offsets = [0, 96], sizes = [8, 32], strides = [1, 1]} : vector<8x128xf32> to vector<8x32xf32>
    %789 = arith.negf %788 : vector<8x32xf32>
    %790 = math.exp %789 : vector<8x32xf32>
    %cst_241 = arith.constant 1.000000e+00 : f32
    %791 = vector.broadcast %cst_241 : f32 to vector<8x32xf32>
    %792 = arith.addf %791, %790 : vector<8x32xf32>
    %793 = arith.divf %791, %792 : vector<8x32xf32>
    %794 = arith.mulf %785, %762 : vector<8x32xf32>
    %795 = arith.mulf %779, %787 : vector<8x32xf32>
    %796 = arith.addf %794, %795 : vector<8x32xf32>
    %797 = math.tanh %796 : vector<8x32xf32>
    %798 = arith.mulf %793, %797 : vector<8x32xf32>
    %799 = arith.index_cast %c5_i32_235 : i32 to index
    %c0_242 = arith.constant 0 : index
    %c0_243 = arith.constant 0 : index
    %800 = vector.load %arg18[%799, %c0_242, %c0_243] : memref<8x8x32xf32, #tpu.memory_space<vmem>>, vector<1x8x32xf32>
    %801 = vector.shape_cast %800 : vector<1x8x32xf32> to vector<8x32xf32>
    %802 = vector.shape_cast %798 : vector<8x32xf32> to vector<1x8x32xf32>
    tpu.vector_store %arg18[%799, %c0_242, %c0_243], %802 {strides = array<i32>} : memref<8x8x32xf32, #tpu.memory_space<vmem>>, vector<1x8x32xf32>,
    %c6_i32_244 = arith.constant 6 : i32
    %803 = arith.index_cast %c6_i32_244 : i32 to index
    %c0_245 = arith.constant 0 : index
    %c0_246 = arith.constant 0 : index
    %804 = vector.load %arg17[%803, %c0_245, %c0_246] : memref<8x8x128xf32, #tpu.memory_space<vmem>>, vector<1x8x128xf32>
    %805 = vector.shape_cast %804 : vector<1x8x128xf32> to vector<8x128xf32>
    %cst_247 = arith.constant dense<0.000000e+00> : vector<8x128xf32>
    %806 = tpu.matmul %798, %591, %cst_247 {dimension_numbers = #tpu.dot_dimension_numbers<[1], [0], [0], [1], [0, 0, 1, 1], [], []>} : vector<8x32xf32>, vector<32x128xf32>, vector<8x128xf32> -> vector<8x128xf32>
    %807 = arith.addf %805, %806 : vector<8x128xf32>
    %808 = vector.extract_strided_slice %807 {offsets = [0, 0], sizes = [8, 32], strides = [1, 1]} : vector<8x128xf32> to vector<8x32xf32>
    %809 = arith.negf %808 : vector<8x32xf32>
    %810 = math.exp %809 : vector<8x32xf32>
    %cst_248 = arith.constant 1.000000e+00 : f32
    %811 = vector.broadcast %cst_248 : f32 to vector<8x32xf32>
    %812 = arith.addf %811, %810 : vector<8x32xf32>
    %813 = arith.divf %811, %812 : vector<8x32xf32>
    %814 = vector.extract_strided_slice %807 {offsets = [0, 32], sizes = [8, 32], strides = [1, 1]} : vector<8x128xf32> to vector<8x32xf32>
    %815 = arith.negf %814 : vector<8x32xf32>
    %816 = math.exp %815 : vector<8x32xf32>
    %cst_249 = arith.constant 1.000000e+00 : f32
    %817 = vector.broadcast %cst_249 : f32 to vector<8x32xf32>
    %818 = arith.addf %817, %816 : vector<8x32xf32>
    %819 = arith.divf %817, %818 : vector<8x32xf32>
    %820 = vector.extract_strided_slice %807 {offsets = [0, 64], sizes = [8, 32], strides = [1, 1]} : vector<8x128xf32> to vector<8x32xf32>
    %821 = math.tanh %820 : vector<8x32xf32>
    %822 = vector.extract_strided_slice %807 {offsets = [0, 96], sizes = [8, 32], strides = [1, 1]} : vector<8x128xf32> to vector<8x32xf32>
    %823 = arith.negf %822 : vector<8x32xf32>
    %824 = math.exp %823 : vector<8x32xf32>
    %cst_250 = arith.constant 1.000000e+00 : f32
    %825 = vector.broadcast %cst_250 : f32 to vector<8x32xf32>
    %826 = arith.addf %825, %824 : vector<8x32xf32>
    %827 = arith.divf %825, %826 : vector<8x32xf32>
    %828 = arith.mulf %819, %796 : vector<8x32xf32>
    %829 = arith.mulf %813, %821 : vector<8x32xf32>
    %830 = arith.addf %828, %829 : vector<8x32xf32>
    %831 = math.tanh %830 : vector<8x32xf32>
    %832 = arith.mulf %827, %831 : vector<8x32xf32>
    %833 = arith.index_cast %c6_i32_244 : i32 to index
    %c0_251 = arith.constant 0 : index
    %c0_252 = arith.constant 0 : index
    %834 = vector.load %arg18[%833, %c0_251, %c0_252] : memref<8x8x32xf32, #tpu.memory_space<vmem>>, vector<1x8x32xf32>
    %835 = vector.shape_cast %834 : vector<1x8x32xf32> to vector<8x32xf32>
    %836 = vector.shape_cast %832 : vector<8x32xf32> to vector<1x8x32xf32>
    tpu.vector_store %arg18[%833, %c0_251, %c0_252], %836 {strides = array<i32>} : memref<8x8x32xf32, #tpu.memory_space<vmem>>, vector<1x8x32xf32>,
    %c7_i32_253 = arith.constant 7 : i32
    %837 = arith.index_cast %c7_i32_253 : i32 to index
    %c0_254 = arith.constant 0 : index
    %c0_255 = arith.constant 0 : index
    %838 = vector.load %arg17[%837, %c0_254, %c0_255] : memref<8x8x128xf32, #tpu.memory_space<vmem>>, vector<1x8x128xf32>
    %839 = vector.shape_cast %838 : vector<1x8x128xf32> to vector<8x128xf32>
    %cst_256 = arith.constant dense<0.000000e+00> : vector<8x128xf32>
    %840 = tpu.matmul %832, %591, %cst_256 {dimension_numbers = #tpu.dot_dimension_numbers<[1], [0], [0], [1], [0, 0, 1, 1], [], []>} : vector<8x32xf32>, vector<32x128xf32>, vector<8x128xf32> -> vector<8x128xf32>
    %841 = arith.addf %839, %840 : vector<8x128xf32>
    %842 = vector.extract_strided_slice %841 {offsets = [0, 0], sizes = [8, 32], strides = [1, 1]} : vector<8x128xf32> to vector<8x32xf32>
    %843 = arith.negf %842 : vector<8x32xf32>
    %844 = math.exp %843 : vector<8x32xf32>
    %cst_257 = arith.constant 1.000000e+00 : f32
    %845 = vector.broadcast %cst_257 : f32 to vector<8x32xf32>
    %846 = arith.addf %845, %844 : vector<8x32xf32>
    %847 = arith.divf %845, %846 : vector<8x32xf32>
    %848 = vector.extract_strided_slice %841 {offsets = [0, 32], sizes = [8, 32], strides = [1, 1]} : vector<8x128xf32> to vector<8x32xf32>
    %849 = arith.negf %848 : vector<8x32xf32>
    %850 = math.exp %849 : vector<8x32xf32>
    %cst_258 = arith.constant 1.000000e+00 : f32
    %851 = vector.broadcast %cst_258 : f32 to vector<8x32xf32>
    %852 = arith.addf %851, %850 : vector<8x32xf32>
    %853 = arith.divf %851, %852 : vector<8x32xf32>
    %854 = vector.extract_strided_slice %841 {offsets = [0, 64], sizes = [8, 32], strides = [1, 1]} : vector<8x128xf32> to vector<8x32xf32>
    %855 = math.tanh %854 : vector<8x32xf32>
    %856 = vector.extract_strided_slice %841 {offsets = [0, 96], sizes = [8, 32], strides = [1, 1]} : vector<8x128xf32> to vector<8x32xf32>
    %857 = arith.negf %856 : vector<8x32xf32>
    %858 = math.exp %857 : vector<8x32xf32>
    %cst_259 = arith.constant 1.000000e+00 : f32
    %859 = vector.broadcast %cst_259 : f32 to vector<8x32xf32>
    %860 = arith.addf %859, %858 : vector<8x32xf32>
    %861 = arith.divf %859, %860 : vector<8x32xf32>
    %862 = arith.mulf %853, %830 : vector<8x32xf32>
    %863 = arith.mulf %847, %855 : vector<8x32xf32>
    %864 = arith.addf %862, %863 : vector<8x32xf32>
    %865 = math.tanh %864 : vector<8x32xf32>
    %866 = arith.mulf %861, %865 : vector<8x32xf32>
    %867 = arith.index_cast %c7_i32_253 : i32 to index
    %c0_260 = arith.constant 0 : index
    %c0_261 = arith.constant 0 : index
    %868 = vector.load %arg18[%867, %c0_260, %c0_261] : memref<8x8x32xf32, #tpu.memory_space<vmem>>, vector<1x8x32xf32>
    %869 = vector.shape_cast %868 : vector<1x8x32xf32> to vector<8x32xf32>
    %870 = vector.shape_cast %866 : vector<8x32xf32> to vector<1x8x32xf32>
    tpu.vector_store %arg18[%867, %c0_260, %c0_261], %870 {strides = array<i32>} : memref<8x8x32xf32, #tpu.memory_space<vmem>>, vector<1x8x32xf32>,
    %c8_i32_262 = arith.constant 8 : i32
    %871 = vector.extract_strided_slice %866 {offsets = [0, 0], sizes = [2, 32], strides = [1, 1]} : vector<8x32xf32> to vector<2x32xf32>
    %c2 = arith.constant 2 : index
    %c0_263 = arith.constant 0 : index
    %c0_264 = arith.constant 0 : index
    %872 = vector.load %arg15[%c2, %c0_263, %c0_264] : memref<4x2x32xf32, #tpu.memory_space<vmem>>, vector<1x2x32xf32>
    %873 = vector.shape_cast %872 : vector<1x2x32xf32> to vector<2x32xf32>
    %874 = vector.shape_cast %871 : vector<2x32xf32> to vector<1x2x32xf32>
    tpu.vector_store %arg15[%c2, %c0_263, %c0_264], %874 {strides = array<i32>} : memref<4x2x32xf32, #tpu.memory_space<vmem>>, vector<1x2x32xf32>,
    %875 = vector.extract_strided_slice %864 {offsets = [0, 0], sizes = [2, 32], strides = [1, 1]} : vector<8x32xf32> to vector<2x32xf32>
    %c2_265 = arith.constant 2 : index
    %c0_266 = arith.constant 0 : index
    %c0_267 = arith.constant 0 : index
    %876 = vector.load %arg16[%c2_265, %c0_266, %c0_267] : memref<4x2x32xf32, #tpu.memory_space<vmem>>, vector<1x2x32xf32>
    %877 = vector.shape_cast %876 : vector<1x2x32xf32> to vector<2x32xf32>
    %878 = vector.shape_cast %875 : vector<2x32xf32> to vector<1x2x32xf32>
    tpu.vector_store %arg16[%c2_265, %c0_266, %c0_267], %878 {strides = array<i32>} : memref<4x2x32xf32, #tpu.memory_space<vmem>>, vector<1x2x32xf32>,
    %c0_268 = arith.constant 0 : index
    %c0_269 = arith.constant 0 : index
    %c0_270 = arith.constant 0 : index
    %879 = vector.load %arg18[%c0_268, %c0_269, %c0_270] : memref<8x8x32xf32, #tpu.memory_space<vmem>>, vector<8x8x32xf32>
    %880 = vector.shape_cast %879 : vector<8x8x32xf32> to vector<64x32xf32>
    %c0_271 = arith.constant 0 : index
    %c0_272 = arith.constant 0 : index
    %881 = vector.load %arg11[%c0_271, %c0_272] : memref<32x128xf32, #tpu.memory_space<vmem>>, vector<32x128xf32>
    %c0_273 = arith.constant 0 : index
    %c0_274 = arith.constant 0 : index
    %882 = vector.load %arg12[%c0_273, %c0_274] : memref<32x128xf32, #tpu.memory_space<vmem>>, vector<32x128xf32>
    %c0_275 = arith.constant 0 : index
    %c0_276 = arith.constant 0 : index
    %883 = vector.load %arg13[%c0_275, %c0_276] : memref<1x128xf32, #tpu.memory_space<vmem>>, vector<1x128xf32>
    %cst_277 = arith.constant dense<0.000000e+00> : vector<64x128xf32>
    %884 = tpu.matmul %880, %881, %cst_277 {dimension_numbers = #tpu.dot_dimension_numbers<[1], [0], [0], [1], [0, 0, 1, 1], [], []>} : vector<64x32xf32>, vector<32x128xf32>, vector<64x128xf32> -> vector<64x128xf32>
    %885 = vector.broadcast %883 : vector<1x128xf32> to vector<64x128xf32>
    %886 = arith.addf %884, %885 : vector<64x128xf32>
    %887 = vector.shape_cast %886 : vector<64x128xf32> to vector<8x8x128xf32>
    %c0_278 = arith.constant 0 : index
    %c0_279 = arith.constant 0 : index
    %c0_280 = arith.constant 0 : index
    %888 = vector.load %arg17[%c0_278, %c0_279, %c0_280] : memref<8x8x128xf32, #tpu.memory_space<vmem>>, vector<8x8x128xf32>
    tpu.vector_store %arg17[%c0_278, %c0_279, %c0_280], %887 {strides = array<i32>} : memref<8x8x128xf32, #tpu.memory_space<vmem>>, vector<8x8x128xf32>,
    %cst_281 = arith.constant 0.000000e+00 : f32
    %889 = vector.broadcast %cst_281 : f32 to vector<8x32xf32>
    %c0_i32_282 = arith.constant 0 : i32
    %890 = arith.index_cast %c0_i32_282 : i32 to index
    %c0_283 = arith.constant 0 : index
    %c0_284 = arith.constant 0 : index
    %891 = vector.load %arg17[%890, %c0_283, %c0_284] : memref<8x8x128xf32, #tpu.memory_space<vmem>>, vector<1x8x128xf32>
    %892 = vector.shape_cast %891 : vector<1x8x128xf32> to vector<8x128xf32>
    %cst_285 = arith.constant dense<0.000000e+00> : vector<8x128xf32>
    %893 = tpu.matmul %889, %882, %cst_285 {dimension_numbers = #tpu.dot_dimension_numbers<[1], [0], [0], [1], [0, 0, 1, 1], [], []>} : vector<8x32xf32>, vector<32x128xf32>, vector<8x128xf32> -> vector<8x128xf32>
    %894 = arith.addf %892, %893 : vector<8x128xf32>
    %895 = vector.extract_strided_slice %894 {offsets = [0, 0], sizes = [8, 32], strides = [1, 1]} : vector<8x128xf32> to vector<8x32xf32>
    %896 = arith.negf %895 : vector<8x32xf32>
    %897 = math.exp %896 : vector<8x32xf32>
    %cst_286 = arith.constant 1.000000e+00 : f32
    %898 = vector.broadcast %cst_286 : f32 to vector<8x32xf32>
    %899 = arith.addf %898, %897 : vector<8x32xf32>
    %900 = arith.divf %898, %899 : vector<8x32xf32>
    %901 = vector.extract_strided_slice %894 {offsets = [0, 32], sizes = [8, 32], strides = [1, 1]} : vector<8x128xf32> to vector<8x32xf32>
    %902 = arith.negf %901 : vector<8x32xf32>
    %903 = math.exp %902 : vector<8x32xf32>
    %cst_287 = arith.constant 1.000000e+00 : f32
    %904 = vector.broadcast %cst_287 : f32 to vector<8x32xf32>
    %905 = arith.addf %904, %903 : vector<8x32xf32>
    %906 = arith.divf %904, %905 : vector<8x32xf32>
    %907 = vector.extract_strided_slice %894 {offsets = [0, 64], sizes = [8, 32], strides = [1, 1]} : vector<8x128xf32> to vector<8x32xf32>
    %908 = math.tanh %907 : vector<8x32xf32>
    %909 = vector.extract_strided_slice %894 {offsets = [0, 96], sizes = [8, 32], strides = [1, 1]} : vector<8x128xf32> to vector<8x32xf32>
    %910 = arith.negf %909 : vector<8x32xf32>
    %911 = math.exp %910 : vector<8x32xf32>
    %cst_288 = arith.constant 1.000000e+00 : f32
    %912 = vector.broadcast %cst_288 : f32 to vector<8x32xf32>
    %913 = arith.addf %912, %911 : vector<8x32xf32>
    %914 = arith.divf %912, %913 : vector<8x32xf32>
    %915 = arith.mulf %906, %889 : vector<8x32xf32>
    %916 = arith.mulf %900, %908 : vector<8x32xf32>
    %917 = arith.addf %915, %916 : vector<8x32xf32>
    %918 = math.tanh %917 : vector<8x32xf32>
    %919 = arith.mulf %914, %918 : vector<8x32xf32>
    %920 = arith.index_cast %c0_i32_282 : i32 to index
    %c0_289 = arith.constant 0 : index
    %c0_290 = arith.constant 0 : index
    %921 = vector.load %arg18[%920, %c0_289, %c0_290] : memref<8x8x32xf32, #tpu.memory_space<vmem>>, vector<1x8x32xf32>
    %922 = vector.shape_cast %921 : vector<1x8x32xf32> to vector<8x32xf32>
    %923 = vector.shape_cast %919 : vector<8x32xf32> to vector<1x8x32xf32>
    tpu.vector_store %arg18[%920, %c0_289, %c0_290], %923 {strides = array<i32>} : memref<8x8x32xf32, #tpu.memory_space<vmem>>, vector<1x8x32xf32>,
    %c1_i32_291 = arith.constant 1 : i32
    %924 = arith.index_cast %c1_i32_291 : i32 to index
    %c0_292 = arith.constant 0 : index
    %c0_293 = arith.constant 0 : index
    %925 = vector.load %arg17[%924, %c0_292, %c0_293] : memref<8x8x128xf32, #tpu.memory_space<vmem>>, vector<1x8x128xf32>
    %926 = vector.shape_cast %925 : vector<1x8x128xf32> to vector<8x128xf32>
    %cst_294 = arith.constant dense<0.000000e+00> : vector<8x128xf32>
    %927 = tpu.matmul %919, %882, %cst_294 {dimension_numbers = #tpu.dot_dimension_numbers<[1], [0], [0], [1], [0, 0, 1, 1], [], []>} : vector<8x32xf32>, vector<32x128xf32>, vector<8x128xf32> -> vector<8x128xf32>
    %928 = arith.addf %926, %927 : vector<8x128xf32>
    %929 = vector.extract_strided_slice %928 {offsets = [0, 0], sizes = [8, 32], strides = [1, 1]} : vector<8x128xf32> to vector<8x32xf32>
    %930 = arith.negf %929 : vector<8x32xf32>
    %931 = math.exp %930 : vector<8x32xf32>
    %cst_295 = arith.constant 1.000000e+00 : f32
    %932 = vector.broadcast %cst_295 : f32 to vector<8x32xf32>
    %933 = arith.addf %932, %931 : vector<8x32xf32>
    %934 = arith.divf %932, %933 : vector<8x32xf32>
    %935 = vector.extract_strided_slice %928 {offsets = [0, 32], sizes = [8, 32], strides = [1, 1]} : vector<8x128xf32> to vector<8x32xf32>
    %936 = arith.negf %935 : vector<8x32xf32>
    %937 = math.exp %936 : vector<8x32xf32>
    %cst_296 = arith.constant 1.000000e+00 : f32
    %938 = vector.broadcast %cst_296 : f32 to vector<8x32xf32>
    %939 = arith.addf %938, %937 : vector<8x32xf32>
    %940 = arith.divf %938, %939 : vector<8x32xf32>
    %941 = vector.extract_strided_slice %928 {offsets = [0, 64], sizes = [8, 32], strides = [1, 1]} : vector<8x128xf32> to vector<8x32xf32>
    %942 = math.tanh %941 : vector<8x32xf32>
    %943 = vector.extract_strided_slice %928 {offsets = [0, 96], sizes = [8, 32], strides = [1, 1]} : vector<8x128xf32> to vector<8x32xf32>
    %944 = arith.negf %943 : vector<8x32xf32>
    %945 = math.exp %944 : vector<8x32xf32>
    %cst_297 = arith.constant 1.000000e+00 : f32
    %946 = vector.broadcast %cst_297 : f32 to vector<8x32xf32>
    %947 = arith.addf %946, %945 : vector<8x32xf32>
    %948 = arith.divf %946, %947 : vector<8x32xf32>
    %949 = arith.mulf %940, %917 : vector<8x32xf32>
    %950 = arith.mulf %934, %942 : vector<8x32xf32>
    %951 = arith.addf %949, %950 : vector<8x32xf32>
    %952 = math.tanh %951 : vector<8x32xf32>
    %953 = arith.mulf %948, %952 : vector<8x32xf32>
    %954 = arith.index_cast %c1_i32_291 : i32 to index
    %c0_298 = arith.constant 0 : index
    %c0_299 = arith.constant 0 : index
    %955 = vector.load %arg18[%954, %c0_298, %c0_299] : memref<8x8x32xf32, #tpu.memory_space<vmem>>, vector<1x8x32xf32>
    %956 = vector.shape_cast %955 : vector<1x8x32xf32> to vector<8x32xf32>
    %957 = vector.shape_cast %953 : vector<8x32xf32> to vector<1x8x32xf32>
    tpu.vector_store %arg18[%954, %c0_298, %c0_299], %957 {strides = array<i32>} : memref<8x8x32xf32, #tpu.memory_space<vmem>>, vector<1x8x32xf32>,
    %c2_i32_300 = arith.constant 2 : i32
    %958 = arith.index_cast %c2_i32_300 : i32 to index
    %c0_301 = arith.constant 0 : index
    %c0_302 = arith.constant 0 : index
    %959 = vector.load %arg17[%958, %c0_301, %c0_302] : memref<8x8x128xf32, #tpu.memory_space<vmem>>, vector<1x8x128xf32>
    %960 = vector.shape_cast %959 : vector<1x8x128xf32> to vector<8x128xf32>
    %cst_303 = arith.constant dense<0.000000e+00> : vector<8x128xf32>
    %961 = tpu.matmul %953, %882, %cst_303 {dimension_numbers = #tpu.dot_dimension_numbers<[1], [0], [0], [1], [0, 0, 1, 1], [], []>} : vector<8x32xf32>, vector<32x128xf32>, vector<8x128xf32> -> vector<8x128xf32>
    %962 = arith.addf %960, %961 : vector<8x128xf32>
    %963 = vector.extract_strided_slice %962 {offsets = [0, 0], sizes = [8, 32], strides = [1, 1]} : vector<8x128xf32> to vector<8x32xf32>
    %964 = arith.negf %963 : vector<8x32xf32>
    %965 = math.exp %964 : vector<8x32xf32>
    %cst_304 = arith.constant 1.000000e+00 : f32
    %966 = vector.broadcast %cst_304 : f32 to vector<8x32xf32>
    %967 = arith.addf %966, %965 : vector<8x32xf32>
    %968 = arith.divf %966, %967 : vector<8x32xf32>
    %969 = vector.extract_strided_slice %962 {offsets = [0, 32], sizes = [8, 32], strides = [1, 1]} : vector<8x128xf32> to vector<8x32xf32>
    %970 = arith.negf %969 : vector<8x32xf32>
    %971 = math.exp %970 : vector<8x32xf32>
    %cst_305 = arith.constant 1.000000e+00 : f32
    %972 = vector.broadcast %cst_305 : f32 to vector<8x32xf32>
    %973 = arith.addf %972, %971 : vector<8x32xf32>
    %974 = arith.divf %972, %973 : vector<8x32xf32>
    %975 = vector.extract_strided_slice %962 {offsets = [0, 64], sizes = [8, 32], strides = [1, 1]} : vector<8x128xf32> to vector<8x32xf32>
    %976 = math.tanh %975 : vector<8x32xf32>
    %977 = vector.extract_strided_slice %962 {offsets = [0, 96], sizes = [8, 32], strides = [1, 1]} : vector<8x128xf32> to vector<8x32xf32>
    %978 = arith.negf %977 : vector<8x32xf32>
    %979 = math.exp %978 : vector<8x32xf32>
    %cst_306 = arith.constant 1.000000e+00 : f32
    %980 = vector.broadcast %cst_306 : f32 to vector<8x32xf32>
    %981 = arith.addf %980, %979 : vector<8x32xf32>
    %982 = arith.divf %980, %981 : vector<8x32xf32>
    %983 = arith.mulf %974, %951 : vector<8x32xf32>
    %984 = arith.mulf %968, %976 : vector<8x32xf32>
    %985 = arith.addf %983, %984 : vector<8x32xf32>
    %986 = math.tanh %985 : vector<8x32xf32>
    %987 = arith.mulf %982, %986 : vector<8x32xf32>
    %988 = arith.index_cast %c2_i32_300 : i32 to index
    %c0_307 = arith.constant 0 : index
    %c0_308 = arith.constant 0 : index
    %989 = vector.load %arg18[%988, %c0_307, %c0_308] : memref<8x8x32xf32, #tpu.memory_space<vmem>>, vector<1x8x32xf32>
    %990 = vector.shape_cast %989 : vector<1x8x32xf32> to vector<8x32xf32>
    %991 = vector.shape_cast %987 : vector<8x32xf32> to vector<1x8x32xf32>
    tpu.vector_store %arg18[%988, %c0_307, %c0_308], %991 {strides = array<i32>} : memref<8x8x32xf32, #tpu.memory_space<vmem>>, vector<1x8x32xf32>,
    %c3_i32_309 = arith.constant 3 : i32
    %992 = arith.index_cast %c3_i32_309 : i32 to index
    %c0_310 = arith.constant 0 : index
    %c0_311 = arith.constant 0 : index
    %993 = vector.load %arg17[%992, %c0_310, %c0_311] : memref<8x8x128xf32, #tpu.memory_space<vmem>>, vector<1x8x128xf32>
    %994 = vector.shape_cast %993 : vector<1x8x128xf32> to vector<8x128xf32>
    %cst_312 = arith.constant dense<0.000000e+00> : vector<8x128xf32>
    %995 = tpu.matmul %987, %882, %cst_312 {dimension_numbers = #tpu.dot_dimension_numbers<[1], [0], [0], [1], [0, 0, 1, 1], [], []>} : vector<8x32xf32>, vector<32x128xf32>, vector<8x128xf32> -> vector<8x128xf32>
    %996 = arith.addf %994, %995 : vector<8x128xf32>
    %997 = vector.extract_strided_slice %996 {offsets = [0, 0], sizes = [8, 32], strides = [1, 1]} : vector<8x128xf32> to vector<8x32xf32>
    %998 = arith.negf %997 : vector<8x32xf32>
    %999 = math.exp %998 : vector<8x32xf32>
    %cst_313 = arith.constant 1.000000e+00 : f32
    %1000 = vector.broadcast %cst_313 : f32 to vector<8x32xf32>
    %1001 = arith.addf %1000, %999 : vector<8x32xf32>
    %1002 = arith.divf %1000, %1001 : vector<8x32xf32>
    %1003 = vector.extract_strided_slice %996 {offsets = [0, 32], sizes = [8, 32], strides = [1, 1]} : vector<8x128xf32> to vector<8x32xf32>
    %1004 = arith.negf %1003 : vector<8x32xf32>
    %1005 = math.exp %1004 : vector<8x32xf32>
    %cst_314 = arith.constant 1.000000e+00 : f32
    %1006 = vector.broadcast %cst_314 : f32 to vector<8x32xf32>
    %1007 = arith.addf %1006, %1005 : vector<8x32xf32>
    %1008 = arith.divf %1006, %1007 : vector<8x32xf32>
    %1009 = vector.extract_strided_slice %996 {offsets = [0, 64], sizes = [8, 32], strides = [1, 1]} : vector<8x128xf32> to vector<8x32xf32>
    %1010 = math.tanh %1009 : vector<8x32xf32>
    %1011 = vector.extract_strided_slice %996 {offsets = [0, 96], sizes = [8, 32], strides = [1, 1]} : vector<8x128xf32> to vector<8x32xf32>
    %1012 = arith.negf %1011 : vector<8x32xf32>
    %1013 = math.exp %1012 : vector<8x32xf32>
    %cst_315 = arith.constant 1.000000e+00 : f32
    %1014 = vector.broadcast %cst_315 : f32 to vector<8x32xf32>
    %1015 = arith.addf %1014, %1013 : vector<8x32xf32>
    %1016 = arith.divf %1014, %1015 : vector<8x32xf32>
    %1017 = arith.mulf %1008, %985 : vector<8x32xf32>
    %1018 = arith.mulf %1002, %1010 : vector<8x32xf32>
    %1019 = arith.addf %1017, %1018 : vector<8x32xf32>
    %1020 = math.tanh %1019 : vector<8x32xf32>
    %1021 = arith.mulf %1016, %1020 : vector<8x32xf32>
    %1022 = arith.index_cast %c3_i32_309 : i32 to index
    %c0_316 = arith.constant 0 : index
    %c0_317 = arith.constant 0 : index
    %1023 = vector.load %arg18[%1022, %c0_316, %c0_317] : memref<8x8x32xf32, #tpu.memory_space<vmem>>, vector<1x8x32xf32>
    %1024 = vector.shape_cast %1023 : vector<1x8x32xf32> to vector<8x32xf32>
    %1025 = vector.shape_cast %1021 : vector<8x32xf32> to vector<1x8x32xf32>
    tpu.vector_store %arg18[%1022, %c0_316, %c0_317], %1025 {strides = array<i32>} : memref<8x8x32xf32, #tpu.memory_space<vmem>>, vector<1x8x32xf32>,
    %c4_i32_318 = arith.constant 4 : i32
    %1026 = arith.index_cast %c4_i32_318 : i32 to index
    %c0_319 = arith.constant 0 : index
    %c0_320 = arith.constant 0 : index
    %1027 = vector.load %arg17[%1026, %c0_319, %c0_320] : memref<8x8x128xf32, #tpu.memory_space<vmem>>, vector<1x8x128xf32>
    %1028 = vector.shape_cast %1027 : vector<1x8x128xf32> to vector<8x128xf32>
    %cst_321 = arith.constant dense<0.000000e+00> : vector<8x128xf32>
    %1029 = tpu.matmul %1021, %882, %cst_321 {dimension_numbers = #tpu.dot_dimension_numbers<[1], [0], [0], [1], [0, 0, 1, 1], [], []>} : vector<8x32xf32>, vector<32x128xf32>, vector<8x128xf32> -> vector<8x128xf32>
    %1030 = arith.addf %1028, %1029 : vector<8x128xf32>
    %1031 = vector.extract_strided_slice %1030 {offsets = [0, 0], sizes = [8, 32], strides = [1, 1]} : vector<8x128xf32> to vector<8x32xf32>
    %1032 = arith.negf %1031 : vector<8x32xf32>
    %1033 = math.exp %1032 : vector<8x32xf32>
    %cst_322 = arith.constant 1.000000e+00 : f32
    %1034 = vector.broadcast %cst_322 : f32 to vector<8x32xf32>
    %1035 = arith.addf %1034, %1033 : vector<8x32xf32>
    %1036 = arith.divf %1034, %1035 : vector<8x32xf32>
    %1037 = vector.extract_strided_slice %1030 {offsets = [0, 32], sizes = [8, 32], strides = [1, 1]} : vector<8x128xf32> to vector<8x32xf32>
    %1038 = arith.negf %1037 : vector<8x32xf32>
    %1039 = math.exp %1038 : vector<8x32xf32>
    %cst_323 = arith.constant 1.000000e+00 : f32
    %1040 = vector.broadcast %cst_323 : f32 to vector<8x32xf32>
    %1041 = arith.addf %1040, %1039 : vector<8x32xf32>
    %1042 = arith.divf %1040, %1041 : vector<8x32xf32>
    %1043 = vector.extract_strided_slice %1030 {offsets = [0, 64], sizes = [8, 32], strides = [1, 1]} : vector<8x128xf32> to vector<8x32xf32>
    %1044 = math.tanh %1043 : vector<8x32xf32>
    %1045 = vector.extract_strided_slice %1030 {offsets = [0, 96], sizes = [8, 32], strides = [1, 1]} : vector<8x128xf32> to vector<8x32xf32>
    %1046 = arith.negf %1045 : vector<8x32xf32>
    %1047 = math.exp %1046 : vector<8x32xf32>
    %cst_324 = arith.constant 1.000000e+00 : f32
    %1048 = vector.broadcast %cst_324 : f32 to vector<8x32xf32>
    %1049 = arith.addf %1048, %1047 : vector<8x32xf32>
    %1050 = arith.divf %1048, %1049 : vector<8x32xf32>
    %1051 = arith.mulf %1042, %1019 : vector<8x32xf32>
    %1052 = arith.mulf %1036, %1044 : vector<8x32xf32>
    %1053 = arith.addf %1051, %1052 : vector<8x32xf32>
    %1054 = math.tanh %1053 : vector<8x32xf32>
    %1055 = arith.mulf %1050, %1054 : vector<8x32xf32>
    %1056 = arith.index_cast %c4_i32_318 : i32 to index
    %c0_325 = arith.constant 0 : index
    %c0_326 = arith.constant 0 : index
    %1057 = vector.load %arg18[%1056, %c0_325, %c0_326] : memref<8x8x32xf32, #tpu.memory_space<vmem>>, vector<1x8x32xf32>
    %1058 = vector.shape_cast %1057 : vector<1x8x32xf32> to vector<8x32xf32>
    %1059 = vector.shape_cast %1055 : vector<8x32xf32> to vector<1x8x32xf32>
    tpu.vector_store %arg18[%1056, %c0_325, %c0_326], %1059 {strides = array<i32>} : memref<8x8x32xf32, #tpu.memory_space<vmem>>, vector<1x8x32xf32>,
    %c5_i32_327 = arith.constant 5 : i32
    %1060 = arith.index_cast %c5_i32_327 : i32 to index
    %c0_328 = arith.constant 0 : index
    %c0_329 = arith.constant 0 : index
    %1061 = vector.load %arg17[%1060, %c0_328, %c0_329] : memref<8x8x128xf32, #tpu.memory_space<vmem>>, vector<1x8x128xf32>
    %1062 = vector.shape_cast %1061 : vector<1x8x128xf32> to vector<8x128xf32>
    %cst_330 = arith.constant dense<0.000000e+00> : vector<8x128xf32>
    %1063 = tpu.matmul %1055, %882, %cst_330 {dimension_numbers = #tpu.dot_dimension_numbers<[1], [0], [0], [1], [0, 0, 1, 1], [], []>} : vector<8x32xf32>, vector<32x128xf32>, vector<8x128xf32> -> vector<8x128xf32>
    %1064 = arith.addf %1062, %1063 : vector<8x128xf32>
    %1065 = vector.extract_strided_slice %1064 {offsets = [0, 0], sizes = [8, 32], strides = [1, 1]} : vector<8x128xf32> to vector<8x32xf32>
    %1066 = arith.negf %1065 : vector<8x32xf32>
    %1067 = math.exp %1066 : vector<8x32xf32>
    %cst_331 = arith.constant 1.000000e+00 : f32
    %1068 = vector.broadcast %cst_331 : f32 to vector<8x32xf32>
    %1069 = arith.addf %1068, %1067 : vector<8x32xf32>
    %1070 = arith.divf %1068, %1069 : vector<8x32xf32>
    %1071 = vector.extract_strided_slice %1064 {offsets = [0, 32], sizes = [8, 32], strides = [1, 1]} : vector<8x128xf32> to vector<8x32xf32>
    %1072 = arith.negf %1071 : vector<8x32xf32>
    %1073 = math.exp %1072 : vector<8x32xf32>
    %cst_332 = arith.constant 1.000000e+00 : f32
    %1074 = vector.broadcast %cst_332 : f32 to vector<8x32xf32>
    %1075 = arith.addf %1074, %1073 : vector<8x32xf32>
    %1076 = arith.divf %1074, %1075 : vector<8x32xf32>
    %1077 = vector.extract_strided_slice %1064 {offsets = [0, 64], sizes = [8, 32], strides = [1, 1]} : vector<8x128xf32> to vector<8x32xf32>
    %1078 = math.tanh %1077 : vector<8x32xf32>
    %1079 = vector.extract_strided_slice %1064 {offsets = [0, 96], sizes = [8, 32], strides = [1, 1]} : vector<8x128xf32> to vector<8x32xf32>
    %1080 = arith.negf %1079 : vector<8x32xf32>
    %1081 = math.exp %1080 : vector<8x32xf32>
    %cst_333 = arith.constant 1.000000e+00 : f32
    %1082 = vector.broadcast %cst_333 : f32 to vector<8x32xf32>
    %1083 = arith.addf %1082, %1081 : vector<8x32xf32>
    %1084 = arith.divf %1082, %1083 : vector<8x32xf32>
    %1085 = arith.mulf %1076, %1053 : vector<8x32xf32>
    %1086 = arith.mulf %1070, %1078 : vector<8x32xf32>
    %1087 = arith.addf %1085, %1086 : vector<8x32xf32>
    %1088 = math.tanh %1087 : vector<8x32xf32>
    %1089 = arith.mulf %1084, %1088 : vector<8x32xf32>
    %1090 = arith.index_cast %c5_i32_327 : i32 to index
    %c0_334 = arith.constant 0 : index
    %c0_335 = arith.constant 0 : index
    %1091 = vector.load %arg18[%1090, %c0_334, %c0_335] : memref<8x8x32xf32, #tpu.memory_space<vmem>>, vector<1x8x32xf32>
    %1092 = vector.shape_cast %1091 : vector<1x8x32xf32> to vector<8x32xf32>
    %1093 = vector.shape_cast %1089 : vector<8x32xf32> to vector<1x8x32xf32>
    tpu.vector_store %arg18[%1090, %c0_334, %c0_335], %1093 {strides = array<i32>} : memref<8x8x32xf32, #tpu.memory_space<vmem>>, vector<1x8x32xf32>,
    %c6_i32_336 = arith.constant 6 : i32
    %1094 = arith.index_cast %c6_i32_336 : i32 to index
    %c0_337 = arith.constant 0 : index
    %c0_338 = arith.constant 0 : index
    %1095 = vector.load %arg17[%1094, %c0_337, %c0_338] : memref<8x8x128xf32, #tpu.memory_space<vmem>>, vector<1x8x128xf32>
    %1096 = vector.shape_cast %1095 : vector<1x8x128xf32> to vector<8x128xf32>
    %cst_339 = arith.constant dense<0.000000e+00> : vector<8x128xf32>
    %1097 = tpu.matmul %1089, %882, %cst_339 {dimension_numbers = #tpu.dot_dimension_numbers<[1], [0], [0], [1], [0, 0, 1, 1], [], []>} : vector<8x32xf32>, vector<32x128xf32>, vector<8x128xf32> -> vector<8x128xf32>
    %1098 = arith.addf %1096, %1097 : vector<8x128xf32>
    %1099 = vector.extract_strided_slice %1098 {offsets = [0, 0], sizes = [8, 32], strides = [1, 1]} : vector<8x128xf32> to vector<8x32xf32>
    %1100 = arith.negf %1099 : vector<8x32xf32>
    %1101 = math.exp %1100 : vector<8x32xf32>
    %cst_340 = arith.constant 1.000000e+00 : f32
    %1102 = vector.broadcast %cst_340 : f32 to vector<8x32xf32>
    %1103 = arith.addf %1102, %1101 : vector<8x32xf32>
    %1104 = arith.divf %1102, %1103 : vector<8x32xf32>
    %1105 = vector.extract_strided_slice %1098 {offsets = [0, 32], sizes = [8, 32], strides = [1, 1]} : vector<8x128xf32> to vector<8x32xf32>
    %1106 = arith.negf %1105 : vector<8x32xf32>
    %1107 = math.exp %1106 : vector<8x32xf32>
    %cst_341 = arith.constant 1.000000e+00 : f32
    %1108 = vector.broadcast %cst_341 : f32 to vector<8x32xf32>
    %1109 = arith.addf %1108, %1107 : vector<8x32xf32>
    %1110 = arith.divf %1108, %1109 : vector<8x32xf32>
    %1111 = vector.extract_strided_slice %1098 {offsets = [0, 64], sizes = [8, 32], strides = [1, 1]} : vector<8x128xf32> to vector<8x32xf32>
    %1112 = math.tanh %1111 : vector<8x32xf32>
    %1113 = vector.extract_strided_slice %1098 {offsets = [0, 96], sizes = [8, 32], strides = [1, 1]} : vector<8x128xf32> to vector<8x32xf32>
    %1114 = arith.negf %1113 : vector<8x32xf32>
    %1115 = math.exp %1114 : vector<8x32xf32>
    %cst_342 = arith.constant 1.000000e+00 : f32
    %1116 = vector.broadcast %cst_342 : f32 to vector<8x32xf32>
    %1117 = arith.addf %1116, %1115 : vector<8x32xf32>
    %1118 = arith.divf %1116, %1117 : vector<8x32xf32>
    %1119 = arith.mulf %1110, %1087 : vector<8x32xf32>
    %1120 = arith.mulf %1104, %1112 : vector<8x32xf32>
    %1121 = arith.addf %1119, %1120 : vector<8x32xf32>
    %1122 = math.tanh %1121 : vector<8x32xf32>
    %1123 = arith.mulf %1118, %1122 : vector<8x32xf32>
    %1124 = arith.index_cast %c6_i32_336 : i32 to index
    %c0_343 = arith.constant 0 : index
    %c0_344 = arith.constant 0 : index
    %1125 = vector.load %arg18[%1124, %c0_343, %c0_344] : memref<8x8x32xf32, #tpu.memory_space<vmem>>, vector<1x8x32xf32>
    %1126 = vector.shape_cast %1125 : vector<1x8x32xf32> to vector<8x32xf32>
    %1127 = vector.shape_cast %1123 : vector<8x32xf32> to vector<1x8x32xf32>
    tpu.vector_store %arg18[%1124, %c0_343, %c0_344], %1127 {strides = array<i32>} : memref<8x8x32xf32, #tpu.memory_space<vmem>>, vector<1x8x32xf32>,
    %c7_i32_345 = arith.constant 7 : i32
    %1128 = arith.index_cast %c7_i32_345 : i32 to index
    %c0_346 = arith.constant 0 : index
    %c0_347 = arith.constant 0 : index
    %1129 = vector.load %arg17[%1128, %c0_346, %c0_347] : memref<8x8x128xf32, #tpu.memory_space<vmem>>, vector<1x8x128xf32>
    %1130 = vector.shape_cast %1129 : vector<1x8x128xf32> to vector<8x128xf32>
    %cst_348 = arith.constant dense<0.000000e+00> : vector<8x128xf32>
    %1131 = tpu.matmul %1123, %882, %cst_348 {dimension_numbers = #tpu.dot_dimension_numbers<[1], [0], [0], [1], [0, 0, 1, 1], [], []>} : vector<8x32xf32>, vector<32x128xf32>, vector<8x128xf32> -> vector<8x128xf32>
    %1132 = arith.addf %1130, %1131 : vector<8x128xf32>
    %1133 = vector.extract_strided_slice %1132 {offsets = [0, 0], sizes = [8, 32], strides = [1, 1]} : vector<8x128xf32> to vector<8x32xf32>
    %1134 = arith.negf %1133 : vector<8x32xf32>
    %1135 = math.exp %1134 : vector<8x32xf32>
    %cst_349 = arith.constant 1.000000e+00 : f32
    %1136 = vector.broadcast %cst_349 : f32 to vector<8x32xf32>
    %1137 = arith.addf %1136, %1135 : vector<8x32xf32>
    %1138 = arith.divf %1136, %1137 : vector<8x32xf32>
    %1139 = vector.extract_strided_slice %1132 {offsets = [0, 32], sizes = [8, 32], strides = [1, 1]} : vector<8x128xf32> to vector<8x32xf32>
    %1140 = arith.negf %1139 : vector<8x32xf32>
    %1141 = math.exp %1140 : vector<8x32xf32>
    %cst_350 = arith.constant 1.000000e+00 : f32
    %1142 = vector.broadcast %cst_350 : f32 to vector<8x32xf32>
    %1143 = arith.addf %1142, %1141 : vector<8x32xf32>
    %1144 = arith.divf %1142, %1143 : vector<8x32xf32>
    %1145 = vector.extract_strided_slice %1132 {offsets = [0, 64], sizes = [8, 32], strides = [1, 1]} : vector<8x128xf32> to vector<8x32xf32>
    %1146 = math.tanh %1145 : vector<8x32xf32>
    %1147 = vector.extract_strided_slice %1132 {offsets = [0, 96], sizes = [8, 32], strides = [1, 1]} : vector<8x128xf32> to vector<8x32xf32>
    %1148 = arith.negf %1147 : vector<8x32xf32>
    %1149 = math.exp %1148 : vector<8x32xf32>
    %cst_351 = arith.constant 1.000000e+00 : f32
    %1150 = vector.broadcast %cst_351 : f32 to vector<8x32xf32>
    %1151 = arith.addf %1150, %1149 : vector<8x32xf32>
    %1152 = arith.divf %1150, %1151 : vector<8x32xf32>
    %1153 = arith.mulf %1144, %1121 : vector<8x32xf32>
    %1154 = arith.mulf %1138, %1146 : vector<8x32xf32>
    %1155 = arith.addf %1153, %1154 : vector<8x32xf32>
    %1156 = math.tanh %1155 : vector<8x32xf32>
    %1157 = arith.mulf %1152, %1156 : vector<8x32xf32>
    %1158 = arith.index_cast %c7_i32_345 : i32 to index
    %c0_352 = arith.constant 0 : index
    %c0_353 = arith.constant 0 : index
    %1159 = vector.load %arg18[%1158, %c0_352, %c0_353] : memref<8x8x32xf32, #tpu.memory_space<vmem>>, vector<1x8x32xf32>
    %1160 = vector.shape_cast %1159 : vector<1x8x32xf32> to vector<8x32xf32>
    %1161 = vector.shape_cast %1157 : vector<8x32xf32> to vector<1x8x32xf32>
    tpu.vector_store %arg18[%1158, %c0_352, %c0_353], %1161 {strides = array<i32>} : memref<8x8x32xf32, #tpu.memory_space<vmem>>, vector<1x8x32xf32>,
    %c8_i32_354 = arith.constant 8 : i32
    %1162 = vector.extract_strided_slice %1157 {offsets = [0, 0], sizes = [2, 32], strides = [1, 1]} : vector<8x32xf32> to vector<2x32xf32>
    %c3 = arith.constant 3 : index
    %c0_355 = arith.constant 0 : index
    %c0_356 = arith.constant 0 : index
    %1163 = vector.load %arg15[%c3, %c0_355, %c0_356] : memref<4x2x32xf32, #tpu.memory_space<vmem>>, vector<1x2x32xf32>
    %1164 = vector.shape_cast %1163 : vector<1x2x32xf32> to vector<2x32xf32>
    %1165 = vector.shape_cast %1162 : vector<2x32xf32> to vector<1x2x32xf32>
    tpu.vector_store %arg15[%c3, %c0_355, %c0_356], %1165 {strides = array<i32>} : memref<4x2x32xf32, #tpu.memory_space<vmem>>, vector<1x2x32xf32>,
    %1166 = vector.extract_strided_slice %1155 {offsets = [0, 0], sizes = [2, 32], strides = [1, 1]} : vector<8x32xf32> to vector<2x32xf32>
    %c3_357 = arith.constant 3 : index
    %c0_358 = arith.constant 0 : index
    %c0_359 = arith.constant 0 : index
    %1167 = vector.load %arg16[%c3_357, %c0_358, %c0_359] : memref<4x2x32xf32, #tpu.memory_space<vmem>>, vector<1x2x32xf32>
    %1168 = vector.shape_cast %1167 : vector<1x2x32xf32> to vector<2x32xf32>
    %1169 = vector.shape_cast %1166 : vector<2x32xf32> to vector<1x2x32xf32>
    tpu.vector_store %arg16[%c3_357, %c0_358, %c0_359], %1169 {strides = array<i32>} : memref<4x2x32xf32, #tpu.memory_space<vmem>>, vector<1x2x32xf32>,
    %c0_360 = arith.constant 0 : index
    %c0_361 = arith.constant 0 : index
    %c0_362 = arith.constant 0 : index
    %1170 = vector.load %arg18[%c0_360, %c0_361, %c0_362] : memref<8x8x32xf32, #tpu.memory_space<vmem>>, vector<8x8x32xf32>
    %1171 = vector.extract_strided_slice %1170 {offsets = [0, 0, 0], sizes = [8, 2, 32], strides = [1, 1, 1]} : vector<8x8x32xf32> to vector<8x2x32xf32>
    %c0_363 = arith.constant 0 : index
    %c0_364 = arith.constant 0 : index
    %c0_365 = arith.constant 0 : index
    %1172 = vector.load %arg14[%c0_363, %c0_364, %c0_365] : memref<8x2x32xf32, #tpu.memory_space<vmem>>, vector<8x2x32xf32>
    tpu.vector_store %arg14[%c0_363, %c0_364, %c0_365], %1171 {strides = array<i32>} : memref<8x2x32xf32, #tpu.memory_space<vmem>>, vector<8x2x32xf32>,
    return
  }
}

</mosaic_0001>

<llo_original>
// kernel: encoder_lstm_forward.1
$region0: #{encoder_lstm_forward.1}
  #allocation0 [shape = 'u32[]', space=smem, size = 0x4, offset = 0x4, fixed_abs, tag = 'smem constant byte address 0x4 - core index']
  #allocation1 [shape = 'u32[144,128]{1,0:T(1,128)}', space=vmem, size = 0x12000, scoped, tag = 'internal scratch']
  #allocation2 [shape = 'f32[8,8,128]{2,1,0:T(8,128)}', space=vmem, size = 0x8000, scoped, tag = 'scratch operand']
  #allocation3 [shape = 'f32[8,8,32]{2,1,0:T(8,128)}', space=vmem, size = 0x8000, scoped, tag = 'scratch operand']
  %s0 = inlined_call_operand.vmem [shape: s32[64,1], index: 0, kind: input, shape index: {}]
  %s1 = inlined_call_operand.vmem [shape: f32[56,32], index: 1, kind: input, shape index: {}]
  %s2 = inlined_call_operand.hbm [shape: f32[32,128], index: 2, kind: input, shape index: {}]
  %s3 = inlined_call_operand.hbm [shape: f32[32,128], index: 3, kind: input, shape index: {}]
  %s4 = inlined_call_operand.hbm [shape: f32[1,128], index: 4, kind: input, shape index: {}]
  %s5 = inlined_call_operand.hbm [shape: f32[32,128], index: 5, kind: input, shape index: {}]
  %s6 = inlined_call_operand.hbm [shape: f32[32,128], index: 6, kind: input, shape index: {}]
  %s7 = inlined_call_operand.vmem [shape: f32[1,128], index: 7, kind: input, shape index: {}]
  %s8 = inlined_call_operand.hbm [shape: f32[32,128], index: 8, kind: input, shape index: {}]
  %s9 = inlined_call_operand.hbm [shape: f32[32,128], index: 9, kind: input, shape index: {}]
  %s10 = inlined_call_operand.vmem [shape: f32[1,128], index: 10, kind: input, shape index: {}]
  %s11 = inlined_call_operand.vmem [shape: f32[32,128], index: 11, kind: input, shape index: {}]
  %s12 = inlined_call_operand.vmem [shape: f32[32,128], index: 12, kind: input, shape index: {}]
  %s13 = inlined_call_operand.vmem [shape: f32[1,128], index: 13, kind: input, shape index: {}]
  %s14 = inlined_call_operand.hbm [shape: f32[8,2,32], index: 14, kind: output, shape index: {0}]
  %s15 = inlined_call_operand.hbm [shape: f32[4,2,32], index: 15, kind: output, shape index: {1}]
  %s16 = inlined_call_operand.hbm [shape: f32[4,2,32], index: 16, kind: output, shape index: {2}]
  %17 = xla_tuple %s14, %s15, %s16
  %s18 = sld [smem:[#allocation0]]
  $region110: #{encoder_lstm_forward.1} parent=0
    _
  %s20 = ssub.s32 1, %s18
  %s21 = scalar_select 0, %s20, %s18
  $region1: #{encoder_lstm_forward.1} parent=0
    #allocation4 [shape = 'u8[16384]{0}', space=vmem, size = 0x4000, scoped, tag = 'input window, operand 2, single buffered']
    #allocation5 [shape = 's32[1]{0}', space=sflag, size = 0x4, scoped, tag = 'scoped memory for encoder_lstm_forward.1']
    #allocation6 [shape = 's32[1]{0}', space=sflag, size = 0x4, scoped, tag = 'scoped memory for encoder_lstm_forward.1']
    #allocation7 [shape = 'u8[16384]{0}', space=vmem, size = 0x4000, scoped, tag = 'input window, operand 3, single buffered']
    #allocation8 [shape = 's32[1]{0}', space=sflag, size = 0x4, scoped, tag = 'scoped memory for encoder_lstm_forward.1']
    #allocation9 [shape = 'u8[512]{0}', space=vmem, size = 0x400, scoped, tag = 'input window, operand 4, single buffered']
    #allocation10 [shape = 'u8[16384]{0}', space=vmem, size = 0x4000, scoped, tag = 'input window, operand 5, single buffered']
    #allocation11 [shape = 's32[1]{0}', space=sflag, size = 0x4, scoped, tag = 'scoped memory for encoder_lstm_forward.1']
    #allocation12 [shape = 'u8[16384]{0}', space=vmem, size = 0x4000, scoped, tag = 'input window, operand 6, single buffered']
    #allocation13 [shape = 'u8[16384]{0}', space=vmem, size = 0x4000, scoped, tag = 'input window, operand 8, single buffered']
    #allocation14 [shape = 's32[1]{0}', space=sflag, size = 0x4, scoped, tag = 'scoped memory for encoder_lstm_forward.1']
    #allocation15 [shape = 'u8[16384]{0}', space=vmem, size = 0x4000, scoped, tag = 'input window, operand 9, single buffered']
    #allocation16 [shape = 'u8[8192]{0}', space=vmem, size = 0x2000, scoped, tag = 'output window, operand 0, single buffered']
    #allocation17 [shape = 'u8[4096]{0}', space=vmem, size = 0x1000, scoped, tag = 'output window, operand 1, single buffered']
    #allocation18 [shape = 's32[1]{0}', space=sflag, size = 0x4, scoped, tag = 'scoped memory for encoder_lstm_forward.1']
    #allocation19 [shape = 'u8[4096]{0}', space=vmem, size = 0x1000, scoped, tag = 'output window, operand 2, single buffered']
    %22 = vsyncpa [#allocation5], 0
    %23 = vsyncpa [#allocation8], 0
    %24 = vsyncpa [#allocation11], 0
    %25 = vsyncpa [#allocation14], 0
    %26 = vsyncpa [#allocation6], 0
    %27 = vsyncpa [#allocation18], 0
    // Predicated region
    $region2: #{encoder_lstm_forward.1} parent=1 // pred_check
      _
    $region3: #{encoder_lstm_forward.1} parent=1 // pred_check_branch
      %29 = sbr.rel (0) target = $region5
    $region4: #{encoder_lstm_forward.1} parent=1 // pred_region
      _
    $region5: #{encoder_lstm_forward.1} parent=1 // pred_fallthru
      _
    // Predicated region
    $region6: #{encoder_lstm_forward.1} parent=1 // pred_check
      _
    $region7: #{encoder_lstm_forward.1} parent=1 // pred_check_branch
      %31 = sbr.rel (0) target = $region9
    $region8: #{encoder_lstm_forward.1} parent=1 // pred_region
      _
    $region9: #{encoder_lstm_forward.1} parent=1 // pred_fallthru
      _
    // Predicated region
    $region10: #{encoder_lstm_forward.1} parent=1 // pred_check
      _
    $region11: #{encoder_lstm_forward.1} parent=1 // pred_check_branch
      %33 = sbr.rel (0) target = $region13
    $region12: #{encoder_lstm_forward.1} parent=1 // pred_region
      %s35 = ssub.s32 512, 512
      %36 = vsyncadd [#allocation5], %s35
      %s37 = sshll.u32 [#allocation4], 4
      %s38 = int_to_ptr.vmem [resolvable:$true] %s37
      %43 = dma.hbm_to_vmem [thread:$0]  %s2, 512, %s38, [#allocation5], 128, 128, 8
    $region13: #{encoder_lstm_forward.1} parent=1 // pred_fallthru
      _
    // Predicated region
    $region14: #{encoder_lstm_forward.1} parent=1 // pred_check
      _
    $region15: #{encoder_lstm_forward.1} parent=1 // pred_check_branch
      %45 = sbr.rel (0) target = $region17
    $region16: #{encoder_lstm_forward.1} parent=1 // pred_region
      %s47 = ssub.s32 512, 512
      %48 = vsyncadd [#allocation8], %s47
      %s49 = sshll.u32 [#allocation7], 4
      %s50 = int_to_ptr.vmem [resolvable:$true] %s49
      %55 = dma.hbm_to_vmem [thread:$0]  %s3, 512, %s50, [#allocation8], 128, 128, 8
    $region17: #{encoder_lstm_forward.1} parent=1 // pred_fallthru
      _
    // Predicated region
    $region18: #{encoder_lstm_forward.1} parent=1 // pred_check
      _
    $region19: #{encoder_lstm_forward.1} parent=1 // pred_check_branch
      %57 = sbr.rel (0) target = $region21
    $region20: #{encoder_lstm_forward.1} parent=1 // pred_region
      %s59 = ssub.s32 16, 16
      %60 = vsyncadd [#allocation8], %s59
      %s62 = sshll.u32 [#allocation9], 4
      %s63 = int_to_ptr.vmem [resolvable:$true] %s62
      %65 = dma.hbm_to_vmem [thread:$0]  %s4, 16, %s63, [#allocation8]
    $region21: #{encoder_lstm_forward.1} parent=1 // pred_fallthru
      _
    // Predicated region
    $region22: #{encoder_lstm_forward.1} parent=1 // pred_check
      _
    $region23: #{encoder_lstm_forward.1} parent=1 // pred_check_branch
      %67 = sbr.rel (0) target = $region25
    $region24: #{encoder_lstm_forward.1} parent=1 // pred_region
      %s69 = ssub.s32 512, 512
      %70 = vsyncadd [#allocation11], %s69
      %s71 = sshll.u32 [#allocation10], 4
      %s72 = int_to_ptr.vmem [resolvable:$true] %s71
      %77 = dma.hbm_to_vmem [thread:$0]  %s5, 512, %s72, [#allocation11], 128, 128, 8
    $region25: #{encoder_lstm_forward.1} parent=1 // pred_fallthru
      _
    // Predicated region
    $region26: #{encoder_lstm_forward.1} parent=1 // pred_check
      _
    $region27: #{encoder_lstm_forward.1} parent=1 // pred_check_branch
      %79 = sbr.rel (0) target = $region29
    $region28: #{encoder_lstm_forward.1} parent=1 // pred_region
      %s81 = ssub.s32 512, 512
      %82 = vsyncadd [#allocation11], %s81
      %s83 = sshll.u32 [#allocation12], 4
      %s84 = int_to_ptr.vmem [resolvable:$true] %s83
      %89 = dma.hbm_to_vmem [thread:$0]  %s6, 512, %s84, [#allocation11], 128, 128, 8
    $region29: #{encoder_lstm_forward.1} parent=1 // pred_fallthru
      _
    // Predicated region
    $region30: #{encoder_lstm_forward.1} parent=1 // pred_check
      _
    $region31: #{encoder_lstm_forward.1} parent=1 // pred_check_branch
      %91 = sbr.rel (0) target = $region33
    $region32: #{encoder_lstm_forward.1} parent=1 // pred_region
      _
    $region33: #{encoder_lstm_forward.1} parent=1 // pred_fallthru
      _
    // Predicated region
    $region34: #{encoder_lstm_forward.1} parent=1 // pred_check
      _
    $region35: #{encoder_lstm_forward.1} parent=1 // pred_check_branch
      %93 = sbr.rel (0) target = $region37
    $region36: #{encoder_lstm_forward.1} parent=1 // pred_region
      %s95 = ssub.s32 512, 512
      %96 = vsyncadd [#allocation14], %s95
      %s97 = sshll.u32 [#allocation13], 4
      %s98 = int_to_ptr.vmem [resolvable:$true] %s97
      %103 = dma.hbm_to_vmem [thread:$0]  %s8, 512, %s98, [#allocation14], 128, 128, 8
    $region37: #{encoder_lstm_forward.1} parent=1 // pred_fallthru
      _
    // Predicated region
    $region38: #{encoder_lstm_forward.1} parent=1 // pred_check
      _
    $region39: #{encoder_lstm_forward.1} parent=1 // pred_check_branch
      %105 = sbr.rel (0) target = $region41
    $region40: #{encoder_lstm_forward.1} parent=1 // pred_region
      %s107 = ssub.s32 512, 512
      %108 = vsyncadd [#allocation14], %s107
      %s109 = sshll.u32 [#allocation15], 4
      %s110 = int_to_ptr.vmem [resolvable:$true] %s109
      %115 = dma.hbm_to_vmem [thread:$0]  %s9, 512, %s110, [#allocation14], 128, 128, 8
    $region41: #{encoder_lstm_forward.1} parent=1 // pred_fallthru
      _
    // Predicated region
    $region42: #{encoder_lstm_forward.1} parent=1 // pred_check
      _
    $region43: #{encoder_lstm_forward.1} parent=1 // pred_check_branch
      %117 = sbr.rel (0) target = $region45
    $region44: #{encoder_lstm_forward.1} parent=1 // pred_region
      _
    $region45: #{encoder_lstm_forward.1} parent=1 // pred_fallthru
      _
    // Predicated region
    $region46: #{encoder_lstm_forward.1} parent=1 // pred_check
      _
    $region47: #{encoder_lstm_forward.1} parent=1 // pred_check_branch
      %119 = sbr.rel (0) target = $region49
    $region48: #{encoder_lstm_forward.1} parent=1 // pred_region
      _
    $region49: #{encoder_lstm_forward.1} parent=1 // pred_fallthru
      _
    // Predicated region
    $region50: #{encoder_lstm_forward.1} parent=1 // pred_check
      _
    $region51: #{encoder_lstm_forward.1} parent=1 // pred_check_branch
      %121 = sbr.rel (0) target = $region53
    $region52: #{encoder_lstm_forward.1} parent=1 // pred_region
      _
    $region53: #{encoder_lstm_forward.1} parent=1 // pred_fallthru
      _
    // Predicated region
    $region54: #{encoder_lstm_forward.1} parent=1 // pred_check
      _
    $region55: #{encoder_lstm_forward.1} parent=1 // pred_check_branch
      %123 = sbr.rel (0) target = $region57
    $region56: #{encoder_lstm_forward.1} parent=1 // pred_region
      _
    $region57: #{encoder_lstm_forward.1} parent=1 // pred_fallthru
      _
    // Predicated region
    $region58: #{encoder_lstm_forward.1} parent=1 // pred_check
      _
    $region59: #{encoder_lstm_forward.1} parent=1 // pred_check_branch
      %125 = sbr.rel (0) target = $region61
    $region60: #{encoder_lstm_forward.1} parent=1 // pred_region
      %126 = dma.done [#allocation5], 512
    $region61: #{encoder_lstm_forward.1} parent=1 // pred_fallthru
      _
    // Predicated region
    $region62: #{encoder_lstm_forward.1} parent=1 // pred_check
      _
    $region63: #{encoder_lstm_forward.1} parent=1 // pred_check_branch
      %128 = sbr.rel (0) target = $region65
    $region64: #{encoder_lstm_forward.1} parent=1 // pred_region
      %129 = dma.done [#allocation8], 512
    $region65: #{encoder_lstm_forward.1} parent=1 // pred_fallthru
      _
    // Predicated region
    $region66: #{encoder_lstm_forward.1} parent=1 // pred_check
      _
    $region67: #{encoder_lstm_forward.1} parent=1 // pred_check_branch
      %131 = sbr.rel (0) target = $region69
    $region68: #{encoder_lstm_forward.1} parent=1 // pred_region
      %132 = dma.done [#allocation8], 16
    $region69: #{encoder_lstm_forward.1} parent=1 // pred_fallthru
      _
    // Predicated region
    $region70: #{encoder_lstm_forward.1} parent=1 // pred_check
      _
    $region71: #{encoder_lstm_forward.1} parent=1 // pred_check_branch
      %134 = sbr.rel (0) target = $region73
    $region72: #{encoder_lstm_forward.1} parent=1 // pred_region
      %135 = dma.done [#allocation11], 512
    $region73: #{encoder_lstm_forward.1} parent=1 // pred_fallthru
      _
    // Predicated region
    $region74: #{encoder_lstm_forward.1} parent=1 // pred_check
      _
    $region75: #{encoder_lstm_forward.1} parent=1 // pred_check_branch
      %137 = sbr.rel (0) target = $region77
    $region76: #{encoder_lstm_forward.1} parent=1 // pred_region
      %138 = dma.done [#allocation11], 512
    $region77: #{encoder_lstm_forward.1} parent=1 // pred_fallthru
      _
    // Predicated region
    $region78: #{encoder_lstm_forward.1} parent=1 // pred_check
      _
    $region79: #{encoder_lstm_forward.1} parent=1 // pred_check_branch
      %140 = sbr.rel (0) target = $region81
    $region80: #{encoder_lstm_forward.1} parent=1 // pred_region
      %141 = dma.done [#allocation14], 512
    $region81: #{encoder_lstm_forward.1} parent=1 // pred_fallthru
      _
    // Predicated region
    $region82: #{encoder_lstm_forward.1} parent=1 // pred_check
      _
    $region83: #{encoder_lstm_forward.1} parent=1 // pred_check_branch
      %143 = sbr.rel (0) target = $region85
    $region84: #{encoder_lstm_forward.1} parent=1 // pred_region
      %144 = dma.done [#allocation14], 512
    $region85: #{encoder_lstm_forward.1} parent=1 // pred_fallthru
      _
    %v145 = vld [vmem:[%s0] sm:$0xff]
    %v146 = vld [vmem:[%s0 + $0x8] sm:$0xff]
    %v147 = vld [vmem:[%s0 + $0x10] sm:$0xff]
    %v148 = vld [vmem:[%s0 + $0x18] sm:$0xff]
    %v149 = vld [vmem:[%s0 + $0x20] sm:$0xff]
    %v150 = vld [vmem:[%s0 + $0x28] sm:$0xff]
    %v151 = vld [vmem:[%s0 + $0x30] sm:$0xff]
    %v152 = vld [vmem:[%s0 + $0x38] sm:$0xff]
    %v153 = vlaneseq
    %v154 = vand.u32 %v153, 127
    %155 = vset.pattern.permute.xlu0 0
    %156 = vperm.xlu0 %155, %v145
    %v157 = vpop.permute.xlu0 %156
    %158 = vset.pattern.permute.xlu0 0
    %159 = vperm.xlu0 %158, %v146
    %v160 = vpop.permute.xlu0 %159
    %161 = vset.pattern.permute.xlu0 0
    %162 = vperm.xlu0 %161, %v147
    %v163 = vpop.permute.xlu0 %162
    %164 = vset.pattern.permute.xlu0 0
    %165 = vperm.xlu0 %164, %v148
    %v166 = vpop.permute.xlu0 %165
    %167 = vset.pattern.permute.xlu0 0
    %168 = vperm.xlu0 %167, %v149
    %v169 = vpop.permute.xlu0 %168
    %170 = vset.pattern.permute.xlu0 0
    %171 = vperm.xlu0 %170, %v150
    %v172 = vpop.permute.xlu0 %171
    %173 = vset.pattern.permute.xlu0 0
    %174 = vperm.xlu0 %173, %v151
    %v175 = vpop.permute.xlu0 %174
    %176 = vset.pattern.permute.xlu0 0
    %177 = vperm.xlu0 %176, %v152
    %v178 = vpop.permute.xlu0 %177
    %vm179 = vcmp.eq.s32.totalorder %v157, %v154
    %vm180 = vcmp.eq.s32.totalorder %v160, %v154
    %vm181 = vcmp.eq.s32.totalorder %v163, %v154
    %vm182 = vcmp.eq.s32.totalorder %v166, %v154
    %vm183 = vcmp.eq.s32.totalorder %v169, %v154
    %vm184 = vcmp.eq.s32.totalorder %v172, %v154
    %vm185 = vcmp.eq.s32.totalorder %v175, %v154
    %vm186 = vcmp.eq.s32.totalorder %v178, %v154
    %v187 = vsel %vm179, 1, 0
    %v188 = vsel %vm180, 1, 0
    %v189 = vsel %vm181, 1, 0
    %v190 = vsel %vm182, 1, 0
    %v191 = vsel %vm183, 1, 0
    %v192 = vsel %vm184, 1, 0
    %v193 = vsel %vm185, 1, 0
    %v194 = vsel %vm186, 1, 0
    %v195 = vcvt.s32.f32 %v187
    %v196 = vcvt.s32.f32 %v188
    %v197 = vcvt.s32.f32 %v189
    %v198 = vcvt.s32.f32 %v190
    %v199 = vcvt.s32.f32 %v191
    %v200 = vcvt.s32.f32 %v192
    %v201 = vcvt.s32.f32 %v193
    %v202 = vcvt.s32.f32 %v194
    %v203 = vld [vmem:[%s1] sm:$0xff]
    %v204 = vld [vmem:[%s1 + $0x8] sm:$0xff]
    %v205 = vld [vmem:[%s1 + $0x10] sm:$0xff]
    %v206 = vld [vmem:[%s1 + $0x18] sm:$0xff]
    %v207 = vld [vmem:[%s1 + $0x20] sm:$0xff]
    %v208 = vld [vmem:[%s1 + $0x28] sm:$0xff]
    %v209 = vld [vmem:[%s1 + $0x30] sm:$0xff]
    %vm210 = vcmask 457728
    %v212 = vsel %vm210, %v195, 0
    %v215 = vsel %vm210, %v196, 0
    %v218 = vsel %vm210, %v197, 0
    %v221 = vsel %vm210, %v198, 0
    %v224 = vsel %vm210, %v199, 0
    %v227 = vsel %vm210, %v200, 0
    %v230 = vsel %vm210, %v201, 0
    %v233 = vsel %vm210, %v202, 0
    %235 = vmatprep.subr.mxu0 0.0
    %236 = vmatpush1.msra.mxu0 %v203
    %237 = vmatprep.subr.mxu0 0.0
    %238 = vmatpush1.msra.mxu0 %v204
    %239 = vmatprep.subr.mxu0 0.0
    %240 = vmatpush1.msra.mxu0 %v205
    %241 = vmatprep.subr.mxu0 0.0
    %242 = vmatpush1.msra.mxu0 %v206
    %243 = vmatprep.subr.mxu0 0.0
    %244 = vmatpush1.msra.mxu0 %v207
    %245 = vmatprep.subr.mxu0 0.0
    %246 = vmatpush1.msra.mxu0 %v208
    %247 = vmatprep.subr.mxu0 0.0
    %248 = vmatpush1.msra.mxu0 %v209
    %249 = vmatprep.subr.mxu0 0.0
    %250 = vmatpush1.msra.mxu0 0.0
    %251 = vmatprep.subr.mxu0 0.0
    %252 = vmatpush1.msra.mxu0 0.0
    %253 = vmatprep.subr.mxu0 0.0
    %254 = vmatpush1.msra.mxu0 0.0
    %255 = vmatprep.subr.mxu0 0.0
    %256 = vmatpush1.msra.mxu0 0.0
    %257 = vmatprep.subr.mxu0 0.0
    %258 = vmatpush1.msra.mxu0 0.0
    %259 = vmatprep.subr.mxu0 0.0
    %260 = vmatpush1.msra.mxu0 0.0
    %261 = vmatprep.subr.mxu0 0.0
    %262 = vmatpush1.msra.mxu0 0.0
    %263 = vmatprep.subr.mxu0 0.0
    %264 = vmatpush1.msra.mxu0 0.0
    %265 = vmatprep.subr.mxu0 0.0
    %266 = vmatpush1.msra.mxu0 0.0
    %267 = vmatprep.subr.mxu0 0.0
    %268 = vmatpush1.msra.mxu0 0.0
    %269 = vmatprep.subr.mxu0 0.0
    %270 = vmatpush1.msra.mxu0 0.0
    %271 = vmatprep.subr.mxu0 0.0
    %272 = vmatpush1.msra.mxu0 0.0
    %273 = vmatprep.subr.mxu0 0.0
    %274 = vmatpush1.msra.mxu0 0.0
    %275 = vmatprep.subr.mxu0 0.0
    %276 = vmatpush1.msra.mxu0 0.0
    %277 = vmatprep.subr.mxu0 0.0
    %278 = vmatpush1.msra.mxu0 0.0
    %279 = vmatprep.subr.mxu0 0.0
    %280 = vmatpush1.msra.mxu0 0.0
    %281 = vmatprep.subr.mxu0 0.0
    %282 = vmatpush1.msra.mxu0 0.0
    %283 = vmatprep.subr.mxu0 0.0
    %284 = vmatpush1.msra.mxu0 0.0
    %285 = vmatprep.subr.mxu0 0.0
    %286 = vmatpush1.msra.mxu0 0.0
    %287 = vmatprep.subr.mxu0 0.0
    %288 = vmatpush1.msra.mxu0 0.0
    %289 = vmatprep.subr.mxu0 0.0
    %290 = vmatpush1.msra.mxu0 0.0
    %291 = vmatprep.subr.mxu0 0.0
    %292 = vmatpush1.msra.mxu0 0.0
    %293 = vmatprep.subr.mxu0 0.0
    %294 = vmatpush1.msra.mxu0 0.0
    %295 = vmatprep.subr.mxu0 0.0
    %296 = vmatpush1.msra.mxu0 0.0
    %297 = vmatprep.subr.mxu0 0.0
    %298 = vmatpush1.msra.mxu0 0.0
    %299 = vmatprep.mubr.f32.mxu0 0.0
    %300 = vmatmul.mubr.f32.gmra.mrb[0].mxu0 %v212
    %v301 = vpop.f32.mrb[0].mxu0
    %v302 = vadd.f32 0.0, %v301
    %v303 = vpop.f32.mrb[0].mxu0
    %304 = vmatprep.mubr.f32.mxu0 0.0
    %305 = vmatmul.mubr.f32.gmra.mrb[0].mxu0 %v215
    %v306 = vpop.f32.mrb[0].mxu0
    %v307 = vadd.f32 0.0, %v306
    %v308 = vpop.f32.mrb[0].mxu0
    %309 = vmatprep.mubr.f32.mxu0 0.0
    %310 = vmatmul.mubr.f32.gmra.mrb[0].mxu0 %v218
    %v311 = vpop.f32.mrb[0].mxu0
    %v312 = vadd.f32 0.0, %v311
    %v313 = vpop.f32.mrb[0].mxu0
    %314 = vmatprep.mubr.f32.mxu0 0.0
    %315 = vmatmul.mubr.f32.gmra.mrb[0].mxu0 %v221
    %v316 = vpop.f32.mrb[0].mxu0
    %v317 = vadd.f32 0.0, %v316
    %v318 = vpop.f32.mrb[0].mxu0
    %319 = vmatprep.mubr.f32.mxu0 0.0
    %320 = vmatmul.mubr.f32.gmra.mrb[0].mxu0 %v224
    %v321 = vpop.f32.mrb[0].mxu0
    %v322 = vadd.f32 0.0, %v321
    %v323 = vpop.f32.mrb[0].mxu0
    %324 = vmatprep.mubr.f32.mxu0 0.0
    %325 = vmatmul.mubr.f32.gmra.mrb[0].mxu0 %v227
    %v326 = vpop.f32.mrb[0].mxu0
    %v327 = vadd.f32 0.0, %v326
    %v328 = vpop.f32.mrb[0].mxu0
    %329 = vmatprep.mubr.f32.mxu0 0.0
    %330 = vmatmul.mubr.f32.gmra.mrb[0].mxu0 %v230
    %v331 = vpop.f32.mrb[0].mxu0
    %v332 = vadd.f32 0.0, %v331
    %v333 = vpop.f32.mrb[0].mxu0
    %334 = vmatprep.mubr.f32.mxu0 0.0
    %335 = vmatmul.mubr.f32.gmra.mrb[0].mxu0 %v233
    %v336 = vpop.f32.mrb[0].mxu0
    %v337 = vadd.f32 0.0, %v336
    %v338 = vpop.f32.mrb[0].mxu0
    %339 = vdwg.mxu0
    %v340 = vld [vmem:[#allocation4] sm:$0xff]
    %v341 = vld [vmem:[#allocation4 + $0x8] sm:$0xff]
    %v342 = vld [vmem:[#allocation4 + $0x10] sm:$0xff]
    %v343 = vld [vmem:[#allocation4 + $0x18] sm:$0xff]
    %v344 = vld [vmem:[#allocation7] sm:$0xff]
    %v345 = vld [vmem:[#allocation7 + $0x8] sm:$0xff]
    %v346 = vld [vmem:[#allocation7 + $0x10] sm:$0xff]
    %v347 = vld [vmem:[#allocation7 + $0x18] sm:$0xff]
    %v348 = vld [vmem:[#allocation9] sm:$0x1]
    %v350 = vlaneseq
    %v351 = vshrl.u32 %v350, 7
    %v352 = vsub.s32 0, %v351
    %v353 = vrot.slane %v348, %v352
    %vm355 = vcmask 261120
    %v357 = vsel %vm355, %v302, 0
    %v360 = vsel %vm355, %v307, 0
    %v363 = vsel %vm355, %v312, 0
    %v366 = vsel %vm355, %v317, 0
    %v369 = vsel %vm355, %v322, 0
    %v372 = vsel %vm355, %v327, 0
    %v375 = vsel %vm355, %v332, 0
    %v378 = vsel %vm355, %v337, 0
    %380 = vmatprep.subr.mxu0 0.0
    %381 = vmatpush1.msra.mxu0 %v340
    %382 = vmatprep.subr.mxu0 0.0
    %383 = vmatpush1.msra.mxu0 %v341
    %384 = vmatprep.subr.mxu0 0.0
    %385 = vmatpush1.msra.mxu0 %v342
    %386 = vmatprep.subr.mxu0 0.0
    %387 = vmatpush1.msra.mxu0 %v343
    %388 = vmatprep.subr.mxu0 0.0
    %389 = vmatpush1.msra.mxu0 0.0
    %390 = vmatprep.subr.mxu0 0.0
    %391 = vmatpush1.msra.mxu0 0.0
    %392 = vmatprep.subr.mxu0 0.0
    %393 = vmatpush1.msra.mxu0 0.0
    %394 = vmatprep.subr.mxu0 0.0
    %395 = vmatpush1.msra.mxu0 0.0
    %396 = vmatprep.subr.mxu0 0.0
    %397 = vmatpush1.msra.mxu0 0.0
    %398 = vmatprep.subr.mxu0 0.0
    %399 = vmatpush1.msra.mxu0 0.0
    %400 = vmatprep.subr.mxu0 0.0
    %401 = vmatpush1.msra.mxu0 0.0
    %402 = vmatprep.subr.mxu0 0.0
    %403 = vmatpush1.msra.mxu0 0.0
    %404 = vmatprep.subr.mxu0 0.0
    %405 = vmatpush1.msra.mxu0 0.0
    %406 = vmatprep.subr.mxu0 0.0
    %407 = vmatpush1.msra.mxu0 0.0
    %408 = vmatprep.subr.mxu0 0.0
    %409 = vmatpush1.msra.mxu0 0.0
    %410 = vmatprep.subr.mxu0 0.0
    %411 = vmatpush1.msra.mxu0 0.0
    %412 = vmatprep.subr.mxu0 0.0
    %413 = vmatpush1.msra.mxu0 0.0
    %414 = vmatprep.subr.mxu0 0.0
    %415 = vmatpush1.msra.mxu0 0.0
    %416 = vmatprep.subr.mxu0 0.0
    %417 = vmatpush1.msra.mxu0 0.0
    %418 = vmatprep.subr.mxu0 0.0
    %419 = vmatpush1.msra.mxu0 0.0
    %420 = vmatprep.subr.mxu0 0.0
    %421 = vmatpush1.msra.mxu0 0.0
    %422 = vmatprep.subr.mxu0 0.0
    %423 = vmatpush1.msra.mxu0 0.0
    %424 = vmatprep.subr.mxu0 0.0
    %425 = vmatpush1.msra.mxu0 0.0
    %426 = vmatprep.subr.mxu0 0.0
    %427 = vmatpush1.msra.mxu0 0.0
    %428 = vmatprep.subr.mxu0 0.0
    %429 = vmatpush1.msra.mxu0 0.0
    %430 = vmatprep.subr.mxu0 0.0
    %431 = vmatpush1.msra.mxu0 0.0
    %432 = vmatprep.subr.mxu0 0.0
    %433 = vmatpush1.msra.mxu0 0.0
    %434 = vmatprep.subr.mxu0 0.0
    %435 = vmatpush1.msra.mxu0 0.0
    %436 = vmatprep.subr.mxu0 0.0
    %437 = vmatpush1.msra.mxu0 0.0
    %438 = vmatprep.subr.mxu0 0.0
    %439 = vmatpush1.msra.mxu0 0.0
    %440 = vmatprep.subr.mxu0 0.0
    %441 = vmatpush1.msra.mxu0 0.0
    %442 = vmatprep.subr.mxu0 0.0
    %443 = vmatpush1.msra.mxu0 0.0
    %444 = vmatprep.mubr.f32.mxu0 0.0
    %445 = vmatmul.mubr.f32.gmra.mrb[0].mxu0 %v357
    %v446 = vpop.f32.mrb[0].mxu0
    %v447 = vadd.f32 %v353, %v446
    %v448 = vpop.f32.mrb[0].mxu0
    %449 = vmatprep.mubr.f32.mxu0 0.0
    %450 = vmatmul.mubr.f32.gmra.mrb[0].mxu0 %v360
    %v451 = vpop.f32.mrb[0].mxu0
    %v452 = vadd.f32 %v353, %v451
    %v453 = vpop.f32.mrb[0].mxu0
    %454 = vmatprep.mubr.f32.mxu0 0.0
    %455 = vmatmul.mubr.f32.gmra.mrb[0].mxu0 %v363
    %v456 = vpop.f32.mrb[0].mxu0
    %v457 = vadd.f32 %v353, %v456
    %v458 = vpop.f32.mrb[0].mxu0
    %459 = vmatprep.mubr.f32.mxu0 0.0
    %460 = vmatmul.mubr.f32.gmra.mrb[0].mxu0 %v366
    %v461 = vpop.f32.mrb[0].mxu0
    %v462 = vadd.f32 %v353, %v461
    %v463 = vpop.f32.mrb[0].mxu0
    %464 = vmatprep.mubr.f32.mxu0 0.0
    %465 = vmatmul.mubr.f32.gmra.mrb[0].mxu0 %v369
    %v466 = vpop.f32.mrb[0].mxu0
    %v467 = vadd.f32 %v353, %v466
    %v468 = vpop.f32.mrb[0].mxu0
    %469 = vmatprep.mubr.f32.mxu0 0.0
    %470 = vmatmul.mubr.f32.gmra.mrb[0].mxu0 %v372
    %v471 = vpop.f32.mrb[0].mxu0
    %v472 = vadd.f32 %v353, %v471
    %v473 = vpop.f32.mrb[0].mxu0
    %474 = vmatprep.mubr.f32.mxu0 0.0
    %475 = vmatmul.mubr.f32.gmra.mrb[0].mxu0 %v375
    %v476 = vpop.f32.mrb[0].mxu0
    %v477 = vadd.f32 %v353, %v476
    %v478 = vpop.f32.mrb[0].mxu0
    %479 = vmatprep.mubr.f32.mxu0 0.0
    %480 = vmatmul.mubr.f32.gmra.mrb[0].mxu0 %v378
    %v481 = vpop.f32.mrb[0].mxu0
    %v482 = vadd.f32 %v353, %v481
    %v483 = vpop.f32.mrb[0].mxu0
    %484 = vdwg.mxu0
    %485 = vst [vmem:[#allocation2] sm:$0xff] %v447
    %486 = vst [vmem:[#allocation2 + $0x8] sm:$0xff] %v452
    %487 = vst [vmem:[#allocation2 + $0x10] sm:$0xff] %v457
    %488 = vst [vmem:[#allocation2 + $0x18] sm:$0xff] %v462
    %489 = vst [vmem:[#allocation2 + $0x20] sm:$0xff] %v467
    %490 = vst [vmem:[#allocation2 + $0x28] sm:$0xff] %v472
    %491 = vst [vmem:[#allocation2 + $0x30] sm:$0xff] %v477
    %492 = vst [vmem:[#allocation2 + $0x38] sm:$0xff] %v482
    %v493 = vld [vmem:[#allocation2] sm:$0xff]
    %v495 = vsel %vm355, 0.0, 0
    %497 = vmatprep.subr.mxu0 0.0
    %498 = vmatpush1.msra.mxu0 %v344
    %499 = vmatprep.subr.mxu0 0.0
    %500 = vmatpush1.msra.mxu0 %v345
    %501 = vmatprep.subr.mxu0 0.0
    %502 = vmatpush1.msra.mxu0 %v346
    %503 = vmatprep.subr.mxu0 0.0
    %504 = vmatpush1.msra.mxu0 %v347
    %505 = vmatprep.subr.mxu0 0.0
    %506 = vmatpush1.msra.mxu0 0.0
    %507 = vmatprep.subr.mxu0 0.0
    %508 = vmatpush1.msra.mxu0 0.0
    %509 = vmatprep.subr.mxu0 0.0
    %510 = vmatpush1.msra.mxu0 0.0
    %511 = vmatprep.subr.mxu0 0.0
    %512 = vmatpush1.msra.mxu0 0.0
    %513 = vmatprep.subr.mxu0 0.0
    %514 = vmatpush1.msra.mxu0 0.0
    %515 = vmatprep.subr.mxu0 0.0
    %516 = vmatpush1.msra.mxu0 0.0
    %517 = vmatprep.subr.mxu0 0.0
    %518 = vmatpush1.msra.mxu0 0.0
    %519 = vmatprep.subr.mxu0 0.0
    %520 = vmatpush1.msra.mxu0 0.0
    %521 = vmatprep.subr.mxu0 0.0
    %522 = vmatpush1.msra.mxu0 0.0
    %523 = vmatprep.subr.mxu0 0.0
    %524 = vmatpush1.msra.mxu0 0.0
    %525 = vmatprep.subr.mxu0 0.0
    %526 = vmatpush1.msra.mxu0 0.0
    %527 = vmatprep.subr.mxu0 0.0
    %528 = vmatpush1.msra.mxu0 0.0
    %529 = vmatprep.subr.mxu0 0.0
    %530 = vmatpush1.msra.mxu0 0.0
    %531 = vmatprep.subr.mxu0 0.0
    %532 = vmatpush1.msra.mxu0 0.0
    %533 = vmatprep.subr.mxu0 0.0
    %534 = vmatpush1.msra.mxu0 0.0
    %535 = vmatprep.subr.mxu0 0.0
    %536 = vmatpush1.msra.mxu0 0.0
    %537 = vmatprep.subr.mxu0 0.0
    %538 = vmatpush1.msra.mxu0 0.0
    %539 = vmatprep.subr.mxu0 0.0
    %540 = vmatpush1.msra.mxu0 0.0
    %541 = vmatprep.subr.mxu0 0.0
    %542 = vmatpush1.msra.mxu0 0.0
    %543 = vmatprep.subr.mxu0 0.0
    %544 = vmatpush1.msra.mxu0 0.0
    %545 = vmatprep.subr.mxu0 0.0
    %546 = vmatpush1.msra.mxu0 0.0
    %547 = vmatprep.subr.mxu0 0.0
    %548 = vmatpush1.msra.mxu0 0.0
    %549 = vmatprep.subr.mxu0 0.0
    %550 = vmatpush1.msra.mxu0 0.0
    %551 = vmatprep.subr.mxu0 0.0
    %552 = vmatpush1.msra.mxu0 0.0
    %553 = vmatprep.subr.mxu0 0.0
    %554 = vmatpush1.msra.mxu0 0.0
    %555 = vmatprep.subr.mxu0 0.0
    %556 = vmatpush1.msra.mxu0 0.0
    %557 = vmatprep.subr.mxu0 0.0
    %558 = vmatpush1.msra.mxu0 0.0
    %559 = vmatprep.subr.mxu0 0.0
    %560 = vmatpush1.msra.mxu0 0.0
    %561 = vmatprep.mubr.f32.mxu0 0.0
    %562 = vmatmul.mubr.f32.gmra.mrb[0].mxu0 %v495
    %v563 = vpop.f32.mrb[0].mxu0
    %v564 = vadd.f32 0.0, %v563
    %v565 = vpop.f32.mrb[0].mxu0
    %566 = vdwg.mxu0
    %v567 = vadd.f32 %v493, %v564
    %v568 = vxor.u32 %v567, 2147483648
    %v569 = vmul.f32 %v568, 1.442695
    %v570 = vpow.pop %v569
    %v571 = vadd.f32 %v570, 1.0
    %v572 = vrcp.pop %v571
    %v573 = vmul.f32 1.0, %v572
    %v574 = vtanh.pop %v567
    %v575 = vmul.f32 %v573, 0.0
    %577 = vrot.lane.b32.xlu0 %v574, 64
    %v578 = vpop.permute.xlu0 %577
    %v580 = vmul.f32 %v573, %v578
    %582 = vrot.lane.b32.xlu0 %v580, 32
    %v583 = vpop.permute.xlu0 %582
    %v585 = vadd.f32 %v575, %v583
    %v586 = vtanh.pop %v585
    %588 = vrot.lane.b32.xlu0 %v586, 64
    %v589 = vpop.permute.xlu0 %588
    %v591 = vmul.f32 %v573, %v589
    %593 = vrot.lane.b32.xlu0 %v591, 32
    %v594 = vpop.permute.xlu0 %593
    %596 = vst.msk [vmem:[#allocation3] sm:$0xff] %vm355, %v594
    %s597 = scalar_lea.vmem [#allocation2], 8
    %v598 = vld [vmem:[%s597] sm:$0xff]
    %v599 = vsel %vm355, %v594, 0
    %601 = vmatprep.subr.mxu0 0.0
    %602 = vmatpush1.msra.mxu0 %v344
    %603 = vmatprep.subr.mxu0 0.0
    %604 = vmatpush1.msra.mxu0 %v345
    %605 = vmatprep.subr.mxu0 0.0
    %606 = vmatpush1.msra.mxu0 %v346
    %607 = vmatprep.subr.mxu0 0.0
    %608 = vmatpush1.msra.mxu0 %v347
    %609 = vmatprep.subr.mxu0 0.0
    %610 = vmatpush1.msra.mxu0 0.0
    %611 = vmatprep.subr.mxu0 0.0
    %612 = vmatpush1.msra.mxu0 0.0
    %613 = vmatprep.subr.mxu0 0.0
    %614 = vmatpush1.msra.mxu0 0.0
    %615 = vmatprep.subr.mxu0 0.0
    %616 = vmatpush1.msra.mxu0 0.0
    %617 = vmatprep.subr.mxu0 0.0
    %618 = vmatpush1.msra.mxu0 0.0
    %619 = vmatprep.subr.mxu0 0.0
    %620 = vmatpush1.msra.mxu0 0.0
    %621 = vmatprep.subr.mxu0 0.0
    %622 = vmatpush1.msra.mxu0 0.0
    %623 = vmatprep.subr.mxu0 0.0
    %624 = vmatpush1.msra.mxu0 0.0
    %625 = vmatprep.subr.mxu0 0.0
    %626 = vmatpush1.msra.mxu0 0.0
    %627 = vmatprep.subr.mxu0 0.0
    %628 = vmatpush1.msra.mxu0 0.0
    %629 = vmatprep.subr.mxu0 0.0
    %630 = vmatpush1.msra.mxu0 0.0
    %631 = vmatprep.subr.mxu0 0.0
    %632 = vmatpush1.msra.mxu0 0.0
    %633 = vmatprep.subr.mxu0 0.0
    %634 = vmatpush1.msra.mxu0 0.0
    %635 = vmatprep.subr.mxu0 0.0
    %636 = vmatpush1.msra.mxu0 0.0
    %637 = vmatprep.subr.mxu0 0.0
    %638 = vmatpush1.msra.mxu0 0.0
    %639 = vmatprep.subr.mxu0 0.0
    %640 = vmatpush1.msra.mxu0 0.0
    %641 = vmatprep.subr.mxu0 0.0
    %642 = vmatpush1.msra.mxu0 0.0
    %643 = vmatprep.subr.mxu0 0.0
    %644 = vmatpush1.msra.mxu0 0.0
    %645 = vmatprep.subr.mxu0 0.0
    %646 = vmatpush1.msra.mxu0 0.0
    %647 = vmatprep.subr.mxu0 0.0
    %648 = vmatpush1.msra.mxu0 0.0
    %649 = vmatprep.subr.mxu0 0.0
    %650 = vmatpush1.msra.mxu0 0.0
    %651 = vmatprep.subr.mxu0 0.0
    %652 = vmatpush1.msra.mxu0 0.0
    %653 = vmatprep.subr.mxu0 0.0
    %654 = vmatpush1.msra.mxu0 0.0
    %655 = vmatprep.subr.mxu0 0.0
    %656 = vmatpush1.msra.mxu0 0.0
    %657 = vmatprep.subr.mxu0 0.0
    %658 = vmatpush1.msra.mxu0 0.0
    %659 = vmatprep.subr.mxu0 0.0
    %660 = vmatpush1.msra.mxu0 0.0
    %661 = vmatprep.subr.mxu0 0.0
    %662 = vmatpush1.msra.mxu0 0.0
    %663 = vmatprep.subr.mxu0 0.0
    %664 = vmatpush1.msra.mxu0 0.0
    %665 = vmatprep.mubr.f32.mxu0 0.0
    %666 = vmatmul.mubr.f32.gmra.mrb[0].mxu0 %v599
    %v667 = vpop.f32.mrb[0].mxu0
    %v668 = vadd.f32 0.0, %v667
    %v669 = vpop.f32.mrb[0].mxu0
    %670 = vdwg.mxu0
    %v671 = vadd.f32 %v598, %v668
    %v672 = vxor.u32 %v671, 2147483648
    %v673 = vmul.f32 %v672, 1.442695
    %v674 = vpow.pop %v673
    %v675 = vadd.f32 %v674, 1.0
    %v676 = vrcp.pop %v675
    %v677 = vmul.f32 1.0, %v676
    %v678 = vtanh.pop %v671
    %v679 = vmul.f32 %v677, %v585
    %681 = vrot.lane.b32.xlu0 %v678, 64
    %v682 = vpop.permute.xlu0 %681
    %v684 = vmul.f32 %v677, %v682
    %686 = vrot.lane.b32.xlu0 %v684, 32
    %v687 = vpop.permute.xlu0 %686
    %v689 = vadd.f32 %v679, %v687
    %v690 = vtanh.pop %v689
    %692 = vrot.lane.b32.xlu0 %v690, 64
    %v693 = vpop.permute.xlu0 %692
    %v695 = vmul.f32 %v677, %v693
    %697 = vrot.lane.b32.xlu0 %v695, 32
    %v698 = vpop.permute.xlu0 %697
    %s700 = scalar_lea.vmem [#allocation3], 8
    %701 = vst.msk [vmem:[%s700] sm:$0xff] %vm355, %v698
    %s702 = scalar_lea.vmem [#allocation2], 16
    %v703 = vld [vmem:[%s702] sm:$0xff]
    %v704 = vsel %vm355, %v698, 0
    %706 = vmatprep.subr.mxu0 0.0
    %707 = vmatpush1.msra.mxu0 %v344
    %708 = vmatprep.subr.mxu0 0.0
    %709 = vmatpush1.msra.mxu0 %v345
    %710 = vmatprep.subr.mxu0 0.0
    %711 = vmatpush1.msra.mxu0 %v346
    %712 = vmatprep.subr.mxu0 0.0
    %713 = vmatpush1.msra.mxu0 %v347
    %714 = vmatprep.subr.mxu0 0.0
    %715 = vmatpush1.msra.mxu0 0.0
    %716 = vmatprep.subr.mxu0 0.0
    %717 = vmatpush1.msra.mxu0 0.0
    %718 = vmatprep.subr.mxu0 0.0
    %719 = vmatpush1.msra.mxu0 0.0
    %720 = vmatprep.subr.mxu0 0.0
    %721 = vmatpush1.msra.mxu0 0.0
    %722 = vmatprep.subr.mxu0 0.0
    %723 = vmatpush1.msra.mxu0 0.0
    %724 = vmatprep.subr.mxu0 0.0
    %725 = vmatpush1.msra.mxu0 0.0
    %726 = vmatprep.subr.mxu0 0.0
    %727 = vmatpush1.msra.mxu0 0.0
    %728 = vmatprep.subr.mxu0 0.0
    %729 = vmatpush1.msra.mxu0 0.0
    %730 = vmatprep.subr.mxu0 0.0
    %731 = vmatpush1.msra.mxu0 0.0
    %732 = vmatprep.subr.mxu0 0.0
    %733 = vmatpush1.msra.mxu0 0.0
    %734 = vmatprep.subr.mxu0 0.0
    %735 = vmatpush1.msra.mxu0 0.0
    %736 = vmatprep.subr.mxu0 0.0
    %737 = vmatpush1.msra.mxu0 0.0
    %738 = vmatprep.subr.mxu0 0.0
    %739 = vmatpush1.msra.mxu0 0.0
    %740 = vmatprep.subr.mxu0 0.0
    %741 = vmatpush1.msra.mxu0 0.0
    %742 = vmatprep.subr.mxu0 0.0
    %743 = vmatpush1.msra.mxu0 0.0
    %744 = vmatprep.subr.mxu0 0.0
    %745 = vmatpush1.msra.mxu0 0.0
    %746 = vmatprep.subr.mxu0 0.0
    %747 = vmatpush1.msra.mxu0 0.0
    %748 = vmatprep.subr.mxu0 0.0
    %749 = vmatpush1.msra.mxu0 0.0
    %750 = vmatprep.subr.mxu0 0.0
    %751 = vmatpush1.msra.mxu0 0.0
    %752 = vmatprep.subr.mxu0 0.0
    %753 = vmatpush1.msra.mxu0 0.0
    %754 = vmatprep.subr.mxu0 0.0
    %755 = vmatpush1.msra.mxu0 0.0
    %756 = vmatprep.subr.mxu0 0.0
    %757 = vmatpush1.msra.mxu0 0.0
    %758 = vmatprep.subr.mxu0 0.0
    %759 = vmatpush1.msra.mxu0 0.0
    %760 = vmatprep.subr.mxu0 0.0
    %761 = vmatpush1.msra.mxu0 0.0
    %762 = vmatprep.subr.mxu0 0.0
    %763 = vmatpush1.msra.mxu0 0.0
    %764 = vmatprep.subr.mxu0 0.0
    %765 = vmatpush1.msra.mxu0 0.0
    %766 = vmatprep.subr.mxu0 0.0
    %767 = vmatpush1.msra.mxu0 0.0
    %768 = vmatprep.subr.mxu0 0.0
    %769 = vmatpush1.msra.mxu0 0.0
    %770 = vmatprep.mubr.f32.mxu0 0.0
    %771 = vmatmul.mubr.f32.gmra.mrb[0].mxu0 %v704
    %v772 = vpop.f32.mrb[0].mxu0
    %v773 = vadd.f32 0.0, %v772
    %v774 = vpop.f32.mrb[0].mxu0
    %775 = vdwg.mxu0
    %v776 = vadd.f32 %v703, %v773
    %v777 = vxor.u32 %v776, 2147483648
    %v778 = vmul.f32 %v777, 1.442695
    %v779 = vpow.pop %v778
    %v780 = vadd.f32 %v779, 1.0
    %v781 = vrcp.pop %v780
    %v782 = vmul.f32 1.0, %v781
    %v783 = vtanh.pop %v776
    %v784 = vmul.f32 %v782, %v689
    %786 = vrot.lane.b32.xlu0 %v783, 64
    %v787 = vpop.permute.xlu0 %786
    %v789 = vmul.f32 %v782, %v787
    %791 = vrot.lane.b32.xlu0 %v789, 32
    %v792 = vpop.permute.xlu0 %791
    %v794 = vadd.f32 %v784, %v792
    %v795 = vtanh.pop %v794
    %797 = vrot.lane.b32.xlu0 %v795, 64
    %v798 = vpop.permute.xlu0 %797
    %v800 = vmul.f32 %v782, %v798
    %802 = vrot.lane.b32.xlu0 %v800, 32
    %v803 = vpop.permute.xlu0 %802
    %s805 = scalar_lea.vmem [#allocation3], 16
    %806 = vst.msk [vmem:[%s805] sm:$0xff] %vm355, %v803
    %s807 = scalar_lea.vmem [#allocation2], 24
    %v808 = vld [vmem:[%s807] sm:$0xff]
    %v809 = vsel %vm355, %v803, 0
    %811 = vmatprep.subr.mxu0 0.0
    %812 = vmatpush1.msra.mxu0 %v344
    %813 = vmatprep.subr.mxu0 0.0
    %814 = vmatpush1.msra.mxu0 %v345
    %815 = vmatprep.subr.mxu0 0.0
    %816 = vmatpush1.msra.mxu0 %v346
    %817 = vmatprep.subr.mxu0 0.0
    %818 = vmatpush1.msra.mxu0 %v347
    %819 = vmatprep.subr.mxu0 0.0
    %820 = vmatpush1.msra.mxu0 0.0
    %821 = vmatprep.subr.mxu0 0.0
    %822 = vmatpush1.msra.mxu0 0.0
    %823 = vmatprep.subr.mxu0 0.0
    %824 = vmatpush1.msra.mxu0 0.0
    %825 = vmatprep.subr.mxu0 0.0
    %826 = vmatpush1.msra.mxu0 0.0
    %827 = vmatprep.subr.mxu0 0.0
    %828 = vmatpush1.msra.mxu0 0.0
    %829 = vmatprep.subr.mxu0 0.0
    %830 = vmatpush1.msra.mxu0 0.0
    %831 = vmatprep.subr.mxu0 0.0
    %832 = vmatpush1.msra.mxu0 0.0
    %833 = vmatprep.subr.mxu0 0.0
    %834 = vmatpush1.msra.mxu0 0.0
    %835 = vmatprep.subr.mxu0 0.0
    %836 = vmatpush1.msra.mxu0 0.0
    %837 = vmatprep.subr.mxu0 0.0
    %838 = vmatpush1.msra.mxu0 0.0
    %839 = vmatprep.subr.mxu0 0.0
    %840 = vmatpush1.msra.mxu0 0.0
    %841 = vmatprep.subr.mxu0 0.0
    %842 = vmatpush1.msra.mxu0 0.0
    %843 = vmatprep.subr.mxu0 0.0
    %844 = vmatpush1.msra.mxu0 0.0
    %845 = vmatprep.subr.mxu0 0.0
    %846 = vmatpush1.msra.mxu0 0.0
    %847 = vmatprep.subr.mxu0 0.0
    %848 = vmatpush1.msra.mxu0 0.0
    %849 = vmatprep.subr.mxu0 0.0
    %850 = vmatpush1.msra.mxu0 0.0
    %851 = vmatprep.subr.mxu0 0.0
    %852 = vmatpush1.msra.mxu0 0.0
    %853 = vmatprep.subr.mxu0 0.0
    %854 = vmatpush1.msra.mxu0 0.0
    %855 = vmatprep.subr.mxu0 0.0
    %856 = vmatpush1.msra.mxu0 0.0
    %857 = vmatprep.subr.mxu0 0.0
    %858 = vmatpush1.msra.mxu0 0.0
    %859 = vmatprep.subr.mxu0 0.0
    %860 = vmatpush1.msra.mxu0 0.0
    %861 = vmatprep.subr.mxu0 0.0
    %862 = vmatpush1.msra.mxu0 0.0
    %863 = vmatprep.subr.mxu0 0.0
    %864 = vmatpush1.msra.mxu0 0.0
    %865 = vmatprep.subr.mxu0 0.0
    %866 = vmatpush1.msra.mxu0 0.0
    %867 = vmatprep.subr.mxu0 0.0
    %868 = vmatpush1.msra.mxu0 0.0
    %869 = vmatprep.subr.mxu0 0.0
    %870 = vmatpush1.msra.mxu0 0.0
    %871 = vmatprep.subr.mxu0 0.0
    %872 = vmatpush1.msra.mxu0 0.0
    %873 = vmatprep.subr.mxu0 0.0
    %874 = vmatpush1.msra.mxu0 0.0
    %875 = vmatprep.mubr.f32.mxu0 0.0
    %876 = vmatmul.mubr.f32.gmra.mrb[0].mxu0 %v809
    %v877 = vpop.f32.mrb[0].mxu0
    %v878 = vadd.f32 0.0, %v877
    %v879 = vpop.f32.mrb[0].mxu0
    %880 = vdwg.mxu0
    %v881 = vadd.f32 %v808, %v878
    %v882 = vxor.u32 %v881, 2147483648
    %v883 = vmul.f32 %v882, 1.442695
    %v884 = vpow.pop %v883
    %v885 = vadd.f32 %v884, 1.0
    %v886 = vrcp.pop %v885
    %v887 = vmul.f32 1.0, %v886
    %v888 = vtanh.pop %v881
    %v889 = vmul.f32 %v887, %v794
    %891 = vrot.lane.b32.xlu0 %v888, 64
    %v892 = vpop.permute.xlu0 %891
    %v894 = vmul.f32 %v887, %v892
    %896 = vrot.lane.b32.xlu0 %v894, 32
    %v897 = vpop.permute.xlu0 %896
    %v899 = vadd.f32 %v889, %v897
    %v900 = vtanh.pop %v899
    %902 = vrot.lane.b32.xlu0 %v900, 64
    %v903 = vpop.permute.xlu0 %902
    %v905 = vmul.f32 %v887, %v903
    %907 = vrot.lane.b32.xlu0 %v905, 32
    %v908 = vpop.permute.xlu0 %907
    %s910 = scalar_lea.vmem [#allocation3], 24
    %911 = vst.msk [vmem:[%s910] sm:$0xff] %vm355, %v908
    %s912 = scalar_lea.vmem [#allocation2], 32
    %v913 = vld [vmem:[%s912] sm:$0xff]
    %v914 = vsel %vm355, %v908, 0
    %916 = vmatprep.subr.mxu0 0.0
    %917 = vmatpush1.msra.mxu0 %v344
    %918 = vmatprep.subr.mxu0 0.0
    %919 = vmatpush1.msra.mxu0 %v345
    %920 = vmatprep.subr.mxu0 0.0
    %921 = vmatpush1.msra.mxu0 %v346
    %922 = vmatprep.subr.mxu0 0.0
    %923 = vmatpush1.msra.mxu0 %v347
    %924 = vmatprep.subr.mxu0 0.0
    %925 = vmatpush1.msra.mxu0 0.0
    %926 = vmatprep.subr.mxu0 0.0
    %927 = vmatpush1.msra.mxu0 0.0
    %928 = vmatprep.subr.mxu0 0.0
    %929 = vmatpush1.msra.mxu0 0.0
    %930 = vmatprep.subr.mxu0 0.0
    %931 = vmatpush1.msra.mxu0 0.0
    %932 = vmatprep.subr.mxu0 0.0
    %933 = vmatpush1.msra.mxu0 0.0
    %934 = vmatprep.subr.mxu0 0.0
    %935 = vmatpush1.msra.mxu0 0.0
    %936 = vmatprep.subr.mxu0 0.0
    %937 = vmatpush1.msra.mxu0 0.0
    %938 = vmatprep.subr.mxu0 0.0
    %939 = vmatpush1.msra.mxu0 0.0
    %940 = vmatprep.subr.mxu0 0.0
    %941 = vmatpush1.msra.mxu0 0.0
    %942 = vmatprep.subr.mxu0 0.0
    %943 = vmatpush1.msra.mxu0 0.0
    %944 = vmatprep.subr.mxu0 0.0
    %945 = vmatpush1.msra.mxu0 0.0
    %946 = vmatprep.subr.mxu0 0.0
    %947 = vmatpush1.msra.mxu0 0.0
    %948 = vmatprep.subr.mxu0 0.0
    %949 = vmatpush1.msra.mxu0 0.0
    %950 = vmatprep.subr.mxu0 0.0
    %951 = vmatpush1.msra.mxu0 0.0
    %952 = vmatprep.subr.mxu0 0.0
    %953 = vmatpush1.msra.mxu0 0.0
    %954 = vmatprep.subr.mxu0 0.0
    %955 = vmatpush1.msra.mxu0 0.0
    %956 = vmatprep.subr.mxu0 0.0
    %957 = vmatpush1.msra.mxu0 0.0
    %958 = vmatprep.subr.mxu0 0.0
    %959 = vmatpush1.msra.mxu0 0.0
    %960 = vmatprep.subr.mxu0 0.0
    %961 = vmatpush1.msra.mxu0 0.0
    %962 = vmatprep.subr.mxu0 0.0
    %963 = vmatpush1.msra.mxu0 0.0
    %964 = vmatprep.subr.mxu0 0.0
    %965 = vmatpush1.msra.mxu0 0.0
    %966 = vmatprep.subr.mxu0 0.0
    %967 = vmatpush1.msra.mxu0 0.0
    %968 = vmatprep.subr.mxu0 0.0
    %969 = vmatpush1.msra.mxu0 0.0
    %970 = vmatprep.subr.mxu0 0.0
    %971 = vmatpush1.msra.mxu0 0.0
    %972 = vmatprep.subr.mxu0 0.0
    %973 = vmatpush1.msra.mxu0 0.0
    %974 = vmatprep.subr.mxu0 0.0
    %975 = vmatpush1.msra.mxu0 0.0
    %976 = vmatprep.subr.mxu0 0.0
    %977 = vmatpush1.msra.mxu0 0.0
    %978 = vmatprep.subr.mxu0 0.0
    %979 = vmatpush1.msra.mxu0 0.0
    %980 = vmatprep.mubr.f32.mxu0 0.0
    %981 = vmatmul.mubr.f32.gmra.mrb[0].mxu0 %v914
    %v982 = vpop.f32.mrb[0].mxu0
    %v983 = vadd.f32 0.0, %v982
    %v984 = vpop.f32.mrb[0].mxu0
    %985 = vdwg.mxu0
    %v986 = vadd.f32 %v913, %v983
    %v987 = vxor.u32 %v986, 2147483648
    %v988 = vmul.f32 %v987, 1.442695
    %v989 = vpow.pop %v988
    %v990 = vadd.f32 %v989, 1.0
    %v991 = vrcp.pop %v990
    %v992 = vmul.f32 1.0, %v991
    %v993 = vtanh.pop %v986
    %v994 = vmul.f32 %v992, %v899
    %996 = vrot.lane.b32.xlu0 %v993, 64
    %v997 = vpop.permute.xlu0 %996
    %v999 = vmul.f32 %v992, %v997
    %1001 = vrot.lane.b32.xlu0 %v999, 32
    %v1002 = vpop.permute.xlu0 %1001
    %v1004 = vadd.f32 %v994, %v1002
    %v1005 = vtanh.pop %v1004
    %1007 = vrot.lane.b32.xlu0 %v1005, 64
    %v1008 = vpop.permute.xlu0 %1007
    %v1010 = vmul.f32 %v992, %v1008
    %1012 = vrot.lane.b32.xlu0 %v1010, 32
    %v1013 = vpop.permute.xlu0 %1012
    %s1015 = scalar_lea.vmem [#allocation3], 32
    %1016 = vst.msk [vmem:[%s1015] sm:$0xff] %vm355, %v1013
    %s1017 = scalar_lea.vmem [#allocation2], 40
    %v1018 = vld [vmem:[%s1017] sm:$0xff]
    %v1019 = vsel %vm355, %v1013, 0
    %1021 = vmatprep.subr.mxu0 0.0
    %1022 = vmatpush1.msra.mxu0 %v344
    %1023 = vmatprep.subr.mxu0 0.0
    %1024 = vmatpush1.msra.mxu0 %v345
    %1025 = vmatprep.subr.mxu0 0.0
    %1026 = vmatpush1.msra.mxu0 %v346
    %1027 = vmatprep.subr.mxu0 0.0
    %1028 = vmatpush1.msra.mxu0 %v347
    %1029 = vmatprep.subr.mxu0 0.0
    %1030 = vmatpush1.msra.mxu0 0.0
    %1031 = vmatprep.subr.mxu0 0.0
    %1032 = vmatpush1.msra.mxu0 0.0
    %1033 = vmatprep.subr.mxu0 0.0
    %1034 = vmatpush1.msra.mxu0 0.0
    %1035 = vmatprep.subr.mxu0 0.0
    %1036 = vmatpush1.msra.mxu0 0.0
    %1037 = vmatprep.subr.mxu0 0.0
    %1038 = vmatpush1.msra.mxu0 0.0
    %1039 = vmatprep.subr.mxu0 0.0
    %1040 = vmatpush1.msra.mxu0 0.0
    %1041 = vmatprep.subr.mxu0 0.0
    %1042 = vmatpush1.msra.mxu0 0.0
    %1043 = vmatprep.subr.mxu0 0.0
    %1044 = vmatpush1.msra.mxu0 0.0
    %1045 = vmatprep.subr.mxu0 0.0
    %1046 = vmatpush1.msra.mxu0 0.0
    %1047 = vmatprep.subr.mxu0 0.0
    %1048 = vmatpush1.msra.mxu0 0.0
    %1049 = vmatprep.subr.mxu0 0.0
    %1050 = vmatpush1.msra.mxu0 0.0
    %1051 = vmatprep.subr.mxu0 0.0
    %1052 = vmatpush1.msra.mxu0 0.0
    %1053 = vmatprep.subr.mxu0 0.0
    %1054 = vmatpush1.msra.mxu0 0.0
    %1055 = vmatprep.subr.mxu0 0.0
    %1056 = vmatpush1.msra.mxu0 0.0
    %1057 = vmatprep.subr.mxu0 0.0
    %1058 = vmatpush1.msra.mxu0 0.0
    %1059 = vmatprep.subr.mxu0 0.0
    %1060 = vmatpush1.msra.mxu0 0.0
    %1061 = vmatprep.subr.mxu0 0.0
    %1062 = vmatpush1.msra.mxu0 0.0
    %1063 = vmatprep.subr.mxu0 0.0
    %1064 = vmatpush1.msra.mxu0 0.0
    %1065 = vmatprep.subr.mxu0 0.0
    %1066 = vmatpush1.msra.mxu0 0.0
    %1067 = vmatprep.subr.mxu0 0.0
    %1068 = vmatpush1.msra.mxu0 0.0
    %1069 = vmatprep.subr.mxu0 0.0
    %1070 = vmatpush1.msra.mxu0 0.0
    %1071 = vmatprep.subr.mxu0 0.0
    %1072 = vmatpush1.msra.mxu0 0.0
    %1073 = vmatprep.subr.mxu0 0.0
    %1074 = vmatpush1.msra.mxu0 0.0
    %1075 = vmatprep.subr.mxu0 0.0
    %1076 = vmatpush1.msra.mxu0 0.0
    %1077 = vmatprep.subr.mxu0 0.0
    %1078 = vmatpush1.msra.mxu0 0.0
    %1079 = vmatprep.subr.mxu0 0.0
    %1080 = vmatpush1.msra.mxu0 0.0
    %1081 = vmatprep.subr.mxu0 0.0
    %1082 = vmatpush1.msra.mxu0 0.0
    %1083 = vmatprep.subr.mxu0 0.0
    %1084 = vmatpush1.msra.mxu0 0.0
    %1085 = vmatprep.mubr.f32.mxu0 0.0
    %1086 = vmatmul.mubr.f32.gmra.mrb[0].mxu0 %v1019
    %v1087 = vpop.f32.mrb[0].mxu0
    %v1088 = vadd.f32 0.0, %v1087
    %v1089 = vpop.f32.mrb[0].mxu0
    %1090 = vdwg.mxu0
    %v1091 = vadd.f32 %v1018, %v1088
    %v1092 = vxor.u32 %v1091, 2147483648
    %v1093 = vmul.f32 %v1092, 1.442695
    %v1094 = vpow.pop %v1093
    %v1095 = vadd.f32 %v1094, 1.0
    %v1096 = vrcp.pop %v1095
    %v1097 = vmul.f32 1.0, %v1096
    %v1098 = vtanh.pop %v1091
    %v1099 = vmul.f32 %v1097, %v1004
    %1101 = vrot.lane.b32.xlu0 %v1098, 64
    %v1102 = vpop.permute.xlu0 %1101
    %v1104 = vmul.f32 %v1097, %v1102
    %1106 = vrot.lane.b32.xlu0 %v1104, 32
    %v1107 = vpop.permute.xlu0 %1106
    %v1109 = vadd.f32 %v1099, %v1107
    %v1110 = vtanh.pop %v1109
    %1112 = vrot.lane.b32.xlu0 %v1110, 64
    %v1113 = vpop.permute.xlu0 %1112
    %v1115 = vmul.f32 %v1097, %v1113
    %1117 = vrot.lane.b32.xlu0 %v1115, 32
    %v1118 = vpop.permute.xlu0 %1117
    %s1120 = scalar_lea.vmem [#allocation3], 40
    %1121 = vst.msk [vmem:[%s1120] sm:$0xff] %vm355, %v1118
    %s1122 = scalar_lea.vmem [#allocation2], 48
    %v1123 = vld [vmem:[%s1122] sm:$0xff]
    %v1124 = vsel %vm355, %v1118, 0
    %1126 = vmatprep.subr.mxu0 0.0
    %1127 = vmatpush1.msra.mxu0 %v344
    %1128 = vmatprep.subr.mxu0 0.0
    %1129 = vmatpush1.msra.mxu0 %v345
    %1130 = vmatprep.subr.mxu0 0.0
    %1131 = vmatpush1.msra.mxu0 %v346
    %1132 = vmatprep.subr.mxu0 0.0
    %1133 = vmatpush1.msra.mxu0 %v347
    %1134 = vmatprep.subr.mxu0 0.0
    %1135 = vmatpush1.msra.mxu0 0.0
    %1136 = vmatprep.subr.mxu0 0.0
    %1137 = vmatpush1.msra.mxu0 0.0
    %1138 = vmatprep.subr.mxu0 0.0
    %1139 = vmatpush1.msra.mxu0 0.0
    %1140 = vmatprep.subr.mxu0 0.0
    %1141 = vmatpush1.msra.mxu0 0.0
    %1142 = vmatprep.subr.mxu0 0.0
    %1143 = vmatpush1.msra.mxu0 0.0
    %1144 = vmatprep.subr.mxu0 0.0
    %1145 = vmatpush1.msra.mxu0 0.0
    %1146 = vmatprep.subr.mxu0 0.0
    %1147 = vmatpush1.msra.mxu0 0.0
    %1148 = vmatprep.subr.mxu0 0.0
    %1149 = vmatpush1.msra.mxu0 0.0
    %1150 = vmatprep.subr.mxu0 0.0
    %1151 = vmatpush1.msra.mxu0 0.0
    %1152 = vmatprep.subr.mxu0 0.0
    %1153 = vmatpush1.msra.mxu0 0.0
    %1154 = vmatprep.subr.mxu0 0.0
    %1155 = vmatpush1.msra.mxu0 0.0
    %1156 = vmatprep.subr.mxu0 0.0
    %1157 = vmatpush1.msra.mxu0 0.0
    %1158 = vmatprep.subr.mxu0 0.0
    %1159 = vmatpush1.msra.mxu0 0.0
    %1160 = vmatprep.subr.mxu0 0.0
    %1161 = vmatpush1.msra.mxu0 0.0
    %1162 = vmatprep.subr.mxu0 0.0
    %1163 = vmatpush1.msra.mxu0 0.0
    %1164 = vmatprep.subr.mxu0 0.0
    %1165 = vmatpush1.msra.mxu0 0.0
    %1166 = vmatprep.subr.mxu0 0.0
    %1167 = vmatpush1.msra.mxu0 0.0
    %1168 = vmatprep.subr.mxu0 0.0
    %1169 = vmatpush1.msra.mxu0 0.0
    %1170 = vmatprep.subr.mxu0 0.0
    %1171 = vmatpush1.msra.mxu0 0.0
    %1172 = vmatprep.subr.mxu0 0.0
    %1173 = vmatpush1.msra.mxu0 0.0
    %1174 = vmatprep.subr.mxu0 0.0
    %1175 = vmatpush1.msra.mxu0 0.0
    %1176 = vmatprep.subr.mxu0 0.0
    %1177 = vmatpush1.msra.mxu0 0.0
    %1178 = vmatprep.subr.mxu0 0.0
    %1179 = vmatpush1.msra.mxu0 0.0
    %1180 = vmatprep.subr.mxu0 0.0
    %1181 = vmatpush1.msra.mxu0 0.0
    %1182 = vmatprep.subr.mxu0 0.0
    %1183 = vmatpush1.msra.mxu0 0.0
    %1184 = vmatprep.subr.mxu0 0.0
    %1185 = vmatpush1.msra.mxu0 0.0
    %1186 = vmatprep.subr.mxu0 0.0
    %1187 = vmatpush1.msra.mxu0 0.0
    %1188 = vmatprep.subr.mxu0 0.0
    %1189 = vmatpush1.msra.mxu0 0.0
    %1190 = vmatprep.mubr.f32.mxu0 0.0
    %1191 = vmatmul.mubr.f32.gmra.mrb[0].mxu0 %v1124
    %v1192 = vpop.f32.mrb[0].mxu0
    %v1193 = vadd.f32 0.0, %v1192
    %v1194 = vpop.f32.mrb[0].mxu0
    %1195 = vdwg.mxu0
    %v1196 = vadd.f32 %v1123, %v1193
    %v1197 = vxor.u32 %v1196, 2147483648
    %v1198 = vmul.f32 %v1197, 1.442695
    %v1199 = vpow.pop %v1198
    %v1200 = vadd.f32 %v1199, 1.0
    %v1201 = vrcp.pop %v1200
    %v1202 = vmul.f32 1.0, %v1201
    %v1203 = vtanh.pop %v1196
    %v1204 = vmul.f32 %v1202, %v1109
    %1206 = vrot.lane.b32.xlu0 %v1203, 64
    %v1207 = vpop.permute.xlu0 %1206
    %v1209 = vmul.f32 %v1202, %v1207
    %1211 = vrot.lane.b32.xlu0 %v1209, 32
    %v1212 = vpop.permute.xlu0 %1211
    %v1214 = vadd.f32 %v1204, %v1212
    %v1215 = vtanh.pop %v1214
    %1217 = vrot.lane.b32.xlu0 %v1215, 64
    %v1218 = vpop.permute.xlu0 %1217
    %v1220 = vmul.f32 %v1202, %v1218
    %1222 = vrot.lane.b32.xlu0 %v1220, 32
    %v1223 = vpop.permute.xlu0 %1222
    %s1225 = scalar_lea.vmem [#allocation3], 48
    %1226 = vst.msk [vmem:[%s1225] sm:$0xff] %vm355, %v1223
    %s1227 = scalar_lea.vmem [#allocation2], 56
    %v1228 = vld [vmem:[%s1227] sm:$0xff]
    %v1229 = vsel %vm355, %v1223, 0
    %1231 = vmatprep.subr.mxu0 0.0
    %1232 = vmatpush1.msra.mxu0 %v344
    %1233 = vmatprep.subr.mxu0 0.0
    %1234 = vmatpush1.msra.mxu0 %v345
    %1235 = vmatprep.subr.mxu0 0.0
    %1236 = vmatpush1.msra.mxu0 %v346
    %1237 = vmatprep.subr.mxu0 0.0
    %1238 = vmatpush1.msra.mxu0 %v347
    %1239 = vmatprep.subr.mxu0 0.0
    %1240 = vmatpush1.msra.mxu0 0.0
    %1241 = vmatprep.subr.mxu0 0.0
    %1242 = vmatpush1.msra.mxu0 0.0
    %1243 = vmatprep.subr.mxu0 0.0
    %1244 = vmatpush1.msra.mxu0 0.0
    %1245 = vmatprep.subr.mxu0 0.0
    %1246 = vmatpush1.msra.mxu0 0.0
    %1247 = vmatprep.subr.mxu0 0.0
    %1248 = vmatpush1.msra.mxu0 0.0
    %1249 = vmatprep.subr.mxu0 0.0
    %1250 = vmatpush1.msra.mxu0 0.0
    %1251 = vmatprep.subr.mxu0 0.0
    %1252 = vmatpush1.msra.mxu0 0.0
    %1253 = vmatprep.subr.mxu0 0.0
    %1254 = vmatpush1.msra.mxu0 0.0
    %1255 = vmatprep.subr.mxu0 0.0
    %1256 = vmatpush1.msra.mxu0 0.0
    %1257 = vmatprep.subr.mxu0 0.0
    %1258 = vmatpush1.msra.mxu0 0.0
    %1259 = vmatprep.subr.mxu0 0.0
    %1260 = vmatpush1.msra.mxu0 0.0
    %1261 = vmatprep.subr.mxu0 0.0
    %1262 = vmatpush1.msra.mxu0 0.0
    %1263 = vmatprep.subr.mxu0 0.0
    %1264 = vmatpush1.msra.mxu0 0.0
    %1265 = vmatprep.subr.mxu0 0.0
    %1266 = vmatpush1.msra.mxu0 0.0
    %1267 = vmatprep.subr.mxu0 0.0
    %1268 = vmatpush1.msra.mxu0 0.0
    %1269 = vmatprep.subr.mxu0 0.0
    %1270 = vmatpush1.msra.mxu0 0.0
    %1271 = vmatprep.subr.mxu0 0.0
    %1272 = vmatpush1.msra.mxu0 0.0
    %1273 = vmatprep.subr.mxu0 0.0
    %1274 = vmatpush1.msra.mxu0 0.0
    %1275 = vmatprep.subr.mxu0 0.0
    %1276 = vmatpush1.msra.mxu0 0.0
    %1277 = vmatprep.subr.mxu0 0.0
    %1278 = vmatpush1.msra.mxu0 0.0
    %1279 = vmatprep.subr.mxu0 0.0
    %1280 = vmatpush1.msra.mxu0 0.0
    %1281 = vmatprep.subr.mxu0 0.0
    %1282 = vmatpush1.msra.mxu0 0.0
    %1283 = vmatprep.subr.mxu0 0.0
    %1284 = vmatpush1.msra.mxu0 0.0
    %1285 = vmatprep.subr.mxu0 0.0
    %1286 = vmatpush1.msra.mxu0 0.0
    %1287 = vmatprep.subr.mxu0 0.0
    %1288 = vmatpush1.msra.mxu0 0.0
    %1289 = vmatprep.subr.mxu0 0.0
    %1290 = vmatpush1.msra.mxu0 0.0
    %1291 = vmatprep.subr.mxu0 0.0
    %1292 = vmatpush1.msra.mxu0 0.0
    %1293 = vmatprep.subr.mxu0 0.0
    %1294 = vmatpush1.msra.mxu0 0.0
    %1295 = vmatprep.mubr.f32.mxu0 0.0
    %1296 = vmatmul.mubr.f32.gmra.mrb[0].mxu0 %v1229
    %v1297 = vpop.f32.mrb[0].mxu0
    %v1298 = vadd.f32 0.0, %v1297
    %v1299 = vpop.f32.mrb[0].mxu0
    %1300 = vdwg.mxu0
    %v1301 = vadd.f32 %v1228, %v1298
    %v1302 = vxor.u32 %v1301, 2147483648
    %v1303 = vmul.f32 %v1302, 1.442695
    %v1304 = vpow.pop %v1303
    %v1305 = vadd.f32 %v1304, 1.0
    %v1306 = vrcp.pop %v1305
    %v1307 = vmul.f32 1.0, %v1306
    %v1308 = vtanh.pop %v1301
    %v1309 = vmul.f32 %v1307, %v1214
    %1311 = vrot.lane.b32.xlu0 %v1308, 64
    %v1312 = vpop.permute.xlu0 %1311
    %v1314 = vmul.f32 %v1307, %v1312
    %1316 = vrot.lane.b32.xlu0 %v1314, 32
    %v1317 = vpop.permute.xlu0 %1316
    %v1319 = vadd.f32 %v1309, %v1317
    %v1320 = vtanh.pop %v1319
    %1322 = vrot.lane.b32.xlu0 %v1320, 64
    %v1323 = vpop.permute.xlu0 %1322
    %v1325 = vmul.f32 %v1307, %v1323
    %1327 = vrot.lane.b32.xlu0 %v1325, 32
    %v1328 = vpop.permute.xlu0 %1327
    %s1330 = scalar_lea.vmem [#allocation3], 56
    %1331 = vst.msk [vmem:[%s1330] sm:$0xff] %vm355, %v1328
    %vm1332 = vcmask 254976
    %1333 = vst.msk [vmem:[#allocation17] sm:$0x3] %vm1332, %v1328
    %1335 = vrot.lane.b32.xlu0 %v1319, 96
    %v1336 = vpop.permute.xlu0 %1335
    %1338 = vst.msk [vmem:[#allocation19] sm:$0x3] %vm1332, %v1336
    %v1339 = vld [vmem:[#allocation3] sm:$0xff]
    %v1340 = vld [vmem:[#allocation3 + $0x8] sm:$0xff]
    %v1341 = vld [vmem:[#allocation3 + $0x10] sm:$0xff]
    %v1342 = vld [vmem:[#allocation3 + $0x18] sm:$0xff]
    %v1343 = vld [vmem:[#allocation3 + $0x20] sm:$0xff]
    %v1344 = vld [vmem:[#allocation3 + $0x28] sm:$0xff]
    %v1345 = vld [vmem:[#allocation3 + $0x30] sm:$0xff]
    %v1346 = vld [vmem:[#allocation3 + $0x38] sm:$0xff]
    %v1347 = vld [vmem:[#allocation10] sm:$0xff]
    %v1348 = vld [vmem:[#allocation10 + $0x8] sm:$0xff]
    %v1349 = vld [vmem:[#allocation10 + $0x10] sm:$0xff]
    %v1350 = vld [vmem:[#allocation10 + $0x18] sm:$0xff]
    %v1351 = vld [vmem:[#allocation12] sm:$0xff]
    %v1352 = vld [vmem:[#allocation12 + $0x8] sm:$0xff]
    %v1353 = vld [vmem:[#allocation12 + $0x10] sm:$0xff]
    %v1354 = vld [vmem:[#allocation12 + $0x18] sm:$0xff]
    %v1355 = vld [vmem:[%s7] sm:$0x1]
    %v1357 = vlaneseq
    %v1358 = vshrl.u32 %v1357, 7
    %v1359 = vsub.s32 0, %v1358
    %v1360 = vrot.slane %v1355, %v1359
    %v1363 = vsel %vm355, %v1339, 0
    %v1366 = vsel %vm355, %v1340, 0
    %v1369 = vsel %vm355, %v1341, 0
    %v1372 = vsel %vm355, %v1342, 0
    %v1375 = vsel %vm355, %v1343, 0
    %v1378 = vsel %vm355, %v1344, 0
    %v1381 = vsel %vm355, %v1345, 0
    %v1384 = vsel %vm355, %v1346, 0
    %1386 = vmatprep.subr.mxu0 0.0
    %1387 = vmatpush1.msra.mxu0 %v1347
    %1388 = vmatprep.subr.mxu0 0.0
    %1389 = vmatpush1.msra.mxu0 %v1348
    %1390 = vmatprep.subr.mxu0 0.0
    %1391 = vmatpush1.msra.mxu0 %v1349
    %1392 = vmatprep.subr.mxu0 0.0
    %1393 = vmatpush1.msra.mxu0 %v1350
    %1394 = vmatprep.subr.mxu0 0.0
    %1395 = vmatpush1.msra.mxu0 0.0
    %1396 = vmatprep.subr.mxu0 0.0
    %1397 = vmatpush1.msra.mxu0 0.0
    %1398 = vmatprep.subr.mxu0 0.0
    %1399 = vmatpush1.msra.mxu0 0.0
    %1400 = vmatprep.subr.mxu0 0.0
    %1401 = vmatpush1.msra.mxu0 0.0
    %1402 = vmatprep.subr.mxu0 0.0
    %1403 = vmatpush1.msra.mxu0 0.0
    %1404 = vmatprep.subr.mxu0 0.0
    %1405 = vmatpush1.msra.mxu0 0.0
    %1406 = vmatprep.subr.mxu0 0.0
    %1407 = vmatpush1.msra.mxu0 0.0
    %1408 = vmatprep.subr.mxu0 0.0
    %1409 = vmatpush1.msra.mxu0 0.0
    %1410 = vmatprep.subr.mxu0 0.0
    %1411 = vmatpush1.msra.mxu0 0.0
    %1412 = vmatprep.subr.mxu0 0.0
    %1413 = vmatpush1.msra.mxu0 0.0
    %1414 = vmatprep.subr.mxu0 0.0
    %1415 = vmatpush1.msra.mxu0 0.0
    %1416 = vmatprep.subr.mxu0 0.0
    %1417 = vmatpush1.msra.mxu0 0.0
    %1418 = vmatprep.subr.mxu0 0.0
    %1419 = vmatpush1.msra.mxu0 0.0
    %1420 = vmatprep.subr.mxu0 0.0
    %1421 = vmatpush1.msra.mxu0 0.0
    %1422 = vmatprep.subr.mxu0 0.0
    %1423 = vmatpush1.msra.mxu0 0.0
    %1424 = vmatprep.subr.mxu0 0.0
    %1425 = vmatpush1.msra.mxu0 0.0
    %1426 = vmatprep.subr.mxu0 0.0
    %1427 = vmatpush1.msra.mxu0 0.0
    %1428 = vmatprep.subr.mxu0 0.0
    %1429 = vmatpush1.msra.mxu0 0.0
    %1430 = vmatprep.subr.mxu0 0.0
    %1431 = vmatpush1.msra.mxu0 0.0
    %1432 = vmatprep.subr.mxu0 0.0
    %1433 = vmatpush1.msra.mxu0 0.0
    %1434 = vmatprep.subr.mxu0 0.0
    %1435 = vmatpush1.msra.mxu0 0.0
    %1436 = vmatprep.subr.mxu0 0.0
    %1437 = vmatpush1.msra.mxu0 0.0
    %1438 = vmatprep.subr.mxu0 0.0
    %1439 = vmatpush1.msra.mxu0 0.0
    %1440 = vmatprep.subr.mxu0 0.0
    %1441 = vmatpush1.msra.mxu0 0.0
    %1442 = vmatprep.subr.mxu0 0.0
    %1443 = vmatpush1.msra.mxu0 0.0
    %1444 = vmatprep.subr.mxu0 0.0
    %1445 = vmatpush1.msra.mxu0 0.0
    %1446 = vmatprep.subr.mxu0 0.0
    %1447 = vmatpush1.msra.mxu0 0.0
    %1448 = vmatprep.subr.mxu0 0.0
    %1449 = vmatpush1.msra.mxu0 0.0
    %1450 = vmatprep.mubr.f32.mxu0 0.0
    %1451 = vmatmul.mubr.f32.gmra.mrb[0].mxu0 %v1363
    %v1452 = vpop.f32.mrb[0].mxu0
    %v1453 = vadd.f32 %v1360, %v1452
    %v1454 = vpop.f32.mrb[0].mxu0
    %1455 = vmatprep.mubr.f32.mxu0 0.0
    %1456 = vmatmul.mubr.f32.gmra.mrb[0].mxu0 %v1366
    %v1457 = vpop.f32.mrb[0].mxu0
    %v1458 = vadd.f32 %v1360, %v1457
    %v1459 = vpop.f32.mrb[0].mxu0
    %1460 = vmatprep.mubr.f32.mxu0 0.0
    %1461 = vmatmul.mubr.f32.gmra.mrb[0].mxu0 %v1369
    %v1462 = vpop.f32.mrb[0].mxu0
    %v1463 = vadd.f32 %v1360, %v1462
    %v1464 = vpop.f32.mrb[0].mxu0
    %1465 = vmatprep.mubr.f32.mxu0 0.0
    %1466 = vmatmul.mubr.f32.gmra.mrb[0].mxu0 %v1372
    %v1467 = vpop.f32.mrb[0].mxu0
    %v1468 = vadd.f32 %v1360, %v1467
    %v1469 = vpop.f32.mrb[0].mxu0
    %1470 = vmatprep.mubr.f32.mxu0 0.0
    %1471 = vmatmul.mubr.f32.gmra.mrb[0].mxu0 %v1375
    %v1472 = vpop.f32.mrb[0].mxu0
    %v1473 = vadd.f32 %v1360, %v1472
    %v1474 = vpop.f32.mrb[0].mxu0
    %1475 = vmatprep.mubr.f32.mxu0 0.0
    %1476 = vmatmul.mubr.f32.gmra.mrb[0].mxu0 %v1378
    %v1477 = vpop.f32.mrb[0].mxu0
    %v1478 = vadd.f32 %v1360, %v1477
    %v1479 = vpop.f32.mrb[0].mxu0
    %1480 = vmatprep.mubr.f32.mxu0 0.0
    %1481 = vmatmul.mubr.f32.gmra.mrb[0].mxu0 %v1381
    %v1482 = vpop.f32.mrb[0].mxu0
    %v1483 = vadd.f32 %v1360, %v1482
    %v1484 = vpop.f32.mrb[0].mxu0
    %1485 = vmatprep.mubr.f32.mxu0 0.0
    %1486 = vmatmul.mubr.f32.gmra.mrb[0].mxu0 %v1384
    %v1487 = vpop.f32.mrb[0].mxu0
    %v1488 = vadd.f32 %v1360, %v1487
    %v1489 = vpop.f32.mrb[0].mxu0
    %1490 = vdwg.mxu0
    %1491 = vst [vmem:[#allocation2] sm:$0xff] %v1453
    %1492 = vst [vmem:[#allocation2 + $0x8] sm:$0xff] %v1458
    %1493 = vst [vmem:[#allocation2 + $0x10] sm:$0xff] %v1463
    %1494 = vst [vmem:[#allocation2 + $0x18] sm:$0xff] %v1468
    %1495 = vst [vmem:[#allocation2 + $0x20] sm:$0xff] %v1473
    %1496 = vst [vmem:[#allocation2 + $0x28] sm:$0xff] %v1478
    %1497 = vst [vmem:[#allocation2 + $0x30] sm:$0xff] %v1483
    %1498 = vst [vmem:[#allocation2 + $0x38] sm:$0xff] %v1488
    %v1499 = vld [vmem:[#allocation2] sm:$0xff]
    %1500 = vmatprep.subr.mxu0 0.0
    %1501 = vmatpush1.msra.mxu0 %v1351
    %1502 = vmatprep.subr.mxu0 0.0
    %1503 = vmatpush1.msra.mxu0 %v1352
    %1504 = vmatprep.subr.mxu0 0.0
    %1505 = vmatpush1.msra.mxu0 %v1353
    %1506 = vmatprep.subr.mxu0 0.0
    %1507 = vmatpush1.msra.mxu0 %v1354
    %1508 = vmatprep.subr.mxu0 0.0
    %1509 = vmatpush1.msra.mxu0 0.0
    %1510 = vmatprep.subr.mxu0 0.0
    %1511 = vmatpush1.msra.mxu0 0.0
    %1512 = vmatprep.subr.mxu0 0.0
    %1513 = vmatpush1.msra.mxu0 0.0
    %1514 = vmatprep.subr.mxu0 0.0
    %1515 = vmatpush1.msra.mxu0 0.0
    %1516 = vmatprep.subr.mxu0 0.0
    %1517 = vmatpush1.msra.mxu0 0.0
    %1518 = vmatprep.subr.mxu0 0.0
    %1519 = vmatpush1.msra.mxu0 0.0
    %1520 = vmatprep.subr.mxu0 0.0
    %1521 = vmatpush1.msra.mxu0 0.0
    %1522 = vmatprep.subr.mxu0 0.0
    %1523 = vmatpush1.msra.mxu0 0.0
    %1524 = vmatprep.subr.mxu0 0.0
    %1525 = vmatpush1.msra.mxu0 0.0
    %1526 = vmatprep.subr.mxu0 0.0
    %1527 = vmatpush1.msra.mxu0 0.0
    %1528 = vmatprep.subr.mxu0 0.0
    %1529 = vmatpush1.msra.mxu0 0.0
    %1530 = vmatprep.subr.mxu0 0.0
    %1531 = vmatpush1.msra.mxu0 0.0
    %1532 = vmatprep.subr.mxu0 0.0
    %1533 = vmatpush1.msra.mxu0 0.0
    %1534 = vmatprep.subr.mxu0 0.0
    %1535 = vmatpush1.msra.mxu0 0.0
    %1536 = vmatprep.subr.mxu0 0.0
    %1537 = vmatpush1.msra.mxu0 0.0
    %1538 = vmatprep.subr.mxu0 0.0
    %1539 = vmatpush1.msra.mxu0 0.0
    %1540 = vmatprep.subr.mxu0 0.0
    %1541 = vmatpush1.msra.mxu0 0.0
    %1542 = vmatprep.subr.mxu0 0.0
    %1543 = vmatpush1.msra.mxu0 0.0
    %1544 = vmatprep.subr.mxu0 0.0
    %1545 = vmatpush1.msra.mxu0 0.0
    %1546 = vmatprep.subr.mxu0 0.0
    %1547 = vmatpush1.msra.mxu0 0.0
    %1548 = vmatprep.subr.mxu0 0.0
    %1549 = vmatpush1.msra.mxu0 0.0
    %1550 = vmatprep.subr.mxu0 0.0
    %1551 = vmatpush1.msra.mxu0 0.0
    %1552 = vmatprep.subr.mxu0 0.0
    %1553 = vmatpush1.msra.mxu0 0.0
    %1554 = vmatprep.subr.mxu0 0.0
    %1555 = vmatpush1.msra.mxu0 0.0
    %1556 = vmatprep.subr.mxu0 0.0
    %1557 = vmatpush1.msra.mxu0 0.0
    %1558 = vmatprep.subr.mxu0 0.0
    %1559 = vmatpush1.msra.mxu0 0.0
    %1560 = vmatprep.subr.mxu0 0.0
    %1561 = vmatpush1.msra.mxu0 0.0
    %1562 = vmatprep.subr.mxu0 0.0
    %1563 = vmatpush1.msra.mxu0 0.0
    %1564 = vmatprep.mubr.f32.mxu0 0.0
    %1565 = vmatmul.mubr.f32.gmra.mrb[0].mxu0 %v495
    %v1566 = vpop.f32.mrb[0].mxu0
    %v1567 = vadd.f32 0.0, %v1566
    %v1568 = vpop.f32.mrb[0].mxu0
    %1569 = vdwg.mxu0
    %v1570 = vadd.f32 %v1499, %v1567
    %v1571 = vxor.u32 %v1570, 2147483648
    %v1572 = vmul.f32 %v1571, 1.442695
    %v1573 = vpow.pop %v1572
    %v1574 = vadd.f32 %v1573, 1.0
    %v1575 = vrcp.pop %v1574
    %v1576 = vmul.f32 1.0, %v1575
    %v1577 = vtanh.pop %v1570
    %v1578 = vmul.f32 %v1576, 0.0
    %1580 = vrot.lane.b32.xlu0 %v1577, 64
    %v1581 = vpop.permute.xlu0 %1580
    %v1583 = vmul.f32 %v1576, %v1581
    %1585 = vrot.lane.b32.xlu0 %v1583, 32
    %v1586 = vpop.permute.xlu0 %1585
    %v1588 = vadd.f32 %v1578, %v1586
    %v1589 = vtanh.pop %v1588
    %1591 = vrot.lane.b32.xlu0 %v1589, 64
    %v1592 = vpop.permute.xlu0 %1591
    %v1594 = vmul.f32 %v1576, %v1592
    %1596 = vrot.lane.b32.xlu0 %v1594, 32
    %v1597 = vpop.permute.xlu0 %1596
    %1599 = vst.msk [vmem:[#allocation3] sm:$0xff] %vm355, %v1597
    %v1600 = vld [vmem:[%s597] sm:$0xff]
    %v1601 = vsel %vm355, %v1597, 0
    %1603 = vmatprep.subr.mxu0 0.0
    %1604 = vmatpush1.msra.mxu0 %v1351
    %1605 = vmatprep.subr.mxu0 0.0
    %1606 = vmatpush1.msra.mxu0 %v1352
    %1607 = vmatprep.subr.mxu0 0.0
    %1608 = vmatpush1.msra.mxu0 %v1353
    %1609 = vmatprep.subr.mxu0 0.0
    %1610 = vmatpush1.msra.mxu0 %v1354
    %1611 = vmatprep.subr.mxu0 0.0
    %1612 = vmatpush1.msra.mxu0 0.0
    %1613 = vmatprep.subr.mxu0 0.0
    %1614 = vmatpush1.msra.mxu0 0.0
    %1615 = vmatprep.subr.mxu0 0.0
    %1616 = vmatpush1.msra.mxu0 0.0
    %1617 = vmatprep.subr.mxu0 0.0
    %1618 = vmatpush1.msra.mxu0 0.0
    %1619 = vmatprep.subr.mxu0 0.0
    %1620 = vmatpush1.msra.mxu0 0.0
    %1621 = vmatprep.subr.mxu0 0.0
    %1622 = vmatpush1.msra.mxu0 0.0
    %1623 = vmatprep.subr.mxu0 0.0
    %1624 = vmatpush1.msra.mxu0 0.0
    %1625 = vmatprep.subr.mxu0 0.0
    %1626 = vmatpush1.msra.mxu0 0.0
    %1627 = vmatprep.subr.mxu0 0.0
    %1628 = vmatpush1.msra.mxu0 0.0
    %1629 = vmatprep.subr.mxu0 0.0
    %1630 = vmatpush1.msra.mxu0 0.0
    %1631 = vmatprep.subr.mxu0 0.0
    %1632 = vmatpush1.msra.mxu0 0.0
    %1633 = vmatprep.subr.mxu0 0.0
    %1634 = vmatpush1.msra.mxu0 0.0
    %1635 = vmatprep.subr.mxu0 0.0
    %1636 = vmatpush1.msra.mxu0 0.0
    %1637 = vmatprep.subr.mxu0 0.0
    %1638 = vmatpush1.msra.mxu0 0.0
    %1639 = vmatprep.subr.mxu0 0.0
    %1640 = vmatpush1.msra.mxu0 0.0
    %1641 = vmatprep.subr.mxu0 0.0
    %1642 = vmatpush1.msra.mxu0 0.0
    %1643 = vmatprep.subr.mxu0 0.0
    %1644 = vmatpush1.msra.mxu0 0.0
    %1645 = vmatprep.subr.mxu0 0.0
    %1646 = vmatpush1.msra.mxu0 0.0
    %1647 = vmatprep.subr.mxu0 0.0
    %1648 = vmatpush1.msra.mxu0 0.0
    %1649 = vmatprep.subr.mxu0 0.0
    %1650 = vmatpush1.msra.mxu0 0.0
    %1651 = vmatprep.subr.mxu0 0.0
    %1652 = vmatpush1.msra.mxu0 0.0
    %1653 = vmatprep.subr.mxu0 0.0
    %1654 = vmatpush1.msra.mxu0 0.0
    %1655 = vmatprep.subr.mxu0 0.0
    %1656 = vmatpush1.msra.mxu0 0.0
    %1657 = vmatprep.subr.mxu0 0.0
    %1658 = vmatpush1.msra.mxu0 0.0
    %1659 = vmatprep.subr.mxu0 0.0
    %1660 = vmatpush1.msra.mxu0 0.0
    %1661 = vmatprep.subr.mxu0 0.0
    %1662 = vmatpush1.msra.mxu0 0.0
    %1663 = vmatprep.subr.mxu0 0.0
    %1664 = vmatpush1.msra.mxu0 0.0
    %1665 = vmatprep.subr.mxu0 0.0
    %1666 = vmatpush1.msra.mxu0 0.0
    %1667 = vmatprep.mubr.f32.mxu0 0.0
    %1668 = vmatmul.mubr.f32.gmra.mrb[0].mxu0 %v1601
    %v1669 = vpop.f32.mrb[0].mxu0
    %v1670 = vadd.f32 0.0, %v1669
    %v1671 = vpop.f32.mrb[0].mxu0
    %1672 = vdwg.mxu0
    %v1673 = vadd.f32 %v1600, %v1670
    %v1674 = vxor.u32 %v1673, 2147483648
    %v1675 = vmul.f32 %v1674, 1.442695
    %v1676 = vpow.pop %v1675
    %v1677 = vadd.f32 %v1676, 1.0
    %v1678 = vrcp.pop %v1677
    %v1679 = vmul.f32 1.0, %v1678
    %v1680 = vtanh.pop %v1673
    %v1681 = vmul.f32 %v1679, %v1588
    %1683 = vrot.lane.b32.xlu0 %v1680, 64
    %v1684 = vpop.permute.xlu0 %1683
    %v1686 = vmul.f32 %v1679, %v1684
    %1688 = vrot.lane.b32.xlu0 %v1686, 32
    %v1689 = vpop.permute.xlu0 %1688
    %v1691 = vadd.f32 %v1681, %v1689
    %v1692 = vtanh.pop %v1691
    %1694 = vrot.lane.b32.xlu0 %v1692, 64
    %v1695 = vpop.permute.xlu0 %1694
    %v1697 = vmul.f32 %v1679, %v1695
    %1699 = vrot.lane.b32.xlu0 %v1697, 32
    %v1700 = vpop.permute.xlu0 %1699
    %1702 = vst.msk [vmem:[%s700] sm:$0xff] %vm355, %v1700
    %v1703 = vld [vmem:[%s702] sm:$0xff]
    %v1704 = vsel %vm355, %v1700, 0
    %1706 = vmatprep.subr.mxu0 0.0
    %1707 = vmatpush1.msra.mxu0 %v1351
    %1708 = vmatprep.subr.mxu0 0.0
    %1709 = vmatpush1.msra.mxu0 %v1352
    %1710 = vmatprep.subr.mxu0 0.0
    %1711 = vmatpush1.msra.mxu0 %v1353
    %1712 = vmatprep.subr.mxu0 0.0
    %1713 = vmatpush1.msra.mxu0 %v1354
    %1714 = vmatprep.subr.mxu0 0.0
    %1715 = vmatpush1.msra.mxu0 0.0
    %1716 = vmatprep.subr.mxu0 0.0
    %1717 = vmatpush1.msra.mxu0 0.0
    %1718 = vmatprep.subr.mxu0 0.0
    %1719 = vmatpush1.msra.mxu0 0.0
    %1720 = vmatprep.subr.mxu0 0.0
    %1721 = vmatpush1.msra.mxu0 0.0
    %1722 = vmatprep.subr.mxu0 0.0
    %1723 = vmatpush1.msra.mxu0 0.0
    %1724 = vmatprep.subr.mxu0 0.0
    %1725 = vmatpush1.msra.mxu0 0.0
    %1726 = vmatprep.subr.mxu0 0.0
    %1727 = vmatpush1.msra.mxu0 0.0
    %1728 = vmatprep.subr.mxu0 0.0
    %1729 = vmatpush1.msra.mxu0 0.0
    %1730 = vmatprep.subr.mxu0 0.0
    %1731 = vmatpush1.msra.mxu0 0.0
    %1732 = vmatprep.subr.mxu0 0.0
    %1733 = vmatpush1.msra.mxu0 0.0
    %1734 = vmatprep.subr.mxu0 0.0
    %1735 = vmatpush1.msra.mxu0 0.0
    %1736 = vmatprep.subr.mxu0 0.0
    %1737 = vmatpush1.msra.mxu0 0.0
    %1738 = vmatprep.subr.mxu0 0.0
    %1739 = vmatpush1.msra.mxu0 0.0
    %1740 = vmatprep.subr.mxu0 0.0
    %1741 = vmatpush1.msra.mxu0 0.0
    %1742 = vmatprep.subr.mxu0 0.0
    %1743 = vmatpush1.msra.mxu0 0.0
    %1744 = vmatprep.subr.mxu0 0.0
    %1745 = vmatpush1.msra.mxu0 0.0
    %1746 = vmatprep.subr.mxu0 0.0
    %1747 = vmatpush1.msra.mxu0 0.0
    %1748 = vmatprep.subr.mxu0 0.0
    %1749 = vmatpush1.msra.mxu0 0.0
    %1750 = vmatprep.subr.mxu0 0.0
    %1751 = vmatpush1.msra.mxu0 0.0
    %1752 = vmatprep.subr.mxu0 0.0
    %1753 = vmatpush1.msra.mxu0 0.0
    %1754 = vmatprep.subr.mxu0 0.0
    %1755 = vmatpush1.msra.mxu0 0.0
    %1756 = vmatprep.subr.mxu0 0.0
    %1757 = vmatpush1.msra.mxu0 0.0
    %1758 = vmatprep.subr.mxu0 0.0
    %1759 = vmatpush1.msra.mxu0 0.0
    %1760 = vmatprep.subr.mxu0 0.0
    %1761 = vmatpush1.msra.mxu0 0.0
    %1762 = vmatprep.subr.mxu0 0.0
    %1763 = vmatpush1.msra.mxu0 0.0
    %1764 = vmatprep.subr.mxu0 0.0
    %1765 = vmatpush1.msra.mxu0 0.0
    %1766 = vmatprep.subr.mxu0 0.0
    %1767 = vmatpush1.msra.mxu0 0.0
    %1768 = vmatprep.subr.mxu0 0.0
    %1769 = vmatpush1.msra.mxu0 0.0
    %1770 = vmatprep.mubr.f32.mxu0 0.0
    %1771 = vmatmul.mubr.f32.gmra.mrb[0].mxu0 %v1704
    %v1772 = vpop.f32.mrb[0].mxu0
    %v1773 = vadd.f32 0.0, %v1772
    %v1774 = vpop.f32.mrb[0].mxu0
    %1775 = vdwg.mxu0
    %v1776 = vadd.f32 %v1703, %v1773
    %v1777 = vxor.u32 %v1776, 2147483648
    %v1778 = vmul.f32 %v1777, 1.442695
    %v1779 = vpow.pop %v1778
    %v1780 = vadd.f32 %v1779, 1.0
    %v1781 = vrcp.pop %v1780
    %v1782 = vmul.f32 1.0, %v1781
    %v1783 = vtanh.pop %v1776
    %v1784 = vmul.f32 %v1782, %v1691
    %1786 = vrot.lane.b32.xlu0 %v1783, 64
    %v1787 = vpop.permute.xlu0 %1786
    %v1789 = vmul.f32 %v1782, %v1787
    %1791 = vrot.lane.b32.xlu0 %v1789, 32
    %v1792 = vpop.permute.xlu0 %1791
    %v1794 = vadd.f32 %v1784, %v1792
    %v1795 = vtanh.pop %v1794
    %1797 = vrot.lane.b32.xlu0 %v1795, 64
    %v1798 = vpop.permute.xlu0 %1797
    %v1800 = vmul.f32 %v1782, %v1798
    %1802 = vrot.lane.b32.xlu0 %v1800, 32
    %v1803 = vpop.permute.xlu0 %1802
    %1805 = vst.msk [vmem:[%s805] sm:$0xff] %vm355, %v1803
    %v1806 = vld [vmem:[%s807] sm:$0xff]
    %v1807 = vsel %vm355, %v1803, 0
    %1809 = vmatprep.subr.mxu0 0.0
    %1810 = vmatpush1.msra.mxu0 %v1351
    %1811 = vmatprep.subr.mxu0 0.0
    %1812 = vmatpush1.msra.mxu0 %v1352
    %1813 = vmatprep.subr.mxu0 0.0
    %1814 = vmatpush1.msra.mxu0 %v1353
    %1815 = vmatprep.subr.mxu0 0.0
    %1816 = vmatpush1.msra.mxu0 %v1354
    %1817 = vmatprep.subr.mxu0 0.0
    %1818 = vmatpush1.msra.mxu0 0.0
    %1819 = vmatprep.subr.mxu0 0.0
    %1820 = vmatpush1.msra.mxu0 0.0
    %1821 = vmatprep.subr.mxu0 0.0
    %1822 = vmatpush1.msra.mxu0 0.0
    %1823 = vmatprep.subr.mxu0 0.0
    %1824 = vmatpush1.msra.mxu0 0.0
    %1825 = vmatprep.subr.mxu0 0.0
    %1826 = vmatpush1.msra.mxu0 0.0
    %1827 = vmatprep.subr.mxu0 0.0
    %1828 = vmatpush1.msra.mxu0 0.0
    %1829 = vmatprep.subr.mxu0 0.0
    %1830 = vmatpush1.msra.mxu0 0.0
    %1831 = vmatprep.subr.mxu0 0.0
    %1832 = vmatpush1.msra.mxu0 0.0
    %1833 = vmatprep.subr.mxu0 0.0
    %1834 = vmatpush1.msra.mxu0 0.0
    %1835 = vmatprep.subr.mxu0 0.0
    %1836 = vmatpush1.msra.mxu0 0.0
    %1837 = vmatprep.subr.mxu0 0.0
    %1838 = vmatpush1.msra.mxu0 0.0
    %1839 = vmatprep.subr.mxu0 0.0
    %1840 = vmatpush1.msra.mxu0 0.0
    %1841 = vmatprep.subr.mxu0 0.0
    %1842 = vmatpush1.msra.mxu0 0.0
    %1843 = vmatprep.subr.mxu0 0.0
    %1844 = vmatpush1.msra.mxu0 0.0
    %1845 = vmatprep.subr.mxu0 0.0
    %1846 = vmatpush1.msra.mxu0 0.0
    %1847 = vmatprep.subr.mxu0 0.0
    %1848 = vmatpush1.msra.mxu0 0.0
    %1849 = vmatprep.subr.mxu0 0.0
    %1850 = vmatpush1.msra.mxu0 0.0
    %1851 = vmatprep.subr.mxu0 0.0
    %1852 = vmatpush1.msra.mxu0 0.0
    %1853 = vmatprep.subr.mxu0 0.0
    %1854 = vmatpush1.msra.mxu0 0.0
    %1855 = vmatprep.subr.mxu0 0.0
    %1856 = vmatpush1.msra.mxu0 0.0
    %1857 = vmatprep.subr.mxu0 0.0
    %1858 = vmatpush1.msra.mxu0 0.0
    %1859 = vmatprep.subr.mxu0 0.0
    %1860 = vmatpush1.msra.mxu0 0.0
    %1861 = vmatprep.subr.mxu0 0.0
    %1862 = vmatpush1.msra.mxu0 0.0
    %1863 = vmatprep.subr.mxu0 0.0
    %1864 = vmatpush1.msra.mxu0 0.0
    %1865 = vmatprep.subr.mxu0 0.0
    %1866 = vmatpush1.msra.mxu0 0.0
    %1867 = vmatprep.subr.mxu0 0.0
    %1868 = vmatpush1.msra.mxu0 0.0
    %1869 = vmatprep.subr.mxu0 0.0
    %1870 = vmatpush1.msra.mxu0 0.0
    %1871 = vmatprep.subr.mxu0 0.0
    %1872 = vmatpush1.msra.mxu0 0.0
    %1873 = vmatprep.mubr.f32.mxu0 0.0
    %1874 = vmatmul.mubr.f32.gmra.mrb[0].mxu0 %v1807
    %v1875 = vpop.f32.mrb[0].mxu0
    %v1876 = vadd.f32 0.0, %v1875
    %v1877 = vpop.f32.mrb[0].mxu0
    %1878 = vdwg.mxu0
    %v1879 = vadd.f32 %v1806, %v1876
    %v1880 = vxor.u32 %v1879, 2147483648
    %v1881 = vmul.f32 %v1880, 1.442695
    %v1882 = vpow.pop %v1881
    %v1883 = vadd.f32 %v1882, 1.0
    %v1884 = vrcp.pop %v1883
    %v1885 = vmul.f32 1.0, %v1884
    %v1886 = vtanh.pop %v1879
    %v1887 = vmul.f32 %v1885, %v1794
    %1889 = vrot.lane.b32.xlu0 %v1886, 64
    %v1890 = vpop.permute.xlu0 %1889
    %v1892 = vmul.f32 %v1885, %v1890
    %1894 = vrot.lane.b32.xlu0 %v1892, 32
    %v1895 = vpop.permute.xlu0 %1894
    %v1897 = vadd.f32 %v1887, %v1895
    %v1898 = vtanh.pop %v1897
    %1900 = vrot.lane.b32.xlu0 %v1898, 64
    %v1901 = vpop.permute.xlu0 %1900
    %v1903 = vmul.f32 %v1885, %v1901
    %1905 = vrot.lane.b32.xlu0 %v1903, 32
    %v1906 = vpop.permute.xlu0 %1905
    %1908 = vst.msk [vmem:[%s910] sm:$0xff] %vm355, %v1906
    %v1909 = vld [vmem:[%s912] sm:$0xff]
    %v1910 = vsel %vm355, %v1906, 0
    %1912 = vmatprep.subr.mxu0 0.0
    %1913 = vmatpush1.msra.mxu0 %v1351
    %1914 = vmatprep.subr.mxu0 0.0
    %1915 = vmatpush1.msra.mxu0 %v1352
    %1916 = vmatprep.subr.mxu0 0.0
    %1917 = vmatpush1.msra.mxu0 %v1353
    %1918 = vmatprep.subr.mxu0 0.0
    %1919 = vmatpush1.msra.mxu0 %v1354
    %1920 = vmatprep.subr.mxu0 0.0
    %1921 = vmatpush1.msra.mxu0 0.0
    %1922 = vmatprep.subr.mxu0 0.0
    %1923 = vmatpush1.msra.mxu0 0.0
    %1924 = vmatprep.subr.mxu0 0.0
    %1925 = vmatpush1.msra.mxu0 0.0
    %1926 = vmatprep.subr.mxu0 0.0
    %1927 = vmatpush1.msra.mxu0 0.0
    %1928 = vmatprep.subr.mxu0 0.0
    %1929 = vmatpush1.msra.mxu0 0.0
    %1930 = vmatprep.subr.mxu0 0.0
    %1931 = vmatpush1.msra.mxu0 0.0
    %1932 = vmatprep.subr.mxu0 0.0
    %1933 = vmatpush1.msra.mxu0 0.0
    %1934 = vmatprep.subr.mxu0 0.0
    %1935 = vmatpush1.msra.mxu0 0.0
    %1936 = vmatprep.subr.mxu0 0.0
    %1937 = vmatpush1.msra.mxu0 0.0
    %1938 = vmatprep.subr.mxu0 0.0
    %1939 = vmatpush1.msra.mxu0 0.0
    %1940 = vmatprep.subr.mxu0 0.0
    %1941 = vmatpush1.msra.mxu0 0.0
    %1942 = vmatprep.subr.mxu0 0.0
    %1943 = vmatpush1.msra.mxu0 0.0
    %1944 = vmatprep.subr.mxu0 0.0
    %1945 = vmatpush1.msra.mxu0 0.0
    %1946 = vmatprep.subr.mxu0 0.0
    %1947 = vmatpush1.msra.mxu0 0.0
    %1948 = vmatprep.subr.mxu0 0.0
    %1949 = vmatpush1.msra.mxu0 0.0
    %1950 = vmatprep.subr.mxu0 0.0
    %1951 = vmatpush1.msra.mxu0 0.0
    %1952 = vmatprep.subr.mxu0 0.0
    %1953 = vmatpush1.msra.mxu0 0.0
    %1954 = vmatprep.subr.mxu0 0.0
    %1955 = vmatpush1.msra.mxu0 0.0
    %1956 = vmatprep.subr.mxu0 0.0
    %1957 = vmatpush1.msra.mxu0 0.0
    %1958 = vmatprep.subr.mxu0 0.0
    %1959 = vmatpush1.msra.mxu0 0.0
    %1960 = vmatprep.subr.mxu0 0.0
    %1961 = vmatpush1.msra.mxu0 0.0
    %1962 = vmatprep.subr.mxu0 0.0
    %1963 = vmatpush1.msra.mxu0 0.0
    %1964 = vmatprep.subr.mxu0 0.0
    %1965 = vmatpush1.msra.mxu0 0.0
    %1966 = vmatprep.subr.mxu0 0.0
    %1967 = vmatpush1.msra.mxu0 0.0
    %1968 = vmatprep.subr.mxu0 0.0
    %1969 = vmatpush1.msra.mxu0 0.0
    %1970 = vmatprep.subr.mxu0 0.0
    %1971 = vmatpush1.msra.mxu0 0.0
    %1972 = vmatprep.subr.mxu0 0.0
    %1973 = vmatpush1.msra.mxu0 0.0
    %1974 = vmatprep.subr.mxu0 0.0
    %1975 = vmatpush1.msra.mxu0 0.0
    %1976 = vmatprep.mubr.f32.mxu0 0.0
    %1977 = vmatmul.mubr.f32.gmra.mrb[0].mxu0 %v1910
    %v1978 = vpop.f32.mrb[0].mxu0
    %v1979 = vadd.f32 0.0, %v1978
    %v1980 = vpop.f32.mrb[0].mxu0
    %1981 = vdwg.mxu0
    %v1982 = vadd.f32 %v1909, %v1979
    %v1983 = vxor.u32 %v1982, 2147483648
    %v1984 = vmul.f32 %v1983, 1.442695
    %v1985 = vpow.pop %v1984
    %v1986 = vadd.f32 %v1985, 1.0
    %v1987 = vrcp.pop %v1986
    %v1988 = vmul.f32 1.0, %v1987
    %v1989 = vtanh.pop %v1982
    %v1990 = vmul.f32 %v1988, %v1897
    %1992 = vrot.lane.b32.xlu0 %v1989, 64
    %v1993 = vpop.permute.xlu0 %1992
    %v1995 = vmul.f32 %v1988, %v1993
    %1997 = vrot.lane.b32.xlu0 %v1995, 32
    %v1998 = vpop.permute.xlu0 %1997
    %v2000 = vadd.f32 %v1990, %v1998
    %v2001 = vtanh.pop %v2000
    %2003 = vrot.lane.b32.xlu0 %v2001, 64
    %v2004 = vpop.permute.xlu0 %2003
    %v2006 = vmul.f32 %v1988, %v2004
    %2008 = vrot.lane.b32.xlu0 %v2006, 32
    %v2009 = vpop.permute.xlu0 %2008
    %2011 = vst.msk [vmem:[%s1015] sm:$0xff] %vm355, %v2009
    %v2012 = vld [vmem:[%s1017] sm:$0xff]
    %v2013 = vsel %vm355, %v2009, 0
    %2015 = vmatprep.subr.mxu0 0.0
    %2016 = vmatpush1.msra.mxu0 %v1351
    %2017 = vmatprep.subr.mxu0 0.0
    %2018 = vmatpush1.msra.mxu0 %v1352
    %2019 = vmatprep.subr.mxu0 0.0
    %2020 = vmatpush1.msra.mxu0 %v1353
    %2021 = vmatprep.subr.mxu0 0.0
    %2022 = vmatpush1.msra.mxu0 %v1354
    %2023 = vmatprep.subr.mxu0 0.0
    %2024 = vmatpush1.msra.mxu0 0.0
    %2025 = vmatprep.subr.mxu0 0.0
    %2026 = vmatpush1.msra.mxu0 0.0
    %2027 = vmatprep.subr.mxu0 0.0
    %2028 = vmatpush1.msra.mxu0 0.0
    %2029 = vmatprep.subr.mxu0 0.0
    %2030 = vmatpush1.msra.mxu0 0.0
    %2031 = vmatprep.subr.mxu0 0.0
    %2032 = vmatpush1.msra.mxu0 0.0
    %2033 = vmatprep.subr.mxu0 0.0
    %2034 = vmatpush1.msra.mxu0 0.0
    %2035 = vmatprep.subr.mxu0 0.0
    %2036 = vmatpush1.msra.mxu0 0.0
    %2037 = vmatprep.subr.mxu0 0.0
    %2038 = vmatpush1.msra.mxu0 0.0
    %2039 = vmatprep.subr.mxu0 0.0
    %2040 = vmatpush1.msra.mxu0 0.0
    %2041 = vmatprep.subr.mxu0 0.0
    %2042 = vmatpush1.msra.mxu0 0.0
    %2043 = vmatprep.subr.mxu0 0.0
    %2044 = vmatpush1.msra.mxu0 0.0
    %2045 = vmatprep.subr.mxu0 0.0
    %2046 = vmatpush1.msra.mxu0 0.0
    %2047 = vmatprep.subr.mxu0 0.0
    %2048 = vmatpush1.msra.mxu0 0.0
    %2049 = vmatprep.subr.mxu0 0.0
    %2050 = vmatpush1.msra.mxu0 0.0
    %2051 = vmatprep.subr.mxu0 0.0
    %2052 = vmatpush1.msra.mxu0 0.0
    %2053 = vmatprep.subr.mxu0 0.0
    %2054 = vmatpush1.msra.mxu0 0.0
    %2055 = vmatprep.subr.mxu0 0.0
    %2056 = vmatpush1.msra.mxu0 0.0
    %2057 = vmatprep.subr.mxu0 0.0
    %2058 = vmatpush1.msra.mxu0 0.0
    %2059 = vmatprep.subr.mxu0 0.0
    %2060 = vmatpush1.msra.mxu0 0.0
    %2061 = vmatprep.subr.mxu0 0.0
    %2062 = vmatpush1.msra.mxu0 0.0
    %2063 = vmatprep.subr.mxu0 0.0
    %2064 = vmatpush1.msra.mxu0 0.0
    %2065 = vmatprep.subr.mxu0 0.0
    %2066 = vmatpush1.msra.mxu0 0.0
    %2067 = vmatprep.subr.mxu0 0.0
    %2068 = vmatpush1.msra.mxu0 0.0
    %2069 = vmatprep.subr.mxu0 0.0
    %2070 = vmatpush1.msra.mxu0 0.0
    %2071 = vmatprep.subr.mxu0 0.0
    %2072 = vmatpush1.msra.mxu0 0.0
    %2073 = vmatprep.subr.mxu0 0.0
    %2074 = vmatpush1.msra.mxu0 0.0
    %2075 = vmatprep.subr.mxu0 0.0
    %2076 = vmatpush1.msra.mxu0 0.0
    %2077 = vmatprep.subr.mxu0 0.0
    %2078 = vmatpush1.msra.mxu0 0.0
    %2079 = vmatprep.mubr.f32.mxu0 0.0
    %2080 = vmatmul.mubr.f32.gmra.mrb[0].mxu0 %v2013
    %v2081 = vpop.f32.mrb[0].mxu0
    %v2082 = vadd.f32 0.0, %v2081
    %v2083 = vpop.f32.mrb[0].mxu0
    %2084 = vdwg.mxu0
    %v2085 = vadd.f32 %v2012, %v2082
    %v2086 = vxor.u32 %v2085, 2147483648
    %v2087 = vmul.f32 %v2086, 1.442695
    %v2088 = vpow.pop %v2087
    %v2089 = vadd.f32 %v2088, 1.0
    %v2090 = vrcp.pop %v2089
    %v2091 = vmul.f32 1.0, %v2090
    %v2092 = vtanh.pop %v2085
    %v2093 = vmul.f32 %v2091, %v2000
    %2095 = vrot.lane.b32.xlu0 %v2092, 64
    %v2096 = vpop.permute.xlu0 %2095
    %v2098 = vmul.f32 %v2091, %v2096
    %2100 = vrot.lane.b32.xlu0 %v2098, 32
    %v2101 = vpop.permute.xlu0 %2100
    %v2103 = vadd.f32 %v2093, %v2101
    %v2104 = vtanh.pop %v2103
    %2106 = vrot.lane.b32.xlu0 %v2104, 64
    %v2107 = vpop.permute.xlu0 %2106
    %v2109 = vmul.f32 %v2091, %v2107
    %2111 = vrot.lane.b32.xlu0 %v2109, 32
    %v2112 = vpop.permute.xlu0 %2111
    %2114 = vst.msk [vmem:[%s1120] sm:$0xff] %vm355, %v2112
    %v2115 = vld [vmem:[%s1122] sm:$0xff]
    %v2116 = vsel %vm355, %v2112, 0
    %2118 = vmatprep.subr.mxu0 0.0
    %2119 = vmatpush1.msra.mxu0 %v1351
    %2120 = vmatprep.subr.mxu0 0.0
    %2121 = vmatpush1.msra.mxu0 %v1352
    %2122 = vmatprep.subr.mxu0 0.0
    %2123 = vmatpush1.msra.mxu0 %v1353
    %2124 = vmatprep.subr.mxu0 0.0
    %2125 = vmatpush1.msra.mxu0 %v1354
    %2126 = vmatprep.subr.mxu0 0.0
    %2127 = vmatpush1.msra.mxu0 0.0
    %2128 = vmatprep.subr.mxu0 0.0
    %2129 = vmatpush1.msra.mxu0 0.0
    %2130 = vmatprep.subr.mxu0 0.0
    %2131 = vmatpush1.msra.mxu0 0.0
    %2132 = vmatprep.subr.mxu0 0.0
    %2133 = vmatpush1.msra.mxu0 0.0
    %2134 = vmatprep.subr.mxu0 0.0
    %2135 = vmatpush1.msra.mxu0 0.0
    %2136 = vmatprep.subr.mxu0 0.0
    %2137 = vmatpush1.msra.mxu0 0.0
    %2138 = vmatprep.subr.mxu0 0.0
    %2139 = vmatpush1.msra.mxu0 0.0
    %2140 = vmatprep.subr.mxu0 0.0
    %2141 = vmatpush1.msra.mxu0 0.0
    %2142 = vmatprep.subr.mxu0 0.0
    %2143 = vmatpush1.msra.mxu0 0.0
    %2144 = vmatprep.subr.mxu0 0.0
    %2145 = vmatpush1.msra.mxu0 0.0
    %2146 = vmatprep.subr.mxu0 0.0
    %2147 = vmatpush1.msra.mxu0 0.0
    %2148 = vmatprep.subr.mxu0 0.0
    %2149 = vmatpush1.msra.mxu0 0.0
    %2150 = vmatprep.subr.mxu0 0.0
    %2151 = vmatpush1.msra.mxu0 0.0
    %2152 = vmatprep.subr.mxu0 0.0
    %2153 = vmatpush1.msra.mxu0 0.0
    %2154 = vmatprep.subr.mxu0 0.0
    %2155 = vmatpush1.msra.mxu0 0.0
    %2156 = vmatprep.subr.mxu0 0.0
    %2157 = vmatpush1.msra.mxu0 0.0
    %2158 = vmatprep.subr.mxu0 0.0
    %2159 = vmatpush1.msra.mxu0 0.0
    %2160 = vmatprep.subr.mxu0 0.0
    %2161 = vmatpush1.msra.mxu0 0.0
    %2162 = vmatprep.subr.mxu0 0.0
    %2163 = vmatpush1.msra.mxu0 0.0
    %2164 = vmatprep.subr.mxu0 0.0
    %2165 = vmatpush1.msra.mxu0 0.0
    %2166 = vmatprep.subr.mxu0 0.0
    %2167 = vmatpush1.msra.mxu0 0.0
    %2168 = vmatprep.subr.mxu0 0.0
    %2169 = vmatpush1.msra.mxu0 0.0
    %2170 = vmatprep.subr.mxu0 0.0
    %2171 = vmatpush1.msra.mxu0 0.0
    %2172 = vmatprep.subr.mxu0 0.0
    %2173 = vmatpush1.msra.mxu0 0.0
    %2174 = vmatprep.subr.mxu0 0.0
    %2175 = vmatpush1.msra.mxu0 0.0
    %2176 = vmatprep.subr.mxu0 0.0
    %2177 = vmatpush1.msra.mxu0 0.0
    %2178 = vmatprep.subr.mxu0 0.0
    %2179 = vmatpush1.msra.mxu0 0.0
    %2180 = vmatprep.subr.mxu0 0.0
    %2181 = vmatpush1.msra.mxu0 0.0
    %2182 = vmatprep.mubr.f32.mxu0 0.0
    %2183 = vmatmul.mubr.f32.gmra.mrb[0].mxu0 %v2116
    %v2184 = vpop.f32.mrb[0].mxu0
    %v2185 = vadd.f32 0.0, %v2184
    %v2186 = vpop.f32.mrb[0].mxu0
    %2187 = vdwg.mxu0
    %v2188 = vadd.f32 %v2115, %v2185
    %v2189 = vxor.u32 %v2188, 2147483648
    %v2190 = vmul.f32 %v2189, 1.442695
    %v2191 = vpow.pop %v2190
    %v2192 = vadd.f32 %v2191, 1.0
    %v2193 = vrcp.pop %v2192
    %v2194 = vmul.f32 1.0, %v2193
    %v2195 = vtanh.pop %v2188
    %v2196 = vmul.f32 %v2194, %v2103
    %2198 = vrot.lane.b32.xlu0 %v2195, 64
    %v2199 = vpop.permute.xlu0 %2198
    %v2201 = vmul.f32 %v2194, %v2199
    %2203 = vrot.lane.b32.xlu0 %v2201, 32
    %v2204 = vpop.permute.xlu0 %2203
    %v2206 = vadd.f32 %v2196, %v2204
    %v2207 = vtanh.pop %v2206
    %2209 = vrot.lane.b32.xlu0 %v2207, 64
    %v2210 = vpop.permute.xlu0 %2209
    %v2212 = vmul.f32 %v2194, %v2210
    %2214 = vrot.lane.b32.xlu0 %v2212, 32
    %v2215 = vpop.permute.xlu0 %2214
    %2217 = vst.msk [vmem:[%s1225] sm:$0xff] %vm355, %v2215
    %v2218 = vld [vmem:[%s1227] sm:$0xff]
    %v2219 = vsel %vm355, %v2215, 0
    %2221 = vmatprep.subr.mxu0 0.0
    %2222 = vmatpush1.msra.mxu0 %v1351
    %2223 = vmatprep.subr.mxu0 0.0
    %2224 = vmatpush1.msra.mxu0 %v1352
    %2225 = vmatprep.subr.mxu0 0.0
    %2226 = vmatpush1.msra.mxu0 %v1353
    %2227 = vmatprep.subr.mxu0 0.0
    %2228 = vmatpush1.msra.mxu0 %v1354
    %2229 = vmatprep.subr.mxu0 0.0
    %2230 = vmatpush1.msra.mxu0 0.0
    %2231 = vmatprep.subr.mxu0 0.0
    %2232 = vmatpush1.msra.mxu0 0.0
    %2233 = vmatprep.subr.mxu0 0.0
    %2234 = vmatpush1.msra.mxu0 0.0
    %2235 = vmatprep.subr.mxu0 0.0
    %2236 = vmatpush1.msra.mxu0 0.0
    %2237 = vmatprep.subr.mxu0 0.0
    %2238 = vmatpush1.msra.mxu0 0.0
    %2239 = vmatprep.subr.mxu0 0.0
    %2240 = vmatpush1.msra.mxu0 0.0
    %2241 = vmatprep.subr.mxu0 0.0
    %2242 = vmatpush1.msra.mxu0 0.0
    %2243 = vmatprep.subr.mxu0 0.0
    %2244 = vmatpush1.msra.mxu0 0.0
    %2245 = vmatprep.subr.mxu0 0.0
    %2246 = vmatpush1.msra.mxu0 0.0
    %2247 = vmatprep.subr.mxu0 0.0
    %2248 = vmatpush1.msra.mxu0 0.0
    %2249 = vmatprep.subr.mxu0 0.0
    %2250 = vmatpush1.msra.mxu0 0.0
    %2251 = vmatprep.subr.mxu0 0.0
    %2252 = vmatpush1.msra.mxu0 0.0
    %2253 = vmatprep.subr.mxu0 0.0
    %2254 = vmatpush1.msra.mxu0 0.0
    %2255 = vmatprep.subr.mxu0 0.0
    %2256 = vmatpush1.msra.mxu0 0.0
    %2257 = vmatprep.subr.mxu0 0.0
    %2258 = vmatpush1.msra.mxu0 0.0
    %2259 = vmatprep.subr.mxu0 0.0
    %2260 = vmatpush1.msra.mxu0 0.0
    %2261 = vmatprep.subr.mxu0 0.0
    %2262 = vmatpush1.msra.mxu0 0.0
    %2263 = vmatprep.subr.mxu0 0.0
    %2264 = vmatpush1.msra.mxu0 0.0
    %2265 = vmatprep.subr.mxu0 0.0
    %2266 = vmatpush1.msra.mxu0 0.0
    %2267 = vmatprep.subr.mxu0 0.0
    %2268 = vmatpush1.msra.mxu0 0.0
    %2269 = vmatprep.subr.mxu0 0.0
    %2270 = vmatpush1.msra.mxu0 0.0
    %2271 = vmatprep.subr.mxu0 0.0
    %2272 = vmatpush1.msra.mxu0 0.0
    %2273 = vmatprep.subr.mxu0 0.0
    %2274 = vmatpush1.msra.mxu0 0.0
    %2275 = vmatprep.subr.mxu0 0.0
    %2276 = vmatpush1.msra.mxu0 0.0
    %2277 = vmatprep.subr.mxu0 0.0
    %2278 = vmatpush1.msra.mxu0 0.0
    %2279 = vmatprep.subr.mxu0 0.0
    %2280 = vmatpush1.msra.mxu0 0.0
    %2281 = vmatprep.subr.mxu0 0.0
    %2282 = vmatpush1.msra.mxu0 0.0
    %2283 = vmatprep.subr.mxu0 0.0
    %2284 = vmatpush1.msra.mxu0 0.0
    %2285 = vmatprep.mubr.f32.mxu0 0.0
    %2286 = vmatmul.mubr.f32.gmra.mrb[0].mxu0 %v2219
    %v2287 = vpop.f32.mrb[0].mxu0
    %v2288 = vadd.f32 0.0, %v2287
    %v2289 = vpop.f32.mrb[0].mxu0
    %2290 = vdwg.mxu0
    %v2291 = vadd.f32 %v2218, %v2288
    %v2292 = vxor.u32 %v2291, 2147483648
    %v2293 = vmul.f32 %v2292, 1.442695
    %v2294 = vpow.pop %v2293
    %v2295 = vadd.f32 %v2294, 1.0
    %v2296 = vrcp.pop %v2295
    %v2297 = vmul.f32 1.0, %v2296
    %v2298 = vtanh.pop %v2291
    %v2299 = vmul.f32 %v2297, %v2206
    %2301 = vrot.lane.b32.xlu0 %v2298, 64
    %v2302 = vpop.permute.xlu0 %2301
    %v2304 = vmul.f32 %v2297, %v2302
    %2306 = vrot.lane.b32.xlu0 %v2304, 32
    %v2307 = vpop.permute.xlu0 %2306
    %v2309 = vadd.f32 %v2299, %v2307
    %v2310 = vtanh.pop %v2309
    %2312 = vrot.lane.b32.xlu0 %v2310, 64
    %v2313 = vpop.permute.xlu0 %2312
    %v2315 = vmul.f32 %v2297, %v2313
    %2317 = vrot.lane.b32.xlu0 %v2315, 32
    %v2318 = vpop.permute.xlu0 %2317
    %2320 = vst.msk [vmem:[%s1330] sm:$0xff] %vm355, %v2318
    %s2321 = scalar_lea.vmem [#allocation17], 2
    %2322 = vst.msk [vmem:[%s2321] sm:$0x3] %vm1332, %v2318
    %2324 = vrot.lane.b32.xlu0 %v2309, 96
    %v2325 = vpop.permute.xlu0 %2324
    %s2327 = scalar_lea.vmem [#allocation19], 2
    %2328 = vst.msk [vmem:[%s2327] sm:$0x3] %vm1332, %v2325
    %v2329 = vld [vmem:[#allocation3] sm:$0xff]
    %v2330 = vld [vmem:[#allocation3 + $0x8] sm:$0xff]
    %v2331 = vld [vmem:[#allocation3 + $0x10] sm:$0xff]
    %v2332 = vld [vmem:[#allocation3 + $0x18] sm:$0xff]
    %v2333 = vld [vmem:[#allocation3 + $0x20] sm:$0xff]
    %v2334 = vld [vmem:[#allocation3 + $0x28] sm:$0xff]
    %v2335 = vld [vmem:[#allocation3 + $0x30] sm:$0xff]
    %v2336 = vld [vmem:[#allocation3 + $0x38] sm:$0xff]
    %v2337 = vld [vmem:[#allocation13] sm:$0xff]
    %v2338 = vld [vmem:[#allocation13 + $0x8] sm:$0xff]
    %v2339 = vld [vmem:[#allocation13 + $0x10] sm:$0xff]
    %v2340 = vld [vmem:[#allocation13 + $0x18] sm:$0xff]
    %v2341 = vld [vmem:[#allocation15] sm:$0xff]
    %v2342 = vld [vmem:[#allocation15 + $0x8] sm:$0xff]
    %v2343 = vld [vmem:[#allocation15 + $0x10] sm:$0xff]
    %v2344 = vld [vmem:[#allocation15 + $0x18] sm:$0xff]
    %v2345 = vld [vmem:[%s10] sm:$0x1]
    %v2347 = vlaneseq
    %v2348 = vshrl.u32 %v2347, 7
    %v2349 = vsub.s32 0, %v2348
    %v2350 = vrot.slane %v2345, %v2349
    %v2353 = vsel %vm355, %v2329, 0
    %v2356 = vsel %vm355, %v2330, 0
    %v2359 = vsel %vm355, %v2331, 0
    %v2362 = vsel %vm355, %v2332, 0
    %v2365 = vsel %vm355, %v2333, 0
    %v2368 = vsel %vm355, %v2334, 0
    %v2371 = vsel %vm355, %v2335, 0
    %v2374 = vsel %vm355, %v2336, 0
    %2376 = vmatprep.subr.mxu0 0.0
    %2377 = vmatpush1.msra.mxu0 %v2337
    %2378 = vmatprep.subr.mxu0 0.0
    %2379 = vmatpush1.msra.mxu0 %v2338
    %2380 = vmatprep.subr.mxu0 0.0
    %2381 = vmatpush1.msra.mxu0 %v2339
    %2382 = vmatprep.subr.mxu0 0.0
    %2383 = vmatpush1.msra.mxu0 %v2340
    %2384 = vmatprep.subr.mxu0 0.0
    %2385 = vmatpush1.msra.mxu0 0.0
    %2386 = vmatprep.subr.mxu0 0.0
    %2387 = vmatpush1.msra.mxu0 0.0
    %2388 = vmatprep.subr.mxu0 0.0
    %2389 = vmatpush1.msra.mxu0 0.0
    %2390 = vmatprep.subr.mxu0 0.0
    %2391 = vmatpush1.msra.mxu0 0.0
    %2392 = vmatprep.subr.mxu0 0.0
    %2393 = vmatpush1.msra.mxu0 0.0
    %2394 = vmatprep.subr.mxu0 0.0
    %2395 = vmatpush1.msra.mxu0 0.0
    %2396 = vmatprep.subr.mxu0 0.0
    %2397 = vmatpush1.msra.mxu0 0.0
    %2398 = vmatprep.subr.mxu0 0.0
    %2399 = vmatpush1.msra.mxu0 0.0
    %2400 = vmatprep.subr.mxu0 0.0
    %2401 = vmatpush1.msra.mxu0 0.0
    %2402 = vmatprep.subr.mxu0 0.0
    %2403 = vmatpush1.msra.mxu0 0.0
    %2404 = vmatprep.subr.mxu0 0.0
    %2405 = vmatpush1.msra.mxu0 0.0
    %2406 = vmatprep.subr.mxu0 0.0
    %2407 = vmatpush1.msra.mxu0 0.0
    %2408 = vmatprep.subr.mxu0 0.0
    %2409 = vmatpush1.msra.mxu0 0.0
    %2410 = vmatprep.subr.mxu0 0.0
    %2411 = vmatpush1.msra.mxu0 0.0
    %2412 = vmatprep.subr.mxu0 0.0
    %2413 = vmatpush1.msra.mxu0 0.0
    %2414 = vmatprep.subr.mxu0 0.0
    %2415 = vmatpush1.msra.mxu0 0.0
    %2416 = vmatprep.subr.mxu0 0.0
    %2417 = vmatpush1.msra.mxu0 0.0
    %2418 = vmatprep.subr.mxu0 0.0
    %2419 = vmatpush1.msra.mxu0 0.0
    %2420 = vmatprep.subr.mxu0 0.0
    %2421 = vmatpush1.msra.mxu0 0.0
    %2422 = vmatprep.subr.mxu0 0.0
    %2423 = vmatpush1.msra.mxu0 0.0
    %2424 = vmatprep.subr.mxu0 0.0
    %2425 = vmatpush1.msra.mxu0 0.0
    %2426 = vmatprep.subr.mxu0 0.0
    %2427 = vmatpush1.msra.mxu0 0.0
    %2428 = vmatprep.subr.mxu0 0.0
    %2429 = vmatpush1.msra.mxu0 0.0
    %2430 = vmatprep.subr.mxu0 0.0
    %2431 = vmatpush1.msra.mxu0 0.0
    %2432 = vmatprep.subr.mxu0 0.0
    %2433 = vmatpush1.msra.mxu0 0.0
    %2434 = vmatprep.subr.mxu0 0.0
    %2435 = vmatpush1.msra.mxu0 0.0
    %2436 = vmatprep.subr.mxu0 0.0
    %2437 = vmatpush1.msra.mxu0 0.0
    %2438 = vmatprep.subr.mxu0 0.0
    %2439 = vmatpush1.msra.mxu0 0.0
    %2440 = vmatprep.mubr.f32.mxu0 0.0
    %2441 = vmatmul.mubr.f32.gmra.mrb[0].mxu0 %v2353
    %v2442 = vpop.f32.mrb[0].mxu0
    %v2443 = vadd.f32 %v2350, %v2442
    %v2444 = vpop.f32.mrb[0].mxu0
    %2445 = vmatprep.mubr.f32.mxu0 0.0
    %2446 = vmatmul.mubr.f32.gmra.mrb[0].mxu0 %v2356
    %v2447 = vpop.f32.mrb[0].mxu0
    %v2448 = vadd.f32 %v2350, %v2447
    %v2449 = vpop.f32.mrb[0].mxu0
    %2450 = vmatprep.mubr.f32.mxu0 0.0
    %2451 = vmatmul.mubr.f32.gmra.mrb[0].mxu0 %v2359
    %v2452 = vpop.f32.mrb[0].mxu0
    %v2453 = vadd.f32 %v2350, %v2452
    %v2454 = vpop.f32.mrb[0].mxu0
    %2455 = vmatprep.mubr.f32.mxu0 0.0
    %2456 = vmatmul.mubr.f32.gmra.mrb[0].mxu0 %v2362
    %v2457 = vpop.f32.mrb[0].mxu0
    %v2458 = vadd.f32 %v2350, %v2457
    %v2459 = vpop.f32.mrb[0].mxu0
    %2460 = vmatprep.mubr.f32.mxu0 0.0
    %2461 = vmatmul.mubr.f32.gmra.mrb[0].mxu0 %v2365
    %v2462 = vpop.f32.mrb[0].mxu0
    %v2463 = vadd.f32 %v2350, %v2462
    %v2464 = vpop.f32.mrb[0].mxu0
    %2465 = vmatprep.mubr.f32.mxu0 0.0
    %2466 = vmatmul.mubr.f32.gmra.mrb[0].mxu0 %v2368
    %v2467 = vpop.f32.mrb[0].mxu0
    %v2468 = vadd.f32 %v2350, %v2467
    %v2469 = vpop.f32.mrb[0].mxu0
    %2470 = vmatprep.mubr.f32.mxu0 0.0
    %2471 = vmatmul.mubr.f32.gmra.mrb[0].mxu0 %v2371
    %v2472 = vpop.f32.mrb[0].mxu0
    %v2473 = vadd.f32 %v2350, %v2472
    %v2474 = vpop.f32.mrb[0].mxu0
    %2475 = vmatprep.mubr.f32.mxu0 0.0
    %2476 = vmatmul.mubr.f32.gmra.mrb[0].mxu0 %v2374
    %v2477 = vpop.f32.mrb[0].mxu0
    %v2478 = vadd.f32 %v2350, %v2477
    %v2479 = vpop.f32.mrb[0].mxu0
    %2480 = vdwg.mxu0
    %2481 = vst [vmem:[#allocation2] sm:$0xff] %v2443
    %2482 = vst [vmem:[#allocation2 + $0x8] sm:$0xff] %v2448
    %2483 = vst [vmem:[#allocation2 + $0x10] sm:$0xff] %v2453
    %2484 = vst [vmem:[#allocation2 + $0x18] sm:$0xff] %v2458
    %2485 = vst [vmem:[#allocation2 + $0x20] sm:$0xff] %v2463
    %2486 = vst [vmem:[#allocation2 + $0x28] sm:$0xff] %v2468
    %2487 = vst [vmem:[#allocation2 + $0x30] sm:$0xff] %v2473
    %2488 = vst [vmem:[#allocation2 + $0x38] sm:$0xff] %v2478
    %v2489 = vld [vmem:[#allocation2] sm:$0xff]
    %2490 = vmatprep.subr.mxu0 0.0
    %2491 = vmatpush1.msra.mxu0 %v2341
    %2492 = vmatprep.subr.mxu0 0.0
    %2493 = vmatpush1.msra.mxu0 %v2342
    %2494 = vmatprep.subr.mxu0 0.0
    %2495 = vmatpush1.msra.mxu0 %v2343
    %2496 = vmatprep.subr.mxu0 0.0
    %2497 = vmatpush1.msra.mxu0 %v2344
    %2498 = vmatprep.subr.mxu0 0.0
    %2499 = vmatpush1.msra.mxu0 0.0
    %2500 = vmatprep.subr.mxu0 0.0
    %2501 = vmatpush1.msra.mxu0 0.0
    %2502 = vmatprep.subr.mxu0 0.0
    %2503 = vmatpush1.msra.mxu0 0.0
    %2504 = vmatprep.subr.mxu0 0.0
    %2505 = vmatpush1.msra.mxu0 0.0
    %2506 = vmatprep.subr.mxu0 0.0
    %2507 = vmatpush1.msra.mxu0 0.0
    %2508 = vmatprep.subr.mxu0 0.0
    %2509 = vmatpush1.msra.mxu0 0.0
    %2510 = vmatprep.subr.mxu0 0.0
    %2511 = vmatpush1.msra.mxu0 0.0
    %2512 = vmatprep.subr.mxu0 0.0
    %2513 = vmatpush1.msra.mxu0 0.0
    %2514 = vmatprep.subr.mxu0 0.0
    %2515 = vmatpush1.msra.mxu0 0.0
    %2516 = vmatprep.subr.mxu0 0.0
    %2517 = vmatpush1.msra.mxu0 0.0
    %2518 = vmatprep.subr.mxu0 0.0
    %2519 = vmatpush1.msra.mxu0 0.0
    %2520 = vmatprep.subr.mxu0 0.0
    %2521 = vmatpush1.msra.mxu0 0.0
    %2522 = vmatprep.subr.mxu0 0.0
    %2523 = vmatpush1.msra.mxu0 0.0
    %2524 = vmatprep.subr.mxu0 0.0
    %2525 = vmatpush1.msra.mxu0 0.0
    %2526 = vmatprep.subr.mxu0 0.0
    %2527 = vmatpush1.msra.mxu0 0.0
    %2528 = vmatprep.subr.mxu0 0.0
    %2529 = vmatpush1.msra.mxu0 0.0
    %2530 = vmatprep.subr.mxu0 0.0
    %2531 = vmatpush1.msra.mxu0 0.0
    %2532 = vmatprep.subr.mxu0 0.0
    %2533 = vmatpush1.msra.mxu0 0.0
    %2534 = vmatprep.subr.mxu0 0.0
    %2535 = vmatpush1.msra.mxu0 0.0
    %2536 = vmatprep.subr.mxu0 0.0
    %2537 = vmatpush1.msra.mxu0 0.0
    %2538 = vmatprep.subr.mxu0 0.0
    %2539 = vmatpush1.msra.mxu0 0.0
    %2540 = vmatprep.subr.mxu0 0.0
    %2541 = vmatpush1.msra.mxu0 0.0
    %2542 = vmatprep.subr.mxu0 0.0
    %2543 = vmatpush1.msra.mxu0 0.0
    %2544 = vmatprep.subr.mxu0 0.0
    %2545 = vmatpush1.msra.mxu0 0.0
    %2546 = vmatprep.subr.mxu0 0.0
    %2547 = vmatpush1.msra.mxu0 0.0
    %2548 = vmatprep.subr.mxu0 0.0
    %2549 = vmatpush1.msra.mxu0 0.0
    %2550 = vmatprep.subr.mxu0 0.0
    %2551 = vmatpush1.msra.mxu0 0.0
    %2552 = vmatprep.subr.mxu0 0.0
    %2553 = vmatpush1.msra.mxu0 0.0
    %2554 = vmatprep.mubr.f32.mxu0 0.0
    %2555 = vmatmul.mubr.f32.gmra.mrb[0].mxu0 %v495
    %v2556 = vpop.f32.mrb[0].mxu0
    %v2557 = vadd.f32 0.0, %v2556
    %v2558 = vpop.f32.mrb[0].mxu0
    %2559 = vdwg.mxu0
    %v2560 = vadd.f32 %v2489, %v2557
    %v2561 = vxor.u32 %v2560, 2147483648
    %v2562 = vmul.f32 %v2561, 1.442695
    %v2563 = vpow.pop %v2562
    %v2564 = vadd.f32 %v2563, 1.0
    %v2565 = vrcp.pop %v2564
    %v2566 = vmul.f32 1.0, %v2565
    %v2567 = vtanh.pop %v2560
    %v2568 = vmul.f32 %v2566, 0.0
    %2570 = vrot.lane.b32.xlu0 %v2567, 64
    %v2571 = vpop.permute.xlu0 %2570
    %v2573 = vmul.f32 %v2566, %v2571
    %2575 = vrot.lane.b32.xlu0 %v2573, 32
    %v2576 = vpop.permute.xlu0 %2575
    %v2578 = vadd.f32 %v2568, %v2576
    %v2579 = vtanh.pop %v2578
    %2581 = vrot.lane.b32.xlu0 %v2579, 64
    %v2582 = vpop.permute.xlu0 %2581
    %v2584 = vmul.f32 %v2566, %v2582
    %2586 = vrot.lane.b32.xlu0 %v2584, 32
    %v2587 = vpop.permute.xlu0 %2586
    %2589 = vst.msk [vmem:[#allocation3] sm:$0xff] %vm355, %v2587
    %v2590 = vld [vmem:[%s597] sm:$0xff]
    %v2591 = vsel %vm355, %v2587, 0
    %2593 = vmatprep.subr.mxu0 0.0
    %2594 = vmatpush1.msra.mxu0 %v2341
    %2595 = vmatprep.subr.mxu0 0.0
    %2596 = vmatpush1.msra.mxu0 %v2342
    %2597 = vmatprep.subr.mxu0 0.0
    %2598 = vmatpush1.msra.mxu0 %v2343
    %2599 = vmatprep.subr.mxu0 0.0
    %2600 = vmatpush1.msra.mxu0 %v2344
    %2601 = vmatprep.subr.mxu0 0.0
    %2602 = vmatpush1.msra.mxu0 0.0
    %2603 = vmatprep.subr.mxu0 0.0
    %2604 = vmatpush1.msra.mxu0 0.0
    %2605 = vmatprep.subr.mxu0 0.0
    %2606 = vmatpush1.msra.mxu0 0.0
    %2607 = vmatprep.subr.mxu0 0.0
    %2608 = vmatpush1.msra.mxu0 0.0
    %2609 = vmatprep.subr.mxu0 0.0
    %2610 = vmatpush1.msra.mxu0 0.0
    %2611 = vmatprep.subr.mxu0 0.0
    %2612 = vmatpush1.msra.mxu0 0.0
    %2613 = vmatprep.subr.mxu0 0.0
    %2614 = vmatpush1.msra.mxu0 0.0
    %2615 = vmatprep.subr.mxu0 0.0
    %2616 = vmatpush1.msra.mxu0 0.0
    %2617 = vmatprep.subr.mxu0 0.0
    %2618 = vmatpush1.msra.mxu0 0.0
    %2619 = vmatprep.subr.mxu0 0.0
    %2620 = vmatpush1.msra.mxu0 0.0
    %2621 = vmatprep.subr.mxu0 0.0
    %2622 = vmatpush1.msra.mxu0 0.0
    %2623 = vmatprep.subr.mxu0 0.0
    %2624 = vmatpush1.msra.mxu0 0.0
    %2625 = vmatprep.subr.mxu0 0.0
    %2626 = vmatpush1.msra.mxu0 0.0
    %2627 = vmatprep.subr.mxu0 0.0
    %2628 = vmatpush1.msra.mxu0 0.0
    %2629 = vmatprep.subr.mxu0 0.0
    %2630 = vmatpush1.msra.mxu0 0.0
    %2631 = vmatprep.subr.mxu0 0.0
    %2632 = vmatpush1.msra.mxu0 0.0
    %2633 = vmatprep.subr.mxu0 0.0
    %2634 = vmatpush1.msra.mxu0 0.0
    %2635 = vmatprep.subr.mxu0 0.0
    %2636 = vmatpush1.msra.mxu0 0.0
    %2637 = vmatprep.subr.mxu0 0.0
    %2638 = vmatpush1.msra.mxu0 0.0
    %2639 = vmatprep.subr.mxu0 0.0
    %2640 = vmatpush1.msra.mxu0 0.0
    %2641 = vmatprep.subr.mxu0 0.0
    %2642 = vmatpush1.msra.mxu0 0.0
    %2643 = vmatprep.subr.mxu0 0.0
    %2644 = vmatpush1.msra.mxu0 0.0
    %2645 = vmatprep.subr.mxu0 0.0
    %2646 = vmatpush1.msra.mxu0 0.0
    %2647 = vmatprep.subr.mxu0 0.0
    %2648 = vmatpush1.msra.mxu0 0.0
    %2649 = vmatprep.subr.mxu0 0.0
    %2650 = vmatpush1.msra.mxu0 0.0
    %2651 = vmatprep.subr.mxu0 0.0
    %2652 = vmatpush1.msra.mxu0 0.0
    %2653 = vmatprep.subr.mxu0 0.0
    %2654 = vmatpush1.msra.mxu0 0.0
    %2655 = vmatprep.subr.mxu0 0.0
    %2656 = vmatpush1.msra.mxu0 0.0
    %2657 = vmatprep.mubr.f32.mxu0 0.0
    %2658 = vmatmul.mubr.f32.gmra.mrb[0].mxu0 %v2591
    %v2659 = vpop.f32.mrb[0].mxu0
    %v2660 = vadd.f32 0.0, %v2659
    %v2661 = vpop.f32.mrb[0].mxu0
    %2662 = vdwg.mxu0
    %v2663 = vadd.f32 %v2590, %v2660
    %v2664 = vxor.u32 %v2663, 2147483648
    %v2665 = vmul.f32 %v2664, 1.442695
    %v2666 = vpow.pop %v2665
    %v2667 = vadd.f32 %v2666, 1.0
    %v2668 = vrcp.pop %v2667
    %v2669 = vmul.f32 1.0, %v2668
    %v2670 = vtanh.pop %v2663
    %v2671 = vmul.f32 %v2669, %v2578
    %2673 = vrot.lane.b32.xlu0 %v2670, 64
    %v2674 = vpop.permute.xlu0 %2673
    %v2676 = vmul.f32 %v2669, %v2674
    %2678 = vrot.lane.b32.xlu0 %v2676, 32
    %v2679 = vpop.permute.xlu0 %2678
    %v2681 = vadd.f32 %v2671, %v2679
    %v2682 = vtanh.pop %v2681
    %2684 = vrot.lane.b32.xlu0 %v2682, 64
    %v2685 = vpop.permute.xlu0 %2684
    %v2687 = vmul.f32 %v2669, %v2685
    %2689 = vrot.lane.b32.xlu0 %v2687, 32
    %v2690 = vpop.permute.xlu0 %2689
    %2692 = vst.msk [vmem:[%s700] sm:$0xff] %vm355, %v2690
    %v2693 = vld [vmem:[%s702] sm:$0xff]
    %v2694 = vsel %vm355, %v2690, 0
    %2696 = vmatprep.subr.mxu0 0.0
    %2697 = vmatpush1.msra.mxu0 %v2341
    %2698 = vmatprep.subr.mxu0 0.0
    %2699 = vmatpush1.msra.mxu0 %v2342
    %2700 = vmatprep.subr.mxu0 0.0
    %2701 = vmatpush1.msra.mxu0 %v2343
    %2702 = vmatprep.subr.mxu0 0.0
    %2703 = vmatpush1.msra.mxu0 %v2344
    %2704 = vmatprep.subr.mxu0 0.0
    %2705 = vmatpush1.msra.mxu0 0.0
    %2706 = vmatprep.subr.mxu0 0.0
    %2707 = vmatpush1.msra.mxu0 0.0
    %2708 = vmatprep.subr.mxu0 0.0
    %2709 = vmatpush1.msra.mxu0 0.0
    %2710 = vmatprep.subr.mxu0 0.0
    %2711 = vmatpush1.msra.mxu0 0.0
    %2712 = vmatprep.subr.mxu0 0.0
    %2713 = vmatpush1.msra.mxu0 0.0
    %2714 = vmatprep.subr.mxu0 0.0
    %2715 = vmatpush1.msra.mxu0 0.0
    %2716 = vmatprep.subr.mxu0 0.0
    %2717 = vmatpush1.msra.mxu0 0.0
    %2718 = vmatprep.subr.mxu0 0.0
    %2719 = vmatpush1.msra.mxu0 0.0
    %2720 = vmatprep.subr.mxu0 0.0
    %2721 = vmatpush1.msra.mxu0 0.0
    %2722 = vmatprep.subr.mxu0 0.0
    %2723 = vmatpush1.msra.mxu0 0.0
    %2724 = vmatprep.subr.mxu0 0.0
    %2725 = vmatpush1.msra.mxu0 0.0
    %2726 = vmatprep.subr.mxu0 0.0
    %2727 = vmatpush1.msra.mxu0 0.0
    %2728 = vmatprep.subr.mxu0 0.0
    %2729 = vmatpush1.msra.mxu0 0.0
    %2730 = vmatprep.subr.mxu0 0.0
    %2731 = vmatpush1.msra.mxu0 0.0
    %2732 = vmatprep.subr.mxu0 0.0
    %2733 = vmatpush1.msra.mxu0 0.0
    %2734 = vmatprep.subr.mxu0 0.0
    %2735 = vmatpush1.msra.mxu0 0.0
    %2736 = vmatprep.subr.mxu0 0.0
    %2737 = vmatpush1.msra.mxu0 0.0
    %2738 = vmatprep.subr.mxu0 0.0
    %2739 = vmatpush1.msra.mxu0 0.0
    %2740 = vmatprep.subr.mxu0 0.0
    %2741 = vmatpush1.msra.mxu0 0.0
    %2742 = vmatprep.subr.mxu0 0.0
    %2743 = vmatpush1.msra.mxu0 0.0
    %2744 = vmatprep.subr.mxu0 0.0
    %2745 = vmatpush1.msra.mxu0 0.0
    %2746 = vmatprep.subr.mxu0 0.0
    %2747 = vmatpush1.msra.mxu0 0.0
    %2748 = vmatprep.subr.mxu0 0.0
    %2749 = vmatpush1.msra.mxu0 0.0
    %2750 = vmatprep.subr.mxu0 0.0
    %2751 = vmatpush1.msra.mxu0 0.0
    %2752 = vmatprep.subr.mxu0 0.0
    %2753 = vmatpush1.msra.mxu0 0.0
    %2754 = vmatprep.subr.mxu0 0.0
    %2755 = vmatpush1.msra.mxu0 0.0
    %2756 = vmatprep.subr.mxu0 0.0
    %2757 = vmatpush1.msra.mxu0 0.0
    %2758 = vmatprep.subr.mxu0 0.0
    %2759 = vmatpush1.msra.mxu0 0.0
    %2760 = vmatprep.mubr.f32.mxu0 0.0
    %2761 = vmatmul.mubr.f32.gmra.mrb[0].mxu0 %v2694
    %v2762 = vpop.f32.mrb[0].mxu0
    %v2763 = vadd.f32 0.0, %v2762
    %v2764 = vpop.f32.mrb[0].mxu0
    %2765 = vdwg.mxu0
    %v2766 = vadd.f32 %v2693, %v2763
    %v2767 = vxor.u32 %v2766, 2147483648
    %v2768 = vmul.f32 %v2767, 1.442695
    %v2769 = vpow.pop %v2768
    %v2770 = vadd.f32 %v2769, 1.0
    %v2771 = vrcp.pop %v2770
    %v2772 = vmul.f32 1.0, %v2771
    %v2773 = vtanh.pop %v2766
    %v2774 = vmul.f32 %v2772, %v2681
    %2776 = vrot.lane.b32.xlu0 %v2773, 64
    %v2777 = vpop.permute.xlu0 %2776
    %v2779 = vmul.f32 %v2772, %v2777
    %2781 = vrot.lane.b32.xlu0 %v2779, 32
    %v2782 = vpop.permute.xlu0 %2781
    %v2784 = vadd.f32 %v2774, %v2782
    %v2785 = vtanh.pop %v2784
    %2787 = vrot.lane.b32.xlu0 %v2785, 64
    %v2788 = vpop.permute.xlu0 %2787
    %v2790 = vmul.f32 %v2772, %v2788
    %2792 = vrot.lane.b32.xlu0 %v2790, 32
    %v2793 = vpop.permute.xlu0 %2792
    %2795 = vst.msk [vmem:[%s805] sm:$0xff] %vm355, %v2793
    %v2796 = vld [vmem:[%s807] sm:$0xff]
    %v2797 = vsel %vm355, %v2793, 0
    %2799 = vmatprep.subr.mxu0 0.0
    %2800 = vmatpush1.msra.mxu0 %v2341
    %2801 = vmatprep.subr.mxu0 0.0
    %2802 = vmatpush1.msra.mxu0 %v2342
    %2803 = vmatprep.subr.mxu0 0.0
    %2804 = vmatpush1.msra.mxu0 %v2343
    %2805 = vmatprep.subr.mxu0 0.0
    %2806 = vmatpush1.msra.mxu0 %v2344
    %2807 = vmatprep.subr.mxu0 0.0
    %2808 = vmatpush1.msra.mxu0 0.0
    %2809 = vmatprep.subr.mxu0 0.0
    %2810 = vmatpush1.msra.mxu0 0.0
    %2811 = vmatprep.subr.mxu0 0.0
    %2812 = vmatpush1.msra.mxu0 0.0
    %2813 = vmatprep.subr.mxu0 0.0
    %2814 = vmatpush1.msra.mxu0 0.0
    %2815 = vmatprep.subr.mxu0 0.0
    %2816 = vmatpush1.msra.mxu0 0.0
    %2817 = vmatprep.subr.mxu0 0.0
    %2818 = vmatpush1.msra.mxu0 0.0
    %2819 = vmatprep.subr.mxu0 0.0
    %2820 = vmatpush1.msra.mxu0 0.0
    %2821 = vmatprep.subr.mxu0 0.0
    %2822 = vmatpush1.msra.mxu0 0.0
    %2823 = vmatprep.subr.mxu0 0.0
    %2824 = vmatpush1.msra.mxu0 0.0
    %2825 = vmatprep.subr.mxu0 0.0
    %2826 = vmatpush1.msra.mxu0 0.0
    %2827 = vmatprep.subr.mxu0 0.0
    %2828 = vmatpush1.msra.mxu0 0.0
    %2829 = vmatprep.subr.mxu0 0.0
    %2830 = vmatpush1.msra.mxu0 0.0
    %2831 = vmatprep.subr.mxu0 0.0
    %2832 = vmatpush1.msra.mxu0 0.0
    %2833 = vmatprep.subr.mxu0 0.0
    %2834 = vmatpush1.msra.mxu0 0.0
    %2835 = vmatprep.subr.mxu0 0.0
    %2836 = vmatpush1.msra.mxu0 0.0
    %2837 = vmatprep.subr.mxu0 0.0
    %2838 = vmatpush1.msra.mxu0 0.0
    %2839 = vmatprep.subr.mxu0 0.0
    %2840 = vmatpush1.msra.mxu0 0.0
    %2841 = vmatprep.subr.mxu0 0.0
    %2842 = vmatpush1.msra.mxu0 0.0
    %2843 = vmatprep.subr.mxu0 0.0
    %2844 = vmatpush1.msra.mxu0 0.0
    %2845 = vmatprep.subr.mxu0 0.0
    %2846 = vmatpush1.msra.mxu0 0.0
    %2847 = vmatprep.subr.mxu0 0.0
    %2848 = vmatpush1.msra.mxu0 0.0
    %2849 = vmatprep.subr.mxu0 0.0
    %2850 = vmatpush1.msra.mxu0 0.0
    %2851 = vmatprep.subr.mxu0 0.0
    %2852 = vmatpush1.msra.mxu0 0.0
    %2853 = vmatprep.subr.mxu0 0.0
    %2854 = vmatpush1.msra.mxu0 0.0
    %2855 = vmatprep.subr.mxu0 0.0
    %2856 = vmatpush1.msra.mxu0 0.0
    %2857 = vmatprep.subr.mxu0 0.0
    %2858 = vmatpush1.msra.mxu0 0.0
    %2859 = vmatprep.subr.mxu0 0.0
    %2860 = vmatpush1.msra.mxu0 0.0
    %2861 = vmatprep.subr.mxu0 0.0
    %2862 = vmatpush1.msra.mxu0 0.0
    %2863 = vmatprep.mubr.f32.mxu0 0.0
    %2864 = vmatmul.mubr.f32.gmra.mrb[0].mxu0 %v2797
    %v2865 = vpop.f32.mrb[0].mxu0
    %v2866 = vadd.f32 0.0, %v2865
    %v2867 = vpop.f32.mrb[0].mxu0
    %2868 = vdwg.mxu0
    %v2869 = vadd.f32 %v2796, %v2866
    %v2870 = vxor.u32 %v2869, 2147483648
    %v2871 = vmul.f32 %v2870, 1.442695
    %v2872 = vpow.pop %v2871
    %v2873 = vadd.f32 %v2872, 1.0
    %v2874 = vrcp.pop %v2873
    %v2875 = vmul.f32 1.0, %v2874
    %v2876 = vtanh.pop %v2869
    %v2877 = vmul.f32 %v2875, %v2784
    %2879 = vrot.lane.b32.xlu0 %v2876, 64
    %v2880 = vpop.permute.xlu0 %2879
    %v2882 = vmul.f32 %v2875, %v2880
    %2884 = vrot.lane.b32.xlu0 %v2882, 32
    %v2885 = vpop.permute.xlu0 %2884
    %v2887 = vadd.f32 %v2877, %v2885
    %v2888 = vtanh.pop %v2887
    %2890 = vrot.lane.b32.xlu0 %v2888, 64
    %v2891 = vpop.permute.xlu0 %2890
    %v2893 = vmul.f32 %v2875, %v2891
    %2895 = vrot.lane.b32.xlu0 %v2893, 32
    %v2896 = vpop.permute.xlu0 %2895
    %2898 = vst.msk [vmem:[%s910] sm:$0xff] %vm355, %v2896
    %v2899 = vld [vmem:[%s912] sm:$0xff]
    %v2900 = vsel %vm355, %v2896, 0
    %2902 = vmatprep.subr.mxu0 0.0
    %2903 = vmatpush1.msra.mxu0 %v2341
    %2904 = vmatprep.subr.mxu0 0.0
    %2905 = vmatpush1.msra.mxu0 %v2342
    %2906 = vmatprep.subr.mxu0 0.0
    %2907 = vmatpush1.msra.mxu0 %v2343
    %2908 = vmatprep.subr.mxu0 0.0
    %2909 = vmatpush1.msra.mxu0 %v2344
    %2910 = vmatprep.subr.mxu0 0.0
    %2911 = vmatpush1.msra.mxu0 0.0
    %2912 = vmatprep.subr.mxu0 0.0
    %2913 = vmatpush1.msra.mxu0 0.0
    %2914 = vmatprep.subr.mxu0 0.0
    %2915 = vmatpush1.msra.mxu0 0.0
    %2916 = vmatprep.subr.mxu0 0.0
    %2917 = vmatpush1.msra.mxu0 0.0
    %2918 = vmatprep.subr.mxu0 0.0
    %2919 = vmatpush1.msra.mxu0 0.0
    %2920 = vmatprep.subr.mxu0 0.0
    %2921 = vmatpush1.msra.mxu0 0.0
    %2922 = vmatprep.subr.mxu0 0.0
    %2923 = vmatpush1.msra.mxu0 0.0
    %2924 = vmatprep.subr.mxu0 0.0
    %2925 = vmatpush1.msra.mxu0 0.0
    %2926 = vmatprep.subr.mxu0 0.0
    %2927 = vmatpush1.msra.mxu0 0.0
    %2928 = vmatprep.subr.mxu0 0.0
    %2929 = vmatpush1.msra.mxu0 0.0
    %2930 = vmatprep.subr.mxu0 0.0
    %2931 = vmatpush1.msra.mxu0 0.0
    %2932 = vmatprep.subr.mxu0 0.0
    %2933 = vmatpush1.msra.mxu0 0.0
    %2934 = vmatprep.subr.mxu0 0.0
    %2935 = vmatpush1.msra.mxu0 0.0
    %2936 = vmatprep.subr.mxu0 0.0
    %2937 = vmatpush1.msra.mxu0 0.0
    %2938 = vmatprep.subr.mxu0 0.0
    %2939 = vmatpush1.msra.mxu0 0.0
    %2940 = vmatprep.subr.mxu0 0.0
    %2941 = vmatpush1.msra.mxu0 0.0
    %2942 = vmatprep.subr.mxu0 0.0
    %2943 = vmatpush1.msra.mxu0 0.0
    %2944 = vmatprep.subr.mxu0 0.0
    %2945 = vmatpush1.msra.mxu0 0.0
    %2946 = vmatprep.subr.mxu0 0.0
    %2947 = vmatpush1.msra.mxu0 0.0
    %2948 = vmatprep.subr.mxu0 0.0
    %2949 = vmatpush1.msra.mxu0 0.0
    %2950 = vmatprep.subr.mxu0 0.0
    %2951 = vmatpush1.msra.mxu0 0.0
    %2952 = vmatprep.subr.mxu0 0.0
    %2953 = vmatpush1.msra.mxu0 0.0
    %2954 = vmatprep.subr.mxu0 0.0
    %2955 = vmatpush1.msra.mxu0 0.0
    %2956 = vmatprep.subr.mxu0 0.0
    %2957 = vmatpush1.msra.mxu0 0.0
    %2958 = vmatprep.subr.mxu0 0.0
    %2959 = vmatpush1.msra.mxu0 0.0
    %2960 = vmatprep.subr.mxu0 0.0
    %2961 = vmatpush1.msra.mxu0 0.0
    %2962 = vmatprep.subr.mxu0 0.0
    %2963 = vmatpush1.msra.mxu0 0.0
    %2964 = vmatprep.subr.mxu0 0.0
    %2965 = vmatpush1.msra.mxu0 0.0
    %2966 = vmatprep.mubr.f32.mxu0 0.0
    %2967 = vmatmul.mubr.f32.gmra.mrb[0].mxu0 %v2900
    %v2968 = vpop.f32.mrb[0].mxu0
    %v2969 = vadd.f32 0.0, %v2968
    %v2970 = vpop.f32.mrb[0].mxu0
    %2971 = vdwg.mxu0
    %v2972 = vadd.f32 %v2899, %v2969
    %v2973 = vxor.u32 %v2972, 2147483648
    %v2974 = vmul.f32 %v2973, 1.442695
    %v2975 = vpow.pop %v2974
    %v2976 = vadd.f32 %v2975, 1.0
    %v2977 = vrcp.pop %v2976
    %v2978 = vmul.f32 1.0, %v2977
    %v2979 = vtanh.pop %v2972
    %v2980 = vmul.f32 %v2978, %v2887
    %2982 = vrot.lane.b32.xlu0 %v2979, 64
    %v2983 = vpop.permute.xlu0 %2982
    %v2985 = vmul.f32 %v2978, %v2983
    %2987 = vrot.lane.b32.xlu0 %v2985, 32
    %v2988 = vpop.permute.xlu0 %2987
    %v2990 = vadd.f32 %v2980, %v2988
    %v2991 = vtanh.pop %v2990
    %2993 = vrot.lane.b32.xlu0 %v2991, 64
    %v2994 = vpop.permute.xlu0 %2993
    %v2996 = vmul.f32 %v2978, %v2994
    %2998 = vrot.lane.b32.xlu0 %v2996, 32
    %v2999 = vpop.permute.xlu0 %2998
    %3001 = vst.msk [vmem:[%s1015] sm:$0xff] %vm355, %v2999
    %v3002 = vld [vmem:[%s1017] sm:$0xff]
    %v3003 = vsel %vm355, %v2999, 0
    %3005 = vmatprep.subr.mxu0 0.0
    %3006 = vmatpush1.msra.mxu0 %v2341
    %3007 = vmatprep.subr.mxu0 0.0
    %3008 = vmatpush1.msra.mxu0 %v2342
    %3009 = vmatprep.subr.mxu0 0.0
    %3010 = vmatpush1.msra.mxu0 %v2343
    %3011 = vmatprep.subr.mxu0 0.0
    %3012 = vmatpush1.msra.mxu0 %v2344
    %3013 = vmatprep.subr.mxu0 0.0
    %3014 = vmatpush1.msra.mxu0 0.0
    %3015 = vmatprep.subr.mxu0 0.0
    %3016 = vmatpush1.msra.mxu0 0.0
    %3017 = vmatprep.subr.mxu0 0.0
    %3018 = vmatpush1.msra.mxu0 0.0
    %3019 = vmatprep.subr.mxu0 0.0
    %3020 = vmatpush1.msra.mxu0 0.0
    %3021 = vmatprep.subr.mxu0 0.0
    %3022 = vmatpush1.msra.mxu0 0.0
    %3023 = vmatprep.subr.mxu0 0.0
    %3024 = vmatpush1.msra.mxu0 0.0
    %3025 = vmatprep.subr.mxu0 0.0
    %3026 = vmatpush1.msra.mxu0 0.0
    %3027 = vmatprep.subr.mxu0 0.0
    %3028 = vmatpush1.msra.mxu0 0.0
    %3029 = vmatprep.subr.mxu0 0.0
    %3030 = vmatpush1.msra.mxu0 0.0
    %3031 = vmatprep.subr.mxu0 0.0
    %3032 = vmatpush1.msra.mxu0 0.0
    %3033 = vmatprep.subr.mxu0 0.0
    %3034 = vmatpush1.msra.mxu0 0.0
    %3035 = vmatprep.subr.mxu0 0.0
    %3036 = vmatpush1.msra.mxu0 0.0
    %3037 = vmatprep.subr.mxu0 0.0
    %3038 = vmatpush1.msra.mxu0 0.0
    %3039 = vmatprep.subr.mxu0 0.0
    %3040 = vmatpush1.msra.mxu0 0.0
    %3041 = vmatprep.subr.mxu0 0.0
    %3042 = vmatpush1.msra.mxu0 0.0
    %3043 = vmatprep.subr.mxu0 0.0
    %3044 = vmatpush1.msra.mxu0 0.0
    %3045 = vmatprep.subr.mxu0 0.0
    %3046 = vmatpush1.msra.mxu0 0.0
    %3047 = vmatprep.subr.mxu0 0.0
    %3048 = vmatpush1.msra.mxu0 0.0
    %3049 = vmatprep.subr.mxu0 0.0
    %3050 = vmatpush1.msra.mxu0 0.0
    %3051 = vmatprep.subr.mxu0 0.0
    %3052 = vmatpush1.msra.mxu0 0.0
    %3053 = vmatprep.subr.mxu0 0.0
    %3054 = vmatpush1.msra.mxu0 0.0
    %3055 = vmatprep.subr.mxu0 0.0
    %3056 = vmatpush1.msra.mxu0 0.0
    %3057 = vmatprep.subr.mxu0 0.0
    %3058 = vmatpush1.msra.mxu0 0.0
    %3059 = vmatprep.subr.mxu0 0.0
    %3060 = vmatpush1.msra.mxu0 0.0
    %3061 = vmatprep.subr.mxu0 0.0
    %3062 = vmatpush1.msra.mxu0 0.0
    %3063 = vmatprep.subr.mxu0 0.0
    %3064 = vmatpush1.msra.mxu0 0.0
    %3065 = vmatprep.subr.mxu0 0.0
    %3066 = vmatpush1.msra.mxu0 0.0
    %3067 = vmatprep.subr.mxu0 0.0
    %3068 = vmatpush1.msra.mxu0 0.0
    %3069 = vmatprep.mubr.f32.mxu0 0.0
    %3070 = vmatmul.mubr.f32.gmra.mrb[0].mxu0 %v3003
    %v3071 = vpop.f32.mrb[0].mxu0
    %v3072 = vadd.f32 0.0, %v3071
    %v3073 = vpop.f32.mrb[0].mxu0
    %3074 = vdwg.mxu0
    %v3075 = vadd.f32 %v3002, %v3072
    %v3076 = vxor.u32 %v3075, 2147483648
    %v3077 = vmul.f32 %v3076, 1.442695
    %v3078 = vpow.pop %v3077
    %v3079 = vadd.f32 %v3078, 1.0
    %v3080 = vrcp.pop %v3079
    %v3081 = vmul.f32 1.0, %v3080
    %v3082 = vtanh.pop %v3075
    %v3083 = vmul.f32 %v3081, %v2990
    %3085 = vrot.lane.b32.xlu0 %v3082, 64
    %v3086 = vpop.permute.xlu0 %3085
    %v3088 = vmul.f32 %v3081, %v3086
    %3090 = vrot.lane.b32.xlu0 %v3088, 32
    %v3091 = vpop.permute.xlu0 %3090
    %v3093 = vadd.f32 %v3083, %v3091
    %v3094 = vtanh.pop %v3093
    %3096 = vrot.lane.b32.xlu0 %v3094, 64
    %v3097 = vpop.permute.xlu0 %3096
    %v3099 = vmul.f32 %v3081, %v3097
    %3101 = vrot.lane.b32.xlu0 %v3099, 32
    %v3102 = vpop.permute.xlu0 %3101
    %3104 = vst.msk [vmem:[%s1120] sm:$0xff] %vm355, %v3102
    %v3105 = vld [vmem:[%s1122] sm:$0xff]
    %v3106 = vsel %vm355, %v3102, 0
    %3108 = vmatprep.subr.mxu0 0.0
    %3109 = vmatpush1.msra.mxu0 %v2341
    %3110 = vmatprep.subr.mxu0 0.0
    %3111 = vmatpush1.msra.mxu0 %v2342
    %3112 = vmatprep.subr.mxu0 0.0
    %3113 = vmatpush1.msra.mxu0 %v2343
    %3114 = vmatprep.subr.mxu0 0.0
    %3115 = vmatpush1.msra.mxu0 %v2344
    %3116 = vmatprep.subr.mxu0 0.0
    %3117 = vmatpush1.msra.mxu0 0.0
    %3118 = vmatprep.subr.mxu0 0.0
    %3119 = vmatpush1.msra.mxu0 0.0
    %3120 = vmatprep.subr.mxu0 0.0
    %3121 = vmatpush1.msra.mxu0 0.0
    %3122 = vmatprep.subr.mxu0 0.0
    %3123 = vmatpush1.msra.mxu0 0.0
    %3124 = vmatprep.subr.mxu0 0.0
    %3125 = vmatpush1.msra.mxu0 0.0
    %3126 = vmatprep.subr.mxu0 0.0
    %3127 = vmatpush1.msra.mxu0 0.0
    %3128 = vmatprep.subr.mxu0 0.0
    %3129 = vmatpush1.msra.mxu0 0.0
    %3130 = vmatprep.subr.mxu0 0.0
    %3131 = vmatpush1.msra.mxu0 0.0
    %3132 = vmatprep.subr.mxu0 0.0
    %3133 = vmatpush1.msra.mxu0 0.0
    %3134 = vmatprep.subr.mxu0 0.0
    %3135 = vmatpush1.msra.mxu0 0.0
    %3136 = vmatprep.subr.mxu0 0.0
    %3137 = vmatpush1.msra.mxu0 0.0
    %3138 = vmatprep.subr.mxu0 0.0
    %3139 = vmatpush1.msra.mxu0 0.0
    %3140 = vmatprep.subr.mxu0 0.0
    %3141 = vmatpush1.msra.mxu0 0.0
    %3142 = vmatprep.subr.mxu0 0.0
    %3143 = vmatpush1.msra.mxu0 0.0
    %3144 = vmatprep.subr.mxu0 0.0
    %3145 = vmatpush1.msra.mxu0 0.0
    %3146 = vmatprep.subr.mxu0 0.0
    %3147 = vmatpush1.msra.mxu0 0.0
    %3148 = vmatprep.subr.mxu0 0.0
    %3149 = vmatpush1.msra.mxu0 0.0
    %3150 = vmatprep.subr.mxu0 0.0
    %3151 = vmatpush1.msra.mxu0 0.0
    %3152 = vmatprep.subr.mxu0 0.0
    %3153 = vmatpush1.msra.mxu0 0.0
    %3154 = vmatprep.subr.mxu0 0.0
    %3155 = vmatpush1.msra.mxu0 0.0
    %3156 = vmatprep.subr.mxu0 0.0
    %3157 = vmatpush1.msra.mxu0 0.0
    %3158 = vmatprep.subr.mxu0 0.0
    %3159 = vmatpush1.msra.mxu0 0.0
    %3160 = vmatprep.subr.mxu0 0.0
    %3161 = vmatpush1.msra.mxu0 0.0
    %3162 = vmatprep.subr.mxu0 0.0
    %3163 = vmatpush1.msra.mxu0 0.0
    %3164 = vmatprep.subr.mxu0 0.0
    %3165 = vmatpush1.msra.mxu0 0.0
    %3166 = vmatprep.subr.mxu0 0.0
    %3167 = vmatpush1.msra.mxu0 0.0
    %3168 = vmatprep.subr.mxu0 0.0
    %3169 = vmatpush1.msra.mxu0 0.0
    %3170 = vmatprep.subr.mxu0 0.0
    %3171 = vmatpush1.msra.mxu0 0.0
    %3172 = vmatprep.mubr.f32.mxu0 0.0
    %3173 = vmatmul.mubr.f32.gmra.mrb[0].mxu0 %v3106
    %v3174 = vpop.f32.mrb[0].mxu0
    %v3175 = vadd.f32 0.0, %v3174
    %v3176 = vpop.f32.mrb[0].mxu0
    %3177 = vdwg.mxu0
    %v3178 = vadd.f32 %v3105, %v3175
    %v3179 = vxor.u32 %v3178, 2147483648
    %v3180 = vmul.f32 %v3179, 1.442695
    %v3181 = vpow.pop %v3180
    %v3182 = vadd.f32 %v3181, 1.0
    %v3183 = vrcp.pop %v3182
    %v3184 = vmul.f32 1.0, %v3183
    %v3185 = vtanh.pop %v3178
    %v3186 = vmul.f32 %v3184, %v3093
    %3188 = vrot.lane.b32.xlu0 %v3185, 64
    %v3189 = vpop.permute.xlu0 %3188
    %v3191 = vmul.f32 %v3184, %v3189
    %3193 = vrot.lane.b32.xlu0 %v3191, 32
    %v3194 = vpop.permute.xlu0 %3193
    %v3196 = vadd.f32 %v3186, %v3194
    %v3197 = vtanh.pop %v3196
    %3199 = vrot.lane.b32.xlu0 %v3197, 64
    %v3200 = vpop.permute.xlu0 %3199
    %v3202 = vmul.f32 %v3184, %v3200
    %3204 = vrot.lane.b32.xlu0 %v3202, 32
    %v3205 = vpop.permute.xlu0 %3204
    %3207 = vst.msk [vmem:[%s1225] sm:$0xff] %vm355, %v3205
    %v3208 = vld [vmem:[%s1227] sm:$0xff]
    %v3209 = vsel %vm355, %v3205, 0
    %3211 = vmatprep.subr.mxu0 0.0
    %3212 = vmatpush1.msra.mxu0 %v2341
    %3213 = vmatprep.subr.mxu0 0.0
    %3214 = vmatpush1.msra.mxu0 %v2342
    %3215 = vmatprep.subr.mxu0 0.0
    %3216 = vmatpush1.msra.mxu0 %v2343
    %3217 = vmatprep.subr.mxu0 0.0
    %3218 = vmatpush1.msra.mxu0 %v2344
    %3219 = vmatprep.subr.mxu0 0.0
    %3220 = vmatpush1.msra.mxu0 0.0
    %3221 = vmatprep.subr.mxu0 0.0
    %3222 = vmatpush1.msra.mxu0 0.0
    %3223 = vmatprep.subr.mxu0 0.0
    %3224 = vmatpush1.msra.mxu0 0.0
    %3225 = vmatprep.subr.mxu0 0.0
    %3226 = vmatpush1.msra.mxu0 0.0
    %3227 = vmatprep.subr.mxu0 0.0
    %3228 = vmatpush1.msra.mxu0 0.0
    %3229 = vmatprep.subr.mxu0 0.0
    %3230 = vmatpush1.msra.mxu0 0.0
    %3231 = vmatprep.subr.mxu0 0.0
    %3232 = vmatpush1.msra.mxu0 0.0
    %3233 = vmatprep.subr.mxu0 0.0
    %3234 = vmatpush1.msra.mxu0 0.0
    %3235 = vmatprep.subr.mxu0 0.0
    %3236 = vmatpush1.msra.mxu0 0.0
    %3237 = vmatprep.subr.mxu0 0.0
    %3238 = vmatpush1.msra.mxu0 0.0
    %3239 = vmatprep.subr.mxu0 0.0
    %3240 = vmatpush1.msra.mxu0 0.0
    %3241 = vmatprep.subr.mxu0 0.0
    %3242 = vmatpush1.msra.mxu0 0.0
    %3243 = vmatprep.subr.mxu0 0.0
    %3244 = vmatpush1.msra.mxu0 0.0
    %3245 = vmatprep.subr.mxu0 0.0
    %3246 = vmatpush1.msra.mxu0 0.0
    %3247 = vmatprep.subr.mxu0 0.0
    %3248 = vmatpush1.msra.mxu0 0.0
    %3249 = vmatprep.subr.mxu0 0.0
    %3250 = vmatpush1.msra.mxu0 0.0
    %3251 = vmatprep.subr.mxu0 0.0
    %3252 = vmatpush1.msra.mxu0 0.0
    %3253 = vmatprep.subr.mxu0 0.0
    %3254 = vmatpush1.msra.mxu0 0.0
    %3255 = vmatprep.subr.mxu0 0.0
    %3256 = vmatpush1.msra.mxu0 0.0
    %3257 = vmatprep.subr.mxu0 0.0
    %3258 = vmatpush1.msra.mxu0 0.0
    %3259 = vmatprep.subr.mxu0 0.0
    %3260 = vmatpush1.msra.mxu0 0.0
    %3261 = vmatprep.subr.mxu0 0.0
    %3262 = vmatpush1.msra.mxu0 0.0
    %3263 = vmatprep.subr.mxu0 0.0
    %3264 = vmatpush1.msra.mxu0 0.0
    %3265 = vmatprep.subr.mxu0 0.0
    %3266 = vmatpush1.msra.mxu0 0.0
    %3267 = vmatprep.subr.mxu0 0.0
    %3268 = vmatpush1.msra.mxu0 0.0
    %3269 = vmatprep.subr.mxu0 0.0
    %3270 = vmatpush1.msra.mxu0 0.0
    %3271 = vmatprep.subr.mxu0 0.0
    %3272 = vmatpush1.msra.mxu0 0.0
    %3273 = vmatprep.subr.mxu0 0.0
    %3274 = vmatpush1.msra.mxu0 0.0
    %3275 = vmatprep.mubr.f32.mxu0 0.0
    %3276 = vmatmul.mubr.f32.gmra.mrb[0].mxu0 %v3209
    %v3277 = vpop.f32.mrb[0].mxu0
    %v3278 = vadd.f32 0.0, %v3277
    %v3279 = vpop.f32.mrb[0].mxu0
    %3280 = vdwg.mxu0
    %v3281 = vadd.f32 %v3208, %v3278
    %v3282 = vxor.u32 %v3281, 2147483648
    %v3283 = vmul.f32 %v3282, 1.442695
    %v3284 = vpow.pop %v3283
    %v3285 = vadd.f32 %v3284, 1.0
    %v3286 = vrcp.pop %v3285
    %v3287 = vmul.f32 1.0, %v3286
    %v3288 = vtanh.pop %v3281
    %v3289 = vmul.f32 %v3287, %v3196
    %3291 = vrot.lane.b32.xlu0 %v3288, 64
    %v3292 = vpop.permute.xlu0 %3291
    %v3294 = vmul.f32 %v3287, %v3292
    %3296 = vrot.lane.b32.xlu0 %v3294, 32
    %v3297 = vpop.permute.xlu0 %3296
    %v3299 = vadd.f32 %v3289, %v3297
    %v3300 = vtanh.pop %v3299
    %3302 = vrot.lane.b32.xlu0 %v3300, 64
    %v3303 = vpop.permute.xlu0 %3302
    %v3305 = vmul.f32 %v3287, %v3303
    %3307 = vrot.lane.b32.xlu0 %v3305, 32
    %v3308 = vpop.permute.xlu0 %3307
    %3310 = vst.msk [vmem:[%s1330] sm:$0xff] %vm355, %v3308
    %s3311 = scalar_lea.vmem [#allocation17], 4
    %3312 = vst.msk [vmem:[%s3311] sm:$0x3] %vm1332, %v3308
    %3314 = vrot.lane.b32.xlu0 %v3299, 96
    %v3315 = vpop.permute.xlu0 %3314
    %s3317 = scalar_lea.vmem [#allocation19], 4
    %3318 = vst.msk [vmem:[%s3317] sm:$0x3] %vm1332, %v3315
    %v3319 = vld [vmem:[#allocation3] sm:$0xff]
    %v3320 = vld [vmem:[#allocation3 + $0x8] sm:$0xff]
    %v3321 = vld [vmem:[#allocation3 + $0x10] sm:$0xff]
    %v3322 = vld [vmem:[#allocation3 + $0x18] sm:$0xff]
    %v3323 = vld [vmem:[#allocation3 + $0x20] sm:$0xff]
    %v3324 = vld [vmem:[#allocation3 + $0x28] sm:$0xff]
    %v3325 = vld [vmem:[#allocation3 + $0x30] sm:$0xff]
    %v3326 = vld [vmem:[#allocation3 + $0x38] sm:$0xff]
    %v3327 = vld [vmem:[%s11] sm:$0xff]
    %v3328 = vld [vmem:[%s11 + $0x8] sm:$0xff]
    %v3329 = vld [vmem:[%s11 + $0x10] sm:$0xff]
    %v3330 = vld [vmem:[%s11 + $0x18] sm:$0xff]
    %v3331 = vld [vmem:[%s12] sm:$0xff]
    %v3332 = vld [vmem:[%s12 + $0x8] sm:$0xff]
    %v3333 = vld [vmem:[%s12 + $0x10] sm:$0xff]
    %v3334 = vld [vmem:[%s12 + $0x18] sm:$0xff]
    %v3335 = vld [vmem:[%s13] sm:$0x1]
    %v3337 = vlaneseq
    %v3338 = vshrl.u32 %v3337, 7
    %v3339 = vsub.s32 0, %v3338
    %v3340 = vrot.slane %v3335, %v3339
    %v3343 = vsel %vm355, %v3319, 0
    %v3346 = vsel %vm355, %v3320, 0
    %v3349 = vsel %vm355, %v3321, 0
    %v3352 = vsel %vm355, %v3322, 0
    %v3355 = vsel %vm355, %v3323, 0
    %v3358 = vsel %vm355, %v3324, 0
    %v3361 = vsel %vm355, %v3325, 0
    %v3364 = vsel %vm355, %v3326, 0
    %3366 = vmatprep.subr.mxu0 0.0
    %3367 = vmatpush1.msra.mxu0 %v3327
    %3368 = vmatprep.subr.mxu0 0.0
    %3369 = vmatpush1.msra.mxu0 %v3328
    %3370 = vmatprep.subr.mxu0 0.0
    %3371 = vmatpush1.msra.mxu0 %v3329
    %3372 = vmatprep.subr.mxu0 0.0
    %3373 = vmatpush1.msra.mxu0 %v3330
    %3374 = vmatprep.subr.mxu0 0.0
    %3375 = vmatpush1.msra.mxu0 0.0
    %3376 = vmatprep.subr.mxu0 0.0
    %3377 = vmatpush1.msra.mxu0 0.0
    %3378 = vmatprep.subr.mxu0 0.0
    %3379 = vmatpush1.msra.mxu0 0.0
    %3380 = vmatprep.subr.mxu0 0.0
    %3381 = vmatpush1.msra.mxu0 0.0
    %3382 = vmatprep.subr.mxu0 0.0
    %3383 = vmatpush1.msra.mxu0 0.0
    %3384 = vmatprep.subr.mxu0 0.0
    %3385 = vmatpush1.msra.mxu0 0.0
    %3386 = vmatprep.subr.mxu0 0.0
    %3387 = vmatpush1.msra.mxu0 0.0
    %3388 = vmatprep.subr.mxu0 0.0
    %3389 = vmatpush1.msra.mxu0 0.0
    %3390 = vmatprep.subr.mxu0 0.0
    %3391 = vmatpush1.msra.mxu0 0.0
    %3392 = vmatprep.subr.mxu0 0.0
    %3393 = vmatpush1.msra.mxu0 0.0
    %3394 = vmatprep.subr.mxu0 0.0
    %3395 = vmatpush1.msra.mxu0 0.0
    %3396 = vmatprep.subr.mxu0 0.0
    %3397 = vmatpush1.msra.mxu0 0.0
    %3398 = vmatprep.subr.mxu0 0.0
    %3399 = vmatpush1.msra.mxu0 0.0
    %3400 = vmatprep.subr.mxu0 0.0
    %3401 = vmatpush1.msra.mxu0 0.0
    %3402 = vmatprep.subr.mxu0 0.0
    %3403 = vmatpush1.msra.mxu0 0.0
    %3404 = vmatprep.subr.mxu0 0.0
    %3405 = vmatpush1.msra.mxu0 0.0
    %3406 = vmatprep.subr.mxu0 0.0
    %3407 = vmatpush1.msra.mxu0 0.0
    %3408 = vmatprep.subr.mxu0 0.0
    %3409 = vmatpush1.msra.mxu0 0.0
    %3410 = vmatprep.subr.mxu0 0.0
    %3411 = vmatpush1.msra.mxu0 0.0
    %3412 = vmatprep.subr.mxu0 0.0
    %3413 = vmatpush1.msra.mxu0 0.0
    %3414 = vmatprep.subr.mxu0 0.0
    %3415 = vmatpush1.msra.mxu0 0.0
    %3416 = vmatprep.subr.mxu0 0.0
    %3417 = vmatpush1.msra.mxu0 0.0
    %3418 = vmatprep.subr.mxu0 0.0
    %3419 = vmatpush1.msra.mxu0 0.0
    %3420 = vmatprep.subr.mxu0 0.0
    %3421 = vmatpush1.msra.mxu0 0.0
    %3422 = vmatprep.subr.mxu0 0.0
    %3423 = vmatpush1.msra.mxu0 0.0
    %3424 = vmatprep.subr.mxu0 0.0
    %3425 = vmatpush1.msra.mxu0 0.0
    %3426 = vmatprep.subr.mxu0 0.0
    %3427 = vmatpush1.msra.mxu0 0.0
    %3428 = vmatprep.subr.mxu0 0.0
    %3429 = vmatpush1.msra.mxu0 0.0
    %3430 = vmatprep.mubr.f32.mxu0 0.0
    %3431 = vmatmul.mubr.f32.gmra.mrb[0].mxu0 %v3343
    %v3432 = vpop.f32.mrb[0].mxu0
    %v3433 = vadd.f32 %v3340, %v3432
    %v3434 = vpop.f32.mrb[0].mxu0
    %3435 = vmatprep.mubr.f32.mxu0 0.0
    %3436 = vmatmul.mubr.f32.gmra.mrb[0].mxu0 %v3346
    %v3437 = vpop.f32.mrb[0].mxu0
    %v3438 = vadd.f32 %v3340, %v3437
    %v3439 = vpop.f32.mrb[0].mxu0
    %3440 = vmatprep.mubr.f32.mxu0 0.0
    %3441 = vmatmul.mubr.f32.gmra.mrb[0].mxu0 %v3349
    %v3442 = vpop.f32.mrb[0].mxu0
    %v3443 = vadd.f32 %v3340, %v3442
    %v3444 = vpop.f32.mrb[0].mxu0
    %3445 = vmatprep.mubr.f32.mxu0 0.0
    %3446 = vmatmul.mubr.f32.gmra.mrb[0].mxu0 %v3352
    %v3447 = vpop.f32.mrb[0].mxu0
    %v3448 = vadd.f32 %v3340, %v3447
    %v3449 = vpop.f32.mrb[0].mxu0
    %3450 = vmatprep.mubr.f32.mxu0 0.0
    %3451 = vmatmul.mubr.f32.gmra.mrb[0].mxu0 %v3355
    %v3452 = vpop.f32.mrb[0].mxu0
    %v3453 = vadd.f32 %v3340, %v3452
    %v3454 = vpop.f32.mrb[0].mxu0
    %3455 = vmatprep.mubr.f32.mxu0 0.0
    %3456 = vmatmul.mubr.f32.gmra.mrb[0].mxu0 %v3358
    %v3457 = vpop.f32.mrb[0].mxu0
    %v3458 = vadd.f32 %v3340, %v3457
    %v3459 = vpop.f32.mrb[0].mxu0
    %3460 = vmatprep.mubr.f32.mxu0 0.0
    %3461 = vmatmul.mubr.f32.gmra.mrb[0].mxu0 %v3361
    %v3462 = vpop.f32.mrb[0].mxu0
    %v3463 = vadd.f32 %v3340, %v3462
    %v3464 = vpop.f32.mrb[0].mxu0
    %3465 = vmatprep.mubr.f32.mxu0 0.0
    %3466 = vmatmul.mubr.f32.gmra.mrb[0].mxu0 %v3364
    %v3467 = vpop.f32.mrb[0].mxu0
    %v3468 = vadd.f32 %v3340, %v3467
    %v3469 = vpop.f32.mrb[0].mxu0
    %3470 = vdwg.mxu0
    %3471 = vst [vmem:[#allocation2] sm:$0xff] %v3433
    %3472 = vst [vmem:[#allocation2 + $0x8] sm:$0xff] %v3438
    %3473 = vst [vmem:[#allocation2 + $0x10] sm:$0xff] %v3443
    %3474 = vst [vmem:[#allocation2 + $0x18] sm:$0xff] %v3448
    %3475 = vst [vmem:[#allocation2 + $0x20] sm:$0xff] %v3453
    %3476 = vst [vmem:[#allocation2 + $0x28] sm:$0xff] %v3458
    %3477 = vst [vmem:[#allocation2 + $0x30] sm:$0xff] %v3463
    %3478 = vst [vmem:[#allocation2 + $0x38] sm:$0xff] %v3468
    %v3479 = vld [vmem:[#allocation2] sm:$0xff]
    %3480 = vmatprep.subr.mxu0 0.0
    %3481 = vmatpush1.msra.mxu0 %v3331
    %3482 = vmatprep.subr.mxu0 0.0
    %3483 = vmatpush1.msra.mxu0 %v3332
    %3484 = vmatprep.subr.mxu0 0.0
    %3485 = vmatpush1.msra.mxu0 %v3333
    %3486 = vmatprep.subr.mxu0 0.0
    %3487 = vmatpush1.msra.mxu0 %v3334
    %3488 = vmatprep.subr.mxu0 0.0
    %3489 = vmatpush1.msra.mxu0 0.0
    %3490 = vmatprep.subr.mxu0 0.0
    %3491 = vmatpush1.msra.mxu0 0.0
    %3492 = vmatprep.subr.mxu0 0.0
    %3493 = vmatpush1.msra.mxu0 0.0
    %3494 = vmatprep.subr.mxu0 0.0
    %3495 = vmatpush1.msra.mxu0 0.0
    %3496 = vmatprep.subr.mxu0 0.0
    %3497 = vmatpush1.msra.mxu0 0.0
    %3498 = vmatprep.subr.mxu0 0.0
    %3499 = vmatpush1.msra.mxu0 0.0
    %3500 = vmatprep.subr.mxu0 0.0
    %3501 = vmatpush1.msra.mxu0 0.0
    %3502 = vmatprep.subr.mxu0 0.0
    %3503 = vmatpush1.msra.mxu0 0.0
    %3504 = vmatprep.subr.mxu0 0.0
    %3505 = vmatpush1.msra.mxu0 0.0
    %3506 = vmatprep.subr.mxu0 0.0
    %3507 = vmatpush1.msra.mxu0 0.0
    %3508 = vmatprep.subr.mxu0 0.0
    %3509 = vmatpush1.msra.mxu0 0.0
    %3510 = vmatprep.subr.mxu0 0.0
    %3511 = vmatpush1.msra.mxu0 0.0
    %3512 = vmatprep.subr.mxu0 0.0
    %3513 = vmatpush1.msra.mxu0 0.0
    %3514 = vmatprep.subr.mxu0 0.0
    %3515 = vmatpush1.msra.mxu0 0.0
    %3516 = vmatprep.subr.mxu0 0.0
    %3517 = vmatpush1.msra.mxu0 0.0
    %3518 = vmatprep.subr.mxu0 0.0
    %3519 = vmatpush1.msra.mxu0 0.0
    %3520 = vmatprep.subr.mxu0 0.0
    %3521 = vmatpush1.msra.mxu0 0.0
    %3522 = vmatprep.subr.mxu0 0.0
    %3523 = vmatpush1.msra.mxu0 0.0
    %3524 = vmatprep.subr.mxu0 0.0
    %3525 = vmatpush1.msra.mxu0 0.0
    %3526 = vmatprep.subr.mxu0 0.0
    %3527 = vmatpush1.msra.mxu0 0.0
    %3528 = vmatprep.subr.mxu0 0.0
    %3529 = vmatpush1.msra.mxu0 0.0
    %3530 = vmatprep.subr.mxu0 0.0
    %3531 = vmatpush1.msra.mxu0 0.0
    %3532 = vmatprep.subr.mxu0 0.0
    %3533 = vmatpush1.msra.mxu0 0.0
    %3534 = vmatprep.subr.mxu0 0.0
    %3535 = vmatpush1.msra.mxu0 0.0
    %3536 = vmatprep.subr.mxu0 0.0
    %3537 = vmatpush1.msra.mxu0 0.0
    %3538 = vmatprep.subr.mxu0 0.0
    %3539 = vmatpush1.msra.mxu0 0.0
    %3540 = vmatprep.subr.mxu0 0.0
    %3541 = vmatpush1.msra.mxu0 0.0
    %3542 = vmatprep.subr.mxu0 0.0
    %3543 = vmatpush1.msra.mxu0 0.0
    %3544 = vmatprep.mubr.f32.mxu0 0.0
    %3545 = vmatmul.mubr.f32.gmra.mrb[0].mxu0 %v495
    %v3546 = vpop.f32.mrb[0].mxu0
    %v3547 = vadd.f32 0.0, %v3546
    %v3548 = vpop.f32.mrb[0].mxu0
    %3549 = vdwg.mxu0
    %v3550 = vadd.f32 %v3479, %v3547
    %v3551 = vxor.u32 %v3550, 2147483648
    %v3552 = vmul.f32 %v3551, 1.442695
    %v3553 = vpow.pop %v3552
    %v3554 = vadd.f32 %v3553, 1.0
    %v3555 = vrcp.pop %v3554
    %v3556 = vmul.f32 1.0, %v3555
    %v3557 = vtanh.pop %v3550
    %v3558 = vmul.f32 %v3556, 0.0
    %3560 = vrot.lane.b32.xlu0 %v3557, 64
    %v3561 = vpop.permute.xlu0 %3560
    %v3563 = vmul.f32 %v3556, %v3561
    %3565 = vrot.lane.b32.xlu0 %v3563, 32
    %v3566 = vpop.permute.xlu0 %3565
    %v3568 = vadd.f32 %v3558, %v3566
    %v3569 = vtanh.pop %v3568
    %3571 = vrot.lane.b32.xlu0 %v3569, 64
    %v3572 = vpop.permute.xlu0 %3571
    %v3574 = vmul.f32 %v3556, %v3572
    %3576 = vrot.lane.b32.xlu0 %v3574, 32
    %v3577 = vpop.permute.xlu0 %3576
    %3579 = vst.msk [vmem:[#allocation3] sm:$0xff] %vm355, %v3577
    %v3580 = vld [vmem:[%s597] sm:$0xff]
    %v3581 = vsel %vm355, %v3577, 0
    %3583 = vmatprep.subr.mxu0 0.0
    %3584 = vmatpush1.msra.mxu0 %v3331
    %3585 = vmatprep.subr.mxu0 0.0
    %3586 = vmatpush1.msra.mxu0 %v3332
    %3587 = vmatprep.subr.mxu0 0.0
    %3588 = vmatpush1.msra.mxu0 %v3333
    %3589 = vmatprep.subr.mxu0 0.0
    %3590 = vmatpush1.msra.mxu0 %v3334
    %3591 = vmatprep.subr.mxu0 0.0
    %3592 = vmatpush1.msra.mxu0 0.0
    %3593 = vmatprep.subr.mxu0 0.0
    %3594 = vmatpush1.msra.mxu0 0.0
    %3595 = vmatprep.subr.mxu0 0.0
    %3596 = vmatpush1.msra.mxu0 0.0
    %3597 = vmatprep.subr.mxu0 0.0
    %3598 = vmatpush1.msra.mxu0 0.0
    %3599 = vmatprep.subr.mxu0 0.0
    %3600 = vmatpush1.msra.mxu0 0.0
    %3601 = vmatprep.subr.mxu0 0.0
    %3602 = vmatpush1.msra.mxu0 0.0
    %3603 = vmatprep.subr.mxu0 0.0
    %3604 = vmatpush1.msra.mxu0 0.0
    %3605 = vmatprep.subr.mxu0 0.0
    %3606 = vmatpush1.msra.mxu0 0.0
    %3607 = vmatprep.subr.mxu0 0.0
    %3608 = vmatpush1.msra.mxu0 0.0
    %3609 = vmatprep.subr.mxu0 0.0
    %3610 = vmatpush1.msra.mxu0 0.0
    %3611 = vmatprep.subr.mxu0 0.0
    %3612 = vmatpush1.msra.mxu0 0.0
    %3613 = vmatprep.subr.mxu0 0.0
    %3614 = vmatpush1.msra.mxu0 0.0
    %3615 = vmatprep.subr.mxu0 0.0
    %3616 = vmatpush1.msra.mxu0 0.0
    %3617 = vmatprep.subr.mxu0 0.0
    %3618 = vmatpush1.msra.mxu0 0.0
    %3619 = vmatprep.subr.mxu0 0.0
    %3620 = vmatpush1.msra.mxu0 0.0
    %3621 = vmatprep.subr.mxu0 0.0
    %3622 = vmatpush1.msra.mxu0 0.0
    %3623 = vmatprep.subr.mxu0 0.0
    %3624 = vmatpush1.msra.mxu0 0.0
    %3625 = vmatprep.subr.mxu0 0.0
    %3626 = vmatpush1.msra.mxu0 0.0
    %3627 = vmatprep.subr.mxu0 0.0
    %3628 = vmatpush1.msra.mxu0 0.0
    %3629 = vmatprep.subr.mxu0 0.0
    %3630 = vmatpush1.msra.mxu0 0.0
    %3631 = vmatprep.subr.mxu0 0.0
    %3632 = vmatpush1.msra.mxu0 0.0
    %3633 = vmatprep.subr.mxu0 0.0
    %3634 = vmatpush1.msra.mxu0 0.0
    %3635 = vmatprep.subr.mxu0 0.0
    %3636 = vmatpush1.msra.mxu0 0.0
    %3637 = vmatprep.subr.mxu0 0.0
    %3638 = vmatpush1.msra.mxu0 0.0
    %3639 = vmatprep.subr.mxu0 0.0
    %3640 = vmatpush1.msra.mxu0 0.0
    %3641 = vmatprep.subr.mxu0 0.0
    %3642 = vmatpush1.msra.mxu0 0.0
    %3643 = vmatprep.subr.mxu0 0.0
    %3644 = vmatpush1.msra.mxu0 0.0
    %3645 = vmatprep.subr.mxu0 0.0
    %3646 = vmatpush1.msra.mxu0 0.0
    %3647 = vmatprep.mubr.f32.mxu0 0.0
    %3648 = vmatmul.mubr.f32.gmra.mrb[0].mxu0 %v3581
    %v3649 = vpop.f32.mrb[0].mxu0
    %v3650 = vadd.f32 0.0, %v3649
    %v3651 = vpop.f32.mrb[0].mxu0
    %3652 = vdwg.mxu0
    %v3653 = vadd.f32 %v3580, %v3650
    %v3654 = vxor.u32 %v3653, 2147483648
    %v3655 = vmul.f32 %v3654, 1.442695
    %v3656 = vpow.pop %v3655
    %v3657 = vadd.f32 %v3656, 1.0
    %v3658 = vrcp.pop %v3657
    %v3659 = vmul.f32 1.0, %v3658
    %v3660 = vtanh.pop %v3653
    %v3661 = vmul.f32 %v3659, %v3568
    %3663 = vrot.lane.b32.xlu0 %v3660, 64
    %v3664 = vpop.permute.xlu0 %3663
    %v3666 = vmul.f32 %v3659, %v3664
    %3668 = vrot.lane.b32.xlu0 %v3666, 32
    %v3669 = vpop.permute.xlu0 %3668
    %v3671 = vadd.f32 %v3661, %v3669
    %v3672 = vtanh.pop %v3671
    %3674 = vrot.lane.b32.xlu0 %v3672, 64
    %v3675 = vpop.permute.xlu0 %3674
    %v3677 = vmul.f32 %v3659, %v3675
    %3679 = vrot.lane.b32.xlu0 %v3677, 32
    %v3680 = vpop.permute.xlu0 %3679
    %3682 = vst.msk [vmem:[%s700] sm:$0xff] %vm355, %v3680
    %v3683 = vld [vmem:[%s702] sm:$0xff]
    %v3684 = vsel %vm355, %v3680, 0
    %3686 = vmatprep.subr.mxu0 0.0
    %3687 = vmatpush1.msra.mxu0 %v3331
    %3688 = vmatprep.subr.mxu0 0.0
    %3689 = vmatpush1.msra.mxu0 %v3332
    %3690 = vmatprep.subr.mxu0 0.0
    %3691 = vmatpush1.msra.mxu0 %v3333
    %3692 = vmatprep.subr.mxu0 0.0
    %3693 = vmatpush1.msra.mxu0 %v3334
    %3694 = vmatprep.subr.mxu0 0.0
    %3695 = vmatpush1.msra.mxu0 0.0
    %3696 = vmatprep.subr.mxu0 0.0
    %3697 = vmatpush1.msra.mxu0 0.0
    %3698 = vmatprep.subr.mxu0 0.0
    %3699 = vmatpush1.msra.mxu0 0.0
    %3700 = vmatprep.subr.mxu0 0.0
    %3701 = vmatpush1.msra.mxu0 0.0
    %3702 = vmatprep.subr.mxu0 0.0
    %3703 = vmatpush1.msra.mxu0 0.0
    %3704 = vmatprep.subr.mxu0 0.0
    %3705 = vmatpush1.msra.mxu0 0.0
    %3706 = vmatprep.subr.mxu0 0.0
    %3707 = vmatpush1.msra.mxu0 0.0
    %3708 = vmatprep.subr.mxu0 0.0
    %3709 = vmatpush1.msra.mxu0 0.0
    %3710 = vmatprep.subr.mxu0 0.0
    %3711 = vmatpush1.msra.mxu0 0.0
    %3712 = vmatprep.subr.mxu0 0.0
    %3713 = vmatpush1.msra.mxu0 0.0
    %3714 = vmatprep.subr.mxu0 0.0
    %3715 = vmatpush1.msra.mxu0 0.0
    %3716 = vmatprep.subr.mxu0 0.0
    %3717 = vmatpush1.msra.mxu0 0.0
    %3718 = vmatprep.subr.mxu0 0.0
    %3719 = vmatpush1.msra.mxu0 0.0
    %3720 = vmatprep.subr.mxu0 0.0
    %3721 = vmatpush1.msra.mxu0 0.0
    %3722 = vmatprep.subr.mxu0 0.0
    %3723 = vmatpush1.msra.mxu0 0.0
    %3724 = vmatprep.subr.mxu0 0.0
    %3725 = vmatpush1.msra.mxu0 0.0
    %3726 = vmatprep.subr.mxu0 0.0
    %3727 = vmatpush1.msra.mxu0 0.0
    %3728 = vmatprep.subr.mxu0 0.0
    %3729 = vmatpush1.msra.mxu0 0.0
    %3730 = vmatprep.subr.mxu0 0.0
    %3731 = vmatpush1.msra.mxu0 0.0
    %3732 = vmatprep.subr.mxu0 0.0
    %3733 = vmatpush1.msra.mxu0 0.0
    %3734 = vmatprep.subr.mxu0 0.0
    %3735 = vmatpush1.msra.mxu0 0.0
    %3736 = vmatprep.subr.mxu0 0.0
    %3737 = vmatpush1.msra.mxu0 0.0
    %3738 = vmatprep.subr.mxu0 0.0
    %3739 = vmatpush1.msra.mxu0 0.0
    %3740 = vmatprep.subr.mxu0 0.0
    %3741 = vmatpush1.msra.mxu0 0.0
    %3742 = vmatprep.subr.mxu0 0.0
    %3743 = vmatpush1.msra.mxu0 0.0
    %3744 = vmatprep.subr.mxu0 0.0
    %3745 = vmatpush1.msra.mxu0 0.0
    %3746 = vmatprep.subr.mxu0 0.0
    %3747 = vmatpush1.msra.mxu0 0.0
    %3748 = vmatprep.subr.mxu0 0.0
    %3749 = vmatpush1.msra.mxu0 0.0
    %3750 = vmatprep.mubr.f32.mxu0 0.0
    %3751 = vmatmul.mubr.f32.gmra.mrb[0].mxu0 %v3684
    %v3752 = vpop.f32.mrb[0].mxu0
    %v3753 = vadd.f32 0.0, %v3752
    %v3754 = vpop.f32.mrb[0].mxu0
    %3755 = vdwg.mxu0
    %v3756 = vadd.f32 %v3683, %v3753
    %v3757 = vxor.u32 %v3756, 2147483648
    %v3758 = vmul.f32 %v3757, 1.442695
    %v3759 = vpow.pop %v3758
    %v3760 = vadd.f32 %v3759, 1.0
    %v3761 = vrcp.pop %v3760
    %v3762 = vmul.f32 1.0, %v3761
    %v3763 = vtanh.pop %v3756
    %v3764 = vmul.f32 %v3762, %v3671
    %3766 = vrot.lane.b32.xlu0 %v3763, 64
    %v3767 = vpop.permute.xlu0 %3766
    %v3769 = vmul.f32 %v3762, %v3767
    %3771 = vrot.lane.b32.xlu0 %v3769, 32
    %v3772 = vpop.permute.xlu0 %3771
    %v3774 = vadd.f32 %v3764, %v3772
    %v3775 = vtanh.pop %v3774
    %3777 = vrot.lane.b32.xlu0 %v3775, 64
    %v3778 = vpop.permute.xlu0 %3777
    %v3780 = vmul.f32 %v3762, %v3778
    %3782 = vrot.lane.b32.xlu0 %v3780, 32
    %v3783 = vpop.permute.xlu0 %3782
    %3785 = vst.msk [vmem:[%s805] sm:$0xff] %vm355, %v3783
    %v3786 = vld [vmem:[%s807] sm:$0xff]
    %v3787 = vsel %vm355, %v3783, 0
    %3789 = vmatprep.subr.mxu0 0.0
    %3790 = vmatpush1.msra.mxu0 %v3331
    %3791 = vmatprep.subr.mxu0 0.0
    %3792 = vmatpush1.msra.mxu0 %v3332
    %3793 = vmatprep.subr.mxu0 0.0
    %3794 = vmatpush1.msra.mxu0 %v3333
    %3795 = vmatprep.subr.mxu0 0.0
    %3796 = vmatpush1.msra.mxu0 %v3334
    %3797 = vmatprep.subr.mxu0 0.0
    %3798 = vmatpush1.msra.mxu0 0.0
    %3799 = vmatprep.subr.mxu0 0.0
    %3800 = vmatpush1.msra.mxu0 0.0
    %3801 = vmatprep.subr.mxu0 0.0
    %3802 = vmatpush1.msra.mxu0 0.0
    %3803 = vmatprep.subr.mxu0 0.0
    %3804 = vmatpush1.msra.mxu0 0.0
    %3805 = vmatprep.subr.mxu0 0.0
    %3806 = vmatpush1.msra.mxu0 0.0
    %3807 = vmatprep.subr.mxu0 0.0
    %3808 = vmatpush1.msra.mxu0 0.0
    %3809 = vmatprep.subr.mxu0 0.0
    %3810 = vmatpush1.msra.mxu0 0.0
    %3811 = vmatprep.subr.mxu0 0.0
    %3812 = vmatpush1.msra.mxu0 0.0
    %3813 = vmatprep.subr.mxu0 0.0
    %3814 = vmatpush1.msra.mxu0 0.0
    %3815 = vmatprep.subr.mxu0 0.0
    %3816 = vmatpush1.msra.mxu0 0.0
    %3817 = vmatprep.subr.mxu0 0.0
    %3818 = vmatpush1.msra.mxu0 0.0
    %3819 = vmatprep.subr.mxu0 0.0
    %3820 = vmatpush1.msra.mxu0 0.0
    %3821 = vmatprep.subr.mxu0 0.0
    %3822 = vmatpush1.msra.mxu0 0.0
    %3823 = vmatprep.subr.mxu0 0.0
    %3824 = vmatpush1.msra.mxu0 0.0
    %3825 = vmatprep.subr.mxu0 0.0
    %3826 = vmatpush1.msra.mxu0 0.0
    %3827 = vmatprep.subr.mxu0 0.0
    %3828 = vmatpush1.msra.mxu0 0.0
    %3829 = vmatprep.subr.mxu0 0.0
    %3830 = vmatpush1.msra.mxu0 0.0
    %3831 = vmatprep.subr.mxu0 0.0
    %3832 = vmatpush1.msra.mxu0 0.0
    %3833 = vmatprep.subr.mxu0 0.0
    %3834 = vmatpush1.msra.mxu0 0.0
    %3835 = vmatprep.subr.mxu0 0.0
    %3836 = vmatpush1.msra.mxu0 0.0
    %3837 = vmatprep.subr.mxu0 0.0
    %3838 = vmatpush1.msra.mxu0 0.0
    %3839 = vmatprep.subr.mxu0 0.0
    %3840 = vmatpush1.msra.mxu0 0.0
    %3841 = vmatprep.subr.mxu0 0.0
    %3842 = vmatpush1.msra.mxu0 0.0
    %3843 = vmatprep.subr.mxu0 0.0
    %3844 = vmatpush1.msra.mxu0 0.0
    %3845 = vmatprep.subr.mxu0 0.0
    %3846 = vmatpush1.msra.mxu0 0.0
    %3847 = vmatprep.subr.mxu0 0.0
    %3848 = vmatpush1.msra.mxu0 0.0
    %3849 = vmatprep.subr.mxu0 0.0
    %3850 = vmatpush1.msra.mxu0 0.0
    %3851 = vmatprep.subr.mxu0 0.0
    %3852 = vmatpush1.msra.mxu0 0.0
    %3853 = vmatprep.mubr.f32.mxu0 0.0
    %3854 = vmatmul.mubr.f32.gmra.mrb[0].mxu0 %v3787
    %v3855 = vpop.f32.mrb[0].mxu0
    %v3856 = vadd.f32 0.0, %v3855
    %v3857 = vpop.f32.mrb[0].mxu0
    %3858 = vdwg.mxu0
    %v3859 = vadd.f32 %v3786, %v3856
    %v3860 = vxor.u32 %v3859, 2147483648
    %v3861 = vmul.f32 %v3860, 1.442695
    %v3862 = vpow.pop %v3861
    %v3863 = vadd.f32 %v3862, 1.0
    %v3864 = vrcp.pop %v3863
    %v3865 = vmul.f32 1.0, %v3864
    %v3866 = vtanh.pop %v3859
    %v3867 = vmul.f32 %v3865, %v3774
    %3869 = vrot.lane.b32.xlu0 %v3866, 64
    %v3870 = vpop.permute.xlu0 %3869
    %v3872 = vmul.f32 %v3865, %v3870
    %3874 = vrot.lane.b32.xlu0 %v3872, 32
    %v3875 = vpop.permute.xlu0 %3874
    %v3877 = vadd.f32 %v3867, %v3875
    %v3878 = vtanh.pop %v3877
    %3880 = vrot.lane.b32.xlu0 %v3878, 64
    %v3881 = vpop.permute.xlu0 %3880
    %v3883 = vmul.f32 %v3865, %v3881
    %3885 = vrot.lane.b32.xlu0 %v3883, 32
    %v3886 = vpop.permute.xlu0 %3885
    %3888 = vst.msk [vmem:[%s910] sm:$0xff] %vm355, %v3886
    %v3889 = vld [vmem:[%s912] sm:$0xff]
    %v3890 = vsel %vm355, %v3886, 0
    %3892 = vmatprep.subr.mxu0 0.0
    %3893 = vmatpush1.msra.mxu0 %v3331
    %3894 = vmatprep.subr.mxu0 0.0
    %3895 = vmatpush1.msra.mxu0 %v3332
    %3896 = vmatprep.subr.mxu0 0.0
    %3897 = vmatpush1.msra.mxu0 %v3333
    %3898 = vmatprep.subr.mxu0 0.0
    %3899 = vmatpush1.msra.mxu0 %v3334
    %3900 = vmatprep.subr.mxu0 0.0
    %3901 = vmatpush1.msra.mxu0 0.0
    %3902 = vmatprep.subr.mxu0 0.0
    %3903 = vmatpush1.msra.mxu0 0.0
    %3904 = vmatprep.subr.mxu0 0.0
    %3905 = vmatpush1.msra.mxu0 0.0
    %3906 = vmatprep.subr.mxu0 0.0
    %3907 = vmatpush1.msra.mxu0 0.0
    %3908 = vmatprep.subr.mxu0 0.0
    %3909 = vmatpush1.msra.mxu0 0.0
    %3910 = vmatprep.subr.mxu0 0.0
    %3911 = vmatpush1.msra.mxu0 0.0
    %3912 = vmatprep.subr.mxu0 0.0
    %3913 = vmatpush1.msra.mxu0 0.0
    %3914 = vmatprep.subr.mxu0 0.0
    %3915 = vmatpush1.msra.mxu0 0.0
    %3916 = vmatprep.subr.mxu0 0.0
    %3917 = vmatpush1.msra.mxu0 0.0
    %3918 = vmatprep.subr.mxu0 0.0
    %3919 = vmatpush1.msra.mxu0 0.0
    %3920 = vmatprep.subr.mxu0 0.0
    %3921 = vmatpush1.msra.mxu0 0.0
    %3922 = vmatprep.subr.mxu0 0.0
    %3923 = vmatpush1.msra.mxu0 0.0
    %3924 = vmatprep.subr.mxu0 0.0
    %3925 = vmatpush1.msra.mxu0 0.0
    %3926 = vmatprep.subr.mxu0 0.0
    %3927 = vmatpush1.msra.mxu0 0.0
    %3928 = vmatprep.subr.mxu0 0.0
    %3929 = vmatpush1.msra.mxu0 0.0
    %3930 = vmatprep.subr.mxu0 0.0
    %3931 = vmatpush1.msra.mxu0 0.0
    %3932 = vmatprep.subr.mxu0 0.0
    %3933 = vmatpush1.msra.mxu0 0.0
    %3934 = vmatprep.subr.mxu0 0.0
    %3935 = vmatpush1.msra.mxu0 0.0
    %3936 = vmatprep.subr.mxu0 0.0
    %3937 = vmatpush1.msra.mxu0 0.0
    %3938 = vmatprep.subr.mxu0 0.0
    %3939 = vmatpush1.msra.mxu0 0.0
    %3940 = vmatprep.subr.mxu0 0.0
    %3941 = vmatpush1.msra.mxu0 0.0
    %3942 = vmatprep.subr.mxu0 0.0
    %3943 = vmatpush1.msra.mxu0 0.0
    %3944 = vmatprep.subr.mxu0 0.0
    %3945 = vmatpush1.msra.mxu0 0.0
    %3946 = vmatprep.subr.mxu0 0.0
    %3947 = vmatpush1.msra.mxu0 0.0
    %3948 = vmatprep.subr.mxu0 0.0
    %3949 = vmatpush1.msra.mxu0 0.0
    %3950 = vmatprep.subr.mxu0 0.0
    %3951 = vmatpush1.msra.mxu0 0.0
    %3952 = vmatprep.subr.mxu0 0.0
    %3953 = vmatpush1.msra.mxu0 0.0
    %3954 = vmatprep.subr.mxu0 0.0
    %3955 = vmatpush1.msra.mxu0 0.0
    %3956 = vmatprep.mubr.f32.mxu0 0.0
    %3957 = vmatmul.mubr.f32.gmra.mrb[0].mxu0 %v3890
    %v3958 = vpop.f32.mrb[0].mxu0
    %v3959 = vadd.f32 0.0, %v3958
    %v3960 = vpop.f32.mrb[0].mxu0
    %3961 = vdwg.mxu0
    %v3962 = vadd.f32 %v3889, %v3959
    %v3963 = vxor.u32 %v3962, 2147483648
    %v3964 = vmul.f32 %v3963, 1.442695
    %v3965 = vpow.pop %v3964
    %v3966 = vadd.f32 %v3965, 1.0
    %v3967 = vrcp.pop %v3966
    %v3968 = vmul.f32 1.0, %v3967
    %v3969 = vtanh.pop %v3962
    %v3970 = vmul.f32 %v3968, %v3877
    %3972 = vrot.lane.b32.xlu0 %v3969, 64
    %v3973 = vpop.permute.xlu0 %3972
    %v3975 = vmul.f32 %v3968, %v3973
    %3977 = vrot.lane.b32.xlu0 %v3975, 32
    %v3978 = vpop.permute.xlu0 %3977
    %v3980 = vadd.f32 %v3970, %v3978
    %v3981 = vtanh.pop %v3980
    %3983 = vrot.lane.b32.xlu0 %v3981, 64
    %v3984 = vpop.permute.xlu0 %3983
    %v3986 = vmul.f32 %v3968, %v3984
    %3988 = vrot.lane.b32.xlu0 %v3986, 32
    %v3989 = vpop.permute.xlu0 %3988
    %3991 = vst.msk [vmem:[%s1015] sm:$0xff] %vm355, %v3989
    %v3992 = vld [vmem:[%s1017] sm:$0xff]
    %v3993 = vsel %vm355, %v3989, 0
    %3995 = vmatprep.subr.mxu0 0.0
    %3996 = vmatpush1.msra.mxu0 %v3331
    %3997 = vmatprep.subr.mxu0 0.0
    %3998 = vmatpush1.msra.mxu0 %v3332
    %3999 = vmatprep.subr.mxu0 0.0
    %4000 = vmatpush1.msra.mxu0 %v3333
    %4001 = vmatprep.subr.mxu0 0.0
    %4002 = vmatpush1.msra.mxu0 %v3334
    %4003 = vmatprep.subr.mxu0 0.0
    %4004 = vmatpush1.msra.mxu0 0.0
    %4005 = vmatprep.subr.mxu0 0.0
    %4006 = vmatpush1.msra.mxu0 0.0
    %4007 = vmatprep.subr.mxu0 0.0
    %4008 = vmatpush1.msra.mxu0 0.0
    %4009 = vmatprep.subr.mxu0 0.0
    %4010 = vmatpush1.msra.mxu0 0.0
    %4011 = vmatprep.subr.mxu0 0.0
    %4012 = vmatpush1.msra.mxu0 0.0
    %4013 = vmatprep.subr.mxu0 0.0
    %4014 = vmatpush1.msra.mxu0 0.0
    %4015 = vmatprep.subr.mxu0 0.0
    %4016 = vmatpush1.msra.mxu0 0.0
    %4017 = vmatprep.subr.mxu0 0.0
    %4018 = vmatpush1.msra.mxu0 0.0
    %4019 = vmatprep.subr.mxu0 0.0
    %4020 = vmatpush1.msra.mxu0 0.0
    %4021 = vmatprep.subr.mxu0 0.0
    %4022 = vmatpush1.msra.mxu0 0.0
    %4023 = vmatprep.subr.mxu0 0.0
    %4024 = vmatpush1.msra.mxu0 0.0
    %4025 = vmatprep.subr.mxu0 0.0
    %4026 = vmatpush1.msra.mxu0 0.0
    %4027 = vmatprep.subr.mxu0 0.0
    %4028 = vmatpush1.msra.mxu0 0.0
    %4029 = vmatprep.subr.mxu0 0.0
    %4030 = vmatpush1.msra.mxu0 0.0
    %4031 = vmatprep.subr.mxu0 0.0
    %4032 = vmatpush1.msra.mxu0 0.0
    %4033 = vmatprep.subr.mxu0 0.0
    %4034 = vmatpush1.msra.mxu0 0.0
    %4035 = vmatprep.subr.mxu0 0.0
    %4036 = vmatpush1.msra.mxu0 0.0
    %4037 = vmatprep.subr.mxu0 0.0
    %4038 = vmatpush1.msra.mxu0 0.0
    %4039 = vmatprep.subr.mxu0 0.0
    %4040 = vmatpush1.msra.mxu0 0.0
    %4041 = vmatprep.subr.mxu0 0.0
    %4042 = vmatpush1.msra.mxu0 0.0
    %4043 = vmatprep.subr.mxu0 0.0
    %4044 = vmatpush1.msra.mxu0 0.0
    %4045 = vmatprep.subr.mxu0 0.0
    %4046 = vmatpush1.msra.mxu0 0.0
    %4047 = vmatprep.subr.mxu0 0.0
    %4048 = vmatpush1.msra.mxu0 0.0
    %4049 = vmatprep.subr.mxu0 0.0
    %4050 = vmatpush1.msra.mxu0 0.0
    %4051 = vmatprep.subr.mxu0 0.0
    %4052 = vmatpush1.msra.mxu0 0.0
    %4053 = vmatprep.subr.mxu0 0.0
    %4054 = vmatpush1.msra.mxu0 0.0
    %4055 = vmatprep.subr.mxu0 0.0
    %4056 = vmatpush1.msra.mxu0 0.0
    %4057 = vmatprep.subr.mxu0 0.0
    %4058 = vmatpush1.msra.mxu0 0.0
    %4059 = vmatprep.mubr.f32.mxu0 0.0
    %4060 = vmatmul.mubr.f32.gmra.mrb[0].mxu0 %v3993
    %v4061 = vpop.f32.mrb[0].mxu0
    %v4062 = vadd.f32 0.0, %v4061
    %v4063 = vpop.f32.mrb[0].mxu0
    %4064 = vdwg.mxu0
    %v4065 = vadd.f32 %v3992, %v4062
    %v4066 = vxor.u32 %v4065, 2147483648
    %v4067 = vmul.f32 %v4066, 1.442695
    %v4068 = vpow.pop %v4067
    %v4069 = vadd.f32 %v4068, 1.0
    %v4070 = vrcp.pop %v4069
    %v4071 = vmul.f32 1.0, %v4070
    %v4072 = vtanh.pop %v4065
    %v4073 = vmul.f32 %v4071, %v3980
    %4075 = vrot.lane.b32.xlu0 %v4072, 64
    %v4076 = vpop.permute.xlu0 %4075
    %v4078 = vmul.f32 %v4071, %v4076
    %4080 = vrot.lane.b32.xlu0 %v4078, 32
    %v4081 = vpop.permute.xlu0 %4080
    %v4083 = vadd.f32 %v4073, %v4081
    %v4084 = vtanh.pop %v4083
    %4086 = vrot.lane.b32.xlu0 %v4084, 64
    %v4087 = vpop.permute.xlu0 %4086
    %v4089 = vmul.f32 %v4071, %v4087
    %4091 = vrot.lane.b32.xlu0 %v4089, 32
    %v4092 = vpop.permute.xlu0 %4091
    %4094 = vst.msk [vmem:[%s1120] sm:$0xff] %vm355, %v4092
    %v4095 = vld [vmem:[%s1122] sm:$0xff]
    %v4096 = vsel %vm355, %v4092, 0
    %4098 = vmatprep.subr.mxu0 0.0
    %4099 = vmatpush1.msra.mxu0 %v3331
    %4100 = vmatprep.subr.mxu0 0.0
    %4101 = vmatpush1.msra.mxu0 %v3332
    %4102 = vmatprep.subr.mxu0 0.0
    %4103 = vmatpush1.msra.mxu0 %v3333
    %4104 = vmatprep.subr.mxu0 0.0
    %4105 = vmatpush1.msra.mxu0 %v3334
    %4106 = vmatprep.subr.mxu0 0.0
    %4107 = vmatpush1.msra.mxu0 0.0
    %4108 = vmatprep.subr.mxu0 0.0
    %4109 = vmatpush1.msra.mxu0 0.0
    %4110 = vmatprep.subr.mxu0 0.0
    %4111 = vmatpush1.msra.mxu0 0.0
    %4112 = vmatprep.subr.mxu0 0.0
    %4113 = vmatpush1.msra.mxu0 0.0
    %4114 = vmatprep.subr.mxu0 0.0
    %4115 = vmatpush1.msra.mxu0 0.0
    %4116 = vmatprep.subr.mxu0 0.0
    %4117 = vmatpush1.msra.mxu0 0.0
    %4118 = vmatprep.subr.mxu0 0.0
    %4119 = vmatpush1.msra.mxu0 0.0
    %4120 = vmatprep.subr.mxu0 0.0
    %4121 = vmatpush1.msra.mxu0 0.0
    %4122 = vmatprep.subr.mxu0 0.0
    %4123 = vmatpush1.msra.mxu0 0.0
    %4124 = vmatprep.subr.mxu0 0.0
    %4125 = vmatpush1.msra.mxu0 0.0
    %4126 = vmatprep.subr.mxu0 0.0
    %4127 = vmatpush1.msra.mxu0 0.0
    %4128 = vmatprep.subr.mxu0 0.0
    %4129 = vmatpush1.msra.mxu0 0.0
    %4130 = vmatprep.subr.mxu0 0.0
    %4131 = vmatpush1.msra.mxu0 0.0
    %4132 = vmatprep.subr.mxu0 0.0
    %4133 = vmatpush1.msra.mxu0 0.0
    %4134 = vmatprep.subr.mxu0 0.0
    %4135 = vmatpush1.msra.mxu0 0.0
    %4136 = vmatprep.subr.mxu0 0.0
    %4137 = vmatpush1.msra.mxu0 0.0
    %4138 = vmatprep.subr.mxu0 0.0
    %4139 = vmatpush1.msra.mxu0 0.0
    %4140 = vmatprep.subr.mxu0 0.0
    %4141 = vmatpush1.msra.mxu0 0.0
    %4142 = vmatprep.subr.mxu0 0.0
    %4143 = vmatpush1.msra.mxu0 0.0
    %4144 = vmatprep.subr.mxu0 0.0
    %4145 = vmatpush1.msra.mxu0 0.0
    %4146 = vmatprep.subr.mxu0 0.0
    %4147 = vmatpush1.msra.mxu0 0.0
    %4148 = vmatprep.subr.mxu0 0.0
    %4149 = vmatpush1.msra.mxu0 0.0
    %4150 = vmatprep.subr.mxu0 0.0
    %4151 = vmatpush1.msra.mxu0 0.0
    %4152 = vmatprep.subr.mxu0 0.0
    %4153 = vmatpush1.msra.mxu0 0.0
    %4154 = vmatprep.subr.mxu0 0.0
    %4155 = vmatpush1.msra.mxu0 0.0
    %4156 = vmatprep.subr.mxu0 0.0
    %4157 = vmatpush1.msra.mxu0 0.0
    %4158 = vmatprep.subr.mxu0 0.0
    %4159 = vmatpush1.msra.mxu0 0.0
    %4160 = vmatprep.subr.mxu0 0.0
    %4161 = vmatpush1.msra.mxu0 0.0
    %4162 = vmatprep.mubr.f32.mxu0 0.0
    %4163 = vmatmul.mubr.f32.gmra.mrb[0].mxu0 %v4096
    %v4164 = vpop.f32.mrb[0].mxu0
    %v4165 = vadd.f32 0.0, %v4164
    %v4166 = vpop.f32.mrb[0].mxu0
    %4167 = vdwg.mxu0
    %v4168 = vadd.f32 %v4095, %v4165
    %v4169 = vxor.u32 %v4168, 2147483648
    %v4170 = vmul.f32 %v4169, 1.442695
    %v4171 = vpow.pop %v4170
    %v4172 = vadd.f32 %v4171, 1.0
    %v4173 = vrcp.pop %v4172
    %v4174 = vmul.f32 1.0, %v4173
    %v4175 = vtanh.pop %v4168
    %v4176 = vmul.f32 %v4174, %v4083
    %4178 = vrot.lane.b32.xlu0 %v4175, 64
    %v4179 = vpop.permute.xlu0 %4178
    %v4181 = vmul.f32 %v4174, %v4179
    %4183 = vrot.lane.b32.xlu0 %v4181, 32
    %v4184 = vpop.permute.xlu0 %4183
    %v4186 = vadd.f32 %v4176, %v4184
    %v4187 = vtanh.pop %v4186
    %4189 = vrot.lane.b32.xlu0 %v4187, 64
    %v4190 = vpop.permute.xlu0 %4189
    %v4192 = vmul.f32 %v4174, %v4190
    %4194 = vrot.lane.b32.xlu0 %v4192, 32
    %v4195 = vpop.permute.xlu0 %4194
    %4197 = vst.msk [vmem:[%s1225] sm:$0xff] %vm355, %v4195
    %v4198 = vld [vmem:[%s1227] sm:$0xff]
    %v4199 = vsel %vm355, %v4195, 0
    %4201 = vmatprep.subr.mxu0 0.0
    %4202 = vmatpush1.msra.mxu0 %v3331
    %4203 = vmatprep.subr.mxu0 0.0
    %4204 = vmatpush1.msra.mxu0 %v3332
    %4205 = vmatprep.subr.mxu0 0.0
    %4206 = vmatpush1.msra.mxu0 %v3333
    %4207 = vmatprep.subr.mxu0 0.0
    %4208 = vmatpush1.msra.mxu0 %v3334
    %4209 = vmatprep.subr.mxu0 0.0
    %4210 = vmatpush1.msra.mxu0 0.0
    %4211 = vmatprep.subr.mxu0 0.0
    %4212 = vmatpush1.msra.mxu0 0.0
    %4213 = vmatprep.subr.mxu0 0.0
    %4214 = vmatpush1.msra.mxu0 0.0
    %4215 = vmatprep.subr.mxu0 0.0
    %4216 = vmatpush1.msra.mxu0 0.0
    %4217 = vmatprep.subr.mxu0 0.0
    %4218 = vmatpush1.msra.mxu0 0.0
    %4219 = vmatprep.subr.mxu0 0.0
    %4220 = vmatpush1.msra.mxu0 0.0
    %4221 = vmatprep.subr.mxu0 0.0
    %4222 = vmatpush1.msra.mxu0 0.0
    %4223 = vmatprep.subr.mxu0 0.0
    %4224 = vmatpush1.msra.mxu0 0.0
    %4225 = vmatprep.subr.mxu0 0.0
    %4226 = vmatpush1.msra.mxu0 0.0
    %4227 = vmatprep.subr.mxu0 0.0
    %4228 = vmatpush1.msra.mxu0 0.0
    %4229 = vmatprep.subr.mxu0 0.0
    %4230 = vmatpush1.msra.mxu0 0.0
    %4231 = vmatprep.subr.mxu0 0.0
    %4232 = vmatpush1.msra.mxu0 0.0
    %4233 = vmatprep.subr.mxu0 0.0
    %4234 = vmatpush1.msra.mxu0 0.0
    %4235 = vmatprep.subr.mxu0 0.0
    %4236 = vmatpush1.msra.mxu0 0.0
    %4237 = vmatprep.subr.mxu0 0.0
    %4238 = vmatpush1.msra.mxu0 0.0
    %4239 = vmatprep.subr.mxu0 0.0
    %4240 = vmatpush1.msra.mxu0 0.0
    %4241 = vmatprep.subr.mxu0 0.0
    %4242 = vmatpush1.msra.mxu0 0.0
    %4243 = vmatprep.subr.mxu0 0.0
    %4244 = vmatpush1.msra.mxu0 0.0
    %4245 = vmatprep.subr.mxu0 0.0
    %4246 = vmatpush1.msra.mxu0 0.0
    %4247 = vmatprep.subr.mxu0 0.0
    %4248 = vmatpush1.msra.mxu0 0.0
    %4249 = vmatprep.subr.mxu0 0.0
    %4250 = vmatpush1.msra.mxu0 0.0
    %4251 = vmatprep.subr.mxu0 0.0
    %4252 = vmatpush1.msra.mxu0 0.0
    %4253 = vmatprep.subr.mxu0 0.0
    %4254 = vmatpush1.msra.mxu0 0.0
    %4255 = vmatprep.subr.mxu0 0.0
    %4256 = vmatpush1.msra.mxu0 0.0
    %4257 = vmatprep.subr.mxu0 0.0
    %4258 = vmatpush1.msra.mxu0 0.0
    %4259 = vmatprep.subr.mxu0 0.0
    %4260 = vmatpush1.msra.mxu0 0.0
    %4261 = vmatprep.subr.mxu0 0.0
    %4262 = vmatpush1.msra.mxu0 0.0
    %4263 = vmatprep.subr.mxu0 0.0
    %4264 = vmatpush1.msra.mxu0 0.0
    %4265 = vmatprep.mubr.f32.mxu0 0.0
    %4266 = vmatmul.mubr.f32.gmra.mrb[0].mxu0 %v4199
    %v4267 = vpop.f32.mrb[0].mxu0
    %v4268 = vadd.f32 0.0, %v4267
    %v4269 = vpop.f32.mrb[0].mxu0
    %4270 = vdwg.mxu0
    %v4271 = vadd.f32 %v4198, %v4268
    %v4272 = vxor.u32 %v4271, 2147483648
    %v4273 = vmul.f32 %v4272, 1.442695
    %v4274 = vpow.pop %v4273
    %v4275 = vadd.f32 %v4274, 1.0
    %v4276 = vrcp.pop %v4275
    %v4277 = vmul.f32 1.0, %v4276
    %v4278 = vtanh.pop %v4271
    %v4279 = vmul.f32 %v4277, %v4186
    %4281 = vrot.lane.b32.xlu0 %v4278, 64
    %v4282 = vpop.permute.xlu0 %4281
    %v4284 = vmul.f32 %v4277, %v4282
    %4286 = vrot.lane.b32.xlu0 %v4284, 32
    %v4287 = vpop.permute.xlu0 %4286
    %v4289 = vadd.f32 %v4279, %v4287
    %v4290 = vtanh.pop %v4289
    %4292 = vrot.lane.b32.xlu0 %v4290, 64
    %v4293 = vpop.permute.xlu0 %4292
    %v4295 = vmul.f32 %v4277, %v4293
    %4297 = vrot.lane.b32.xlu0 %v4295, 32
    %v4298 = vpop.permute.xlu0 %4297
    %4300 = vst.msk [vmem:[%s1330] sm:$0xff] %vm355, %v4298
    %s4301 = scalar_lea.vmem [#allocation17], 6
    %4302 = vst.msk [vmem:[%s4301] sm:$0x3] %vm1332, %v4298
    %4304 = vrot.lane.b32.xlu0 %v4289, 96
    %v4305 = vpop.permute.xlu0 %4304
    %s4307 = scalar_lea.vmem [#allocation19], 6
    %4308 = vst.msk [vmem:[%s4307] sm:$0x3] %vm1332, %v4305
    %v4309 = vld [vmem:[#allocation3] sm:$0xff]
    %v4310 = vld [vmem:[#allocation3 + $0x8] sm:$0xff]
    %v4311 = vld [vmem:[#allocation3 + $0x10] sm:$0xff]
    %v4312 = vld [vmem:[#allocation3 + $0x18] sm:$0xff]
    %v4313 = vld [vmem:[#allocation3 + $0x20] sm:$0xff]
    %v4314 = vld [vmem:[#allocation3 + $0x28] sm:$0xff]
    %v4315 = vld [vmem:[#allocation3 + $0x30] sm:$0xff]
    %v4316 = vld [vmem:[#allocation3 + $0x38] sm:$0xff]
    %4317 = vst.msk [vmem:[#allocation16] sm:$0x3] %vm1332, %v4309
    %4318 = vst.msk [vmem:[#allocation16 + $0x2] sm:$0x3] %vm1332, %v4310
    %4319 = vst.msk [vmem:[#allocation16 + $0x4] sm:$0x3] %vm1332, %v4311
    %4320 = vst.msk [vmem:[#allocation16 + $0x6] sm:$0x3] %vm1332, %v4312
    %4321 = vst.msk [vmem:[#allocation16 + $0x8] sm:$0x3] %vm1332, %v4313
    %4322 = vst.msk [vmem:[#allocation16 + $0xa] sm:$0x3] %vm1332, %v4314
    %4323 = vst.msk [vmem:[#allocation16 + $0xc] sm:$0x3] %vm1332, %v4315
    %4324 = vst.msk [vmem:[#allocation16 + $0xe] sm:$0x3] %vm1332, %v4316
    // Predicated region
    $region86: #{encoder_lstm_forward.1} parent=1 // pred_check
      _
    $region87: #{encoder_lstm_forward.1} parent=1 // pred_check_branch
      %4326 = sbr.rel (0) target = $region89
    $region88: #{encoder_lstm_forward.1} parent=1 // pred_region
      %s4328 = ssub.s32 256, 256
      %4329 = vsyncadd [#allocation6], %s4328
      %s4330 = sshll.u32 [#allocation16], 4
      %s4331 = int_to_ptr.vmem [resolvable:$true] %s4330
      %4336 = dma.vmem_to_hbm [thread:$0]  %s4331, 256, %s14, [#allocation6], 32, 32, 2
    $region89: #{encoder_lstm_forward.1} parent=1 // pred_fallthru
      _
    // Predicated region
    $region90: #{encoder_lstm_forward.1} parent=1 // pred_check
      _
    $region91: #{encoder_lstm_forward.1} parent=1 // pred_check_branch
      %4338 = sbr.rel (0) target = $region93
    $region92: #{encoder_lstm_forward.1} parent=1 // pred_region
      %s4340 = ssub.s32 128, 128
      %4341 = vsyncadd [#allocation18], %s4340
      %s4342 = sshll.u32 [#allocation17], 4
      %s4343 = int_to_ptr.vmem [resolvable:$true] %s4342
      %4348 = dma.vmem_to_hbm [thread:$0]  %s4343, 128, %s15, [#allocation18], 32, 32, 2
    $region93: #{encoder_lstm_forward.1} parent=1 // pred_fallthru
      _
    // Predicated region
    $region94: #{encoder_lstm_forward.1} parent=1 // pred_check
      _
    $region95: #{encoder_lstm_forward.1} parent=1 // pred_check_branch
      %4350 = sbr.rel (0) target = $region97
    $region96: #{encoder_lstm_forward.1} parent=1 // pred_region
      %s4352 = ssub.s32 128, 128
      %4353 = vsyncadd [#allocation18], %s4352
      %s4354 = sshll.u32 [#allocation19], 4
      %s4355 = int_to_ptr.vmem [resolvable:$true] %s4354
      %4360 = dma.vmem_to_hbm [thread:$0]  %s4355, 128, %s16, [#allocation18], 32, 32, 2
    $region97: #{encoder_lstm_forward.1} parent=1 // pred_fallthru
      _
    // Predicated region
    $region98: #{encoder_lstm_forward.1} parent=1 // pred_check
      _
    $region99: #{encoder_lstm_forward.1} parent=1 // pred_check_branch
      %4362 = sbr.rel (0) target = $region101
    $region100: #{encoder_lstm_forward.1} parent=1 // pred_region
      %4363 = dma.done [#allocation6], 256
    $region101: #{encoder_lstm_forward.1} parent=1 // pred_fallthru
      _
    // Predicated region
    $region102: #{encoder_lstm_forward.1} parent=1 // pred_check
      _
    $region103: #{encoder_lstm_forward.1} parent=1 // pred_check_branch
      %4365 = sbr.rel (0) target = $region105
    $region104: #{encoder_lstm_forward.1} parent=1 // pred_region
      %4366 = dma.done [#allocation18], 128
    $region105: #{encoder_lstm_forward.1} parent=1 // pred_fallthru
      _
    // Predicated region
    $region106: #{encoder_lstm_forward.1} parent=1 // pred_check
      _
    $region107: #{encoder_lstm_forward.1} parent=1 // pred_check_branch
      %4368 = sbr.rel (0) target = $region109
    $region108: #{encoder_lstm_forward.1} parent=1 // pred_region
      %4369 = dma.done [#allocation18], 128
    $region109: #{encoder_lstm_forward.1} parent=1 // pred_fallthru
      _
    %4370 = vsyncpa [#allocation5], 1
    %4371 = vsyncpa [#allocation8], 1
    %4372 = vsyncpa [#allocation11], 1
    %4373 = vsyncpa [#allocation14], 1
    %4374 = vsyncpa [#allocation6], 1
    %4375 = vsyncpa [#allocation18], 1

</llo_original>
